<compile_context>
chip_gen: v7x
topology: tpu7x:2x2x1
jax: 0.10.0
libtpu: 0.0.40
codegen_flags: <defaults>
</compile_context>

<pallas_src>
import functools

import jax
import jax.numpy as jnp
import numpy as np
from jax.experimental import pallas as pl
from jax.experimental.pallas import tpu as pltpu

# MXU operand dtype (bf16 on v5e/v6e/v7x).  Softmax, layernorm statistics,
# residuals and the -1e9 mask stay in float32; matmuls accumulate in float32.
MM_DTYPE = jnp.bfloat16

# Lane-dense packed head output width: lanes 0:2 = softmax probs, lane 2 = loss_pred.
_OUT_W = 128


def _mm(a, b):
    """MXU matmul: bf16 operands, f32 accumulation."""
    return jnp.dot(a.astype(MM_DTYPE), b.astype(MM_DTYPE),
                   preferred_element_type=jnp.float32)


def _pick_vmem_limit():
    """VMEM budget with headroom: ~48 MiB on v7x (64 MiB), ~96 MiB on v5e/v6e."""
    cap = 128 * 1024 * 1024
    try:
        info = pltpu.get_tpu_info()
        cap = int(getattr(info, "vmem_capacity_bytes", cap))
    except Exception:
        pass
    return int(min((cap * 3) // 4, 96 * 1024 * 1024))


# ----------------------------------------------------------------------------
# Fused kernel: encoder layer (CLS-only downstream) + heads, per batch tile
# ----------------------------------------------------------------------------
def _fused_kernel(x_ref, mask_ref,
                  wq_ref, bq_ref, wkv_ref, bkv_ref, wo_ref, bo_ref, ln1_ref,
                  w1_ref, b1_ref, w2_ref, b2_ref, ln2_ref,
                  wch_ref, bch_ref, wl2_ref, bl2_ref,
                  out_ref, ctx_ref,
                  *, num_heads, head_dim, seq_len, batch_tile, lp_hidden):
    H = num_heads * head_dim
    S = seq_len
    BT = batch_tile
    R = BT * S

    x = x_ref[...]                                     # (BT, S, H) f32
    x2d = x.reshape(R, H)                              # free view (merge sublanes)
    cls_x = x[:, 0, :]                                 # (BT, H) CLS rows

    # K/V for all rows: ONE full-width (R,H)@(H,2H) MXU matmul.
    kv = (_mm(x2d, wkv_ref[...]) + bkv_ref[...]).reshape(BT, S, 2 * H)

    # Q only for the CLS rows; 1/sqrt(head_dim) folded in once.
    scale = 1.0 / float(np.sqrt(head_dim))
    q_cls = (_mm(cls_x, wq_ref[...]) + bq_ref[...]) * scale       # (BT, H)

    # --- self attention on the CLS query rows ---
    for b in range(BT):
        # (1, S) additive key bias — no (S, S) materialization.
        key_bias = (mask_ref[b] - 1.0) * 1e9                      # (1, S)
        for h in range(num_heads):
            lo = h * head_dim
            qh = q_cls[b:b + 1, lo:lo + head_dim]                 # (1, HD)
            kh = kv[b, :, lo:lo + head_dim]                       # (S, HD)
            vh = kv[b, :, H + lo:H + lo + head_dim]               # (S, HD)
            # contract last dims of Q and K (no explicit transpose / XLU vxpose)
            s = jax.lax.dot_general(qh.astype(MM_DTYPE), kh.astype(MM_DTYPE),
                                    (((1,), (1,)), ((), ())),
                                    preferred_element_type=jnp.float32)  # (1, S)
            s = s + key_bias
            s = s - jnp.max(s, axis=-1, keepdims=True)
            p = jnp.exp(s)
            p = p * pl.reciprocal(jnp.sum(p, axis=-1, keepdims=True), approx=True)
            # per-head context written at lane offset h*HD into VMEM scratch
            ctx_ref[b:b + 1, lo:lo + head_dim] = _mm(p, vh)       # (1, HD)

    ctx_all = ctx_ref[...]                                        # (BT, H)
    attn_out = _mm(ctx_all, wo_ref[...]) + bo_ref[...]

    def layer_norm(v, params_ref, eps=1e-5):
        g = params_ref[0:1, :]
        bta = params_ref[1:2, :]
        mu = jnp.mean(v, axis=-1, keepdims=True)
        var = jnp.mean((v - mu) ** 2, axis=-1, keepdims=True)
        return (v - mu) * jax.lax.rsqrt(var + eps) * g + bta

    x1 = layer_norm(cls_x + attn_out, ln1_ref)

    # --- feed forward (CLS rows only) ---
    # TODO(synk): RoBERTa uses erf-based gelu; tanh approximation used here
    # (matched exactly by the pure-JAX reference below).
    hmid = jax.nn.gelu(_mm(x1, w1_ref[...]) + b1_ref[...], approximate=True)
    ff = _mm(hmid, w2_ref[...]) + b2_ref[...]
    x2 = layer_norm(x1 + ff, ln2_ref)

    # --- fused heads: [loss_predictor layer-1 | classifier] in ONE matmul ---
    zl = _mm(x2, wch_ref[...]) + bch_ref[...]                     # (BT, H2+2)
    hmid2 = jnp.maximum(zl[:, :lp_hidden], 0.0)                   # ReLU
    logits = zl[:, lp_hidden:lp_hidden + 2]
    logits = logits - jnp.max(logits, axis=-1, keepdims=True)
    e = jnp.exp(logits)
    probs = e / jnp.sum(e, axis=-1, keepdims=True)                # exact recip (tiny)
    loss_pred = _mm(hmid2, wl2_ref[...]) + bl2_ref[...]           # (BT, 1)

    # Pack into one lane-dense row per batch element: [p0, p1, loss, 0, ...].
    packed = jnp.concatenate(
        [probs, loss_pred, jnp.zeros((BT, _OUT_W - 3), jnp.float32)], axis=-1)
    out_ref[...] = packed.reshape(BT, 1, _OUT_W)


# ----------------------------------------------------------------------------
# Wrapper
# ----------------------------------------------------------------------------
def devign_codebert_forward(x, mask, enc_p, head_p, *, num_heads, head_dim,
                            batch_tile=1):
    B, S, H = x.shape
    assert B % batch_tile == 0
    H2 = head_p["wl1"].shape[1]
    mask3 = mask.reshape(B, 1, S).astype(jnp.float32)

    # Fuse K/V weights along the output (lane) axis, and the two CLS-head
    # first-layer weights ([loss_pred layer-1 | classifier]).
    wkv = jnp.concatenate([enc_p["wk"], enc_p["wv"]], axis=1)     # (H, 2H)
    bkv = jnp.concatenate([enc_p["bk"], enc_p["bv"]], axis=1)     # (1, 2H)
    wch = jnp.concatenate([head_p["wl1"], head_p["wc"]], axis=1)  # (H, H2+2)
    bch = jnp.concatenate([head_p["bl1"], head_p["bc"]], axis=1)  # (1, H2+2)

    weight_args = (enc_p["wq"], enc_p["bq"], wkv, bkv,
                   enc_p["wo"], enc_p["bo"], enc_p["ln1"],
                   enc_p["w1"], enc_p["b1"], enc_p["w2"], enc_p["b2"], enc_p["ln2"],
                   wch, bch, head_p["wl2"], head_p["bl2"])

    kernel = functools.partial(_fused_kernel, num_heads=num_heads,
                               head_dim=head_dim, seq_len=S,
                               batch_tile=batch_tile, lp_hidden=H2)

    def wspec(w, single_buffered):
        # Grid-invariant weights: full-array block, constant index map.
        ndim = w.ndim
        idx = lambda b: (0,) * ndim
        if single_buffered:
            # Weights never change across the batch grid -> single-buffer them
            # (halves their VMEM footprint vs. the default double-buffering).
            return pl.BlockSpec(w.shape, idx, pipeline_mode=pl.Buffered(1))
        return pl.BlockSpec(w.shape, idx)

    def run(single_buffered, vmem_limit):
        return pl.pallas_call(
            kernel,
            out_shape=jax.ShapeDtypeStruct((B, 1, _OUT_W), jnp.float32),
            grid=(B // batch_tile,),
            in_specs=[pl.BlockSpec((batch_tile, S, H), lambda b: (b, 0, 0)),
                      pl.BlockSpec((batch_tile, 1, S), lambda b: (b, 0, 0))]
                     + [wspec(w, single_buffered) for w in weight_args],
            out_specs=pl.BlockSpec((batch_tile, 1, _OUT_W), lambda b: (b, 0, 0)),
            scratch_shapes=[pltpu.VMEM((batch_tile, H), jnp.float32)],
            compiler_params=pltpu.CompilerParams(
                dimension_semantics=("parallel",),
                vmem_limit_bytes=vmem_limit),
        )(x, mask3, *weight_args)

    vmem_limit = _pick_vmem_limit()
    packed = None
    last_err = None
    # Prefer single-buffered weights + derived VMEM budget; fall back gracefully
    # if the installed jax rejects pipeline_mode / the explicit limit.
    for cfg in ((True, vmem_limit), (False, vmem_limit), (False, None)):
        try:
            packed = run(*cfg)
            break
        except Exception as e:            # noqa: BLE001 - fallback ladder
            last_err = e
    if packed is None:
        raise last_err

    packed = packed.reshape(B, _OUT_W)
    probs = packed[:, 0:2]
    loss_pred = packed[:, 2:3]
    return probs, loss_pred


# ----------------------------------------------------------------------------
# Pure-JAX reference (same math / same bf16 operand casts) for correctness
# ----------------------------------------------------------------------------
def _ref_forward(x, mask, enc_p, head_p, *, num_heads, head_dim):
    B, S, H = x.shape
    scale = 1.0 / float(np.sqrt(head_dim))

    q = _mm(x, enc_p["wq"]) + enc_p["bq"]
    k = _mm(x, enc_p["wk"]) + enc_p["bk"]
    v = _mm(x, enc_p["wv"]) + enc_p["bv"]

    def heads(t):
        return t.reshape(B, S, num_heads, head_dim)

    qh, kh, vh = heads(q), heads(k), heads(v)
    bias = (mask.astype(jnp.float32) - 1.0)[:, None, None, :] * 1e9   # (B,1,1,S)
    s = jnp.einsum("bqhd,bkhd->bhqk", qh.astype(MM_DTYPE), kh.astype(MM_DTYPE),
                   preferred_element_type=jnp.float32) * scale + bias
    p = jax.nn.softmax(s, axis=-1)
    ctx = jnp.einsum("bhqk,bkhd->bqhd", p.astype(MM_DTYPE), vh.astype(MM_DTYPE),
                     preferred_element_type=jnp.float32).reshape(B, S, H)
    attn_out = _mm(ctx, enc_p["wo"]) + enc_p["bo"]

    def ln(t, params):
        g, b_ = params[0:1, :], params[1:2, :]
        mu = jnp.mean(t, axis=-1, keepdims=True)
        var = jnp.mean((t - mu) ** 2, axis=-1, keepdims=True)
        return (t - mu) * jax.lax.rsqrt(var + 1e-5) * g + b_

    x1 = ln(x + attn_out, enc_p["ln1"])
    ff = _mm(jax.nn.gelu(_mm(x1, enc_p["w1"]) + enc_p["b1"], approximate=True),
             enc_p["w2"]) + enc_p["b2"]
    x2 = ln(x1 + ff, enc_p["ln2"])

    cls = x2[:, 0, :]
    logits = _mm(cls, head_p["wc"]) + head_p["bc"]
    probs = jax.nn.softmax(logits, axis=-1)
    loss_pred = _mm(jnp.maximum(_mm(cls, head_p["wl1"]) + head_p["bl1"], 0.0),
                    head_p["wl2"]) + head_p["bl2"]
    return probs, loss_pred


# ----------------------------------------------------------------------------
# Main
# ----------------------------------------------------------------------------
if __name__ == "__main__":
    B, S, H = 2, 8, 32          # batch, seq, hidden
    NH, HD = 2, 16              # heads, head_dim
    FFN = 64                    # intermediate size
    H2 = H // 2                 # loss_predictor hidden
    V = 64                      # tiny vocab

    key = jax.random.PRNGKey(0)
    ks = list(jax.random.split(key, 24))

    def rnd(k, shape, scale=0.05):
        return jax.random.normal(k, shape, jnp.float32) * scale

    # embeddings (glue)
    word_emb = rnd(ks[0], (V, H), 0.1)
    pos_emb = rnd(ks[1], (S, H), 0.1)

    # weights stored in f32 (cast to bf16 only at matmul time, matching how a real
    # f32 HuggingFace checkpoint would be consumed)
    enc_params = {
        "wq": rnd(ks[2], (H, H)), "wk": rnd(ks[3], (H, H)), "wv": rnd(ks[4], (H, H)),
        "bq": rnd(ks[5], (1, H)), "bk": rnd(ks[6], (1, H)), "bv": rnd(ks[7], (1, H)),
        "wo": rnd(ks[8], (H, H)), "bo": rnd(ks[9], (1, H)),
        "ln1": jnp.concatenate([jnp.ones((1, H), jnp.float32),
                                jnp.zeros((1, H), jnp.float32)], axis=0),
        "w1": rnd(ks[10], (H, FFN)), "b1": rnd(ks[11], (1, FFN)),
        "w2": rnd(ks[12], (FFN, H)), "b2": rnd(ks[13], (1, H)),
        "ln2": jnp.concatenate([jnp.ones((1, H), jnp.float32),
                                jnp.zeros((1, H), jnp.float32)], axis=0),
    }
    head_params = {
        "wc":  rnd(ks[14], (H, 2)),  "bc":  rnd(ks[15], (1, 2)),
        "wl1": rnd(ks[16], (H, H2)), "bl1": rnd(ks[17], (1, H2)),
        "wl2": rnd(ks[18], (H2, 1)), "bl2": rnd(ks[19], (1, 1)),
    }

    # inputs (like tokenized code: ids + attention mask with padding)
    input_ids = jax.random.randint(ks[20], (B, S), 0, V)
    attention_mask = jnp.concatenate(
        [jnp.ones((B, S - 2), jnp.float32), jnp.zeros((B, 2), jnp.float32)], axis=1)

    # embedding lookup (glue, plain JAX)
    x0 = word_emb[input_ids] + pos_emb[None, :, :]

    # Fused Pallas pipeline: encoder layer -> CLS -> classifier softmax + loss head
    # (batch_tile=1 keeps >=2 "parallel" grid steps for v7x megacore; raise
    # batch_tile at real CodeBERT sizes so R = batch_tile*S >= ~256 rows.)
    probs, loss_pred = devign_codebert_forward(
        x0, attention_mask, enc_params, head_params,
        num_heads=NH, head_dim=HD, batch_tile=1)

    probs = jax.block_until_ready(probs)
    loss_pred = jax.block_until_ready(loss_pred)

    # correctness check vs pure-JAX reference
    ref_probs, ref_loss = _ref_forward(x0, attention_mask, enc_params, head_params,
                                       num_heads=NH, head_dim=HD)
    np.testing.assert_allclose(np.asarray(probs), np.asarray(ref_probs),
                               rtol=2e-2, atol=5e-3)
    np.testing.assert_allclose(np.asarray(loss_pred), np.asarray(ref_loss),
                               rtol=2e-2, atol=5e-3)

    print("KERNEL_OK")
</pallas_src>

<mosaic_0001>
module attributes {stable_mosaic.version = 11 : i64} {
  func.func @_fused_kernel(%arg0: i32, %arg1: memref<1x8x32xf32, #tpu.memory_space<vmem>>, %arg2: memref<1x1x8xf32, #tpu.memory_space<vmem>>, %arg3: memref<32x32xf32, #tpu.memory_space<vmem>>, %arg4: memref<1x32xf32, #tpu.memory_space<vmem>>, %arg5: memref<32x64xf32, #tpu.memory_space<vmem>>, %arg6: memref<1x64xf32, #tpu.memory_space<vmem>>, %arg7: memref<32x32xf32, #tpu.memory_space<vmem>>, %arg8: memref<1x32xf32, #tpu.memory_space<vmem>>, %arg9: memref<2x32xf32, #tpu.memory_space<vmem>>, %arg10: memref<32x64xf32, #tpu.memory_space<vmem>>, %arg11: memref<1x64xf32, #tpu.memory_space<vmem>>, %arg12: memref<64x32xf32, #tpu.memory_space<vmem>>, %arg13: memref<1x32xf32, #tpu.memory_space<vmem>>, %arg14: memref<2x32xf32, #tpu.memory_space<vmem>>, %arg15: memref<32x18xf32, #tpu.memory_space<vmem>>, %arg16: memref<1x18xf32, #tpu.memory_space<vmem>>, %arg17: memref<16x1xf32, #tpu.memory_space<vmem>>, %arg18: memref<1x1xf32, #tpu.memory_space<vmem>>, %arg19: memref<1x1x128xf32, #tpu.memory_space<vmem>>, %arg20: memref<1x32xf32, #tpu.memory_space<vmem>>) attributes {dimension_semantics = [#tpu.dimension_semantics<parallel>], iteration_bounds = array<i64: 2>, scalar_prefetch = 0 : i64, scratch_operands = 1 : i64, tpu.core_type = #tpu.core_type<tc>, window_params = [{transform_indices = @transform_0, window_bounds = array<i64: 1, 8, 32>}, {transform_indices = @transform_1, window_bounds = array<i64: 1, 1, 8>}, {pipeline_mode = #tpu.pipeline_mode<synchronous>, transform_indices = @transform_2, window_bounds = array<i64: 32, 32>}, {pipeline_mode = #tpu.pipeline_mode<synchronous>, transform_indices = @transform_3, window_bounds = array<i64: 1, 32>}, {pipeline_mode = #tpu.pipeline_mode<synchronous>, transform_indices = @transform_4, window_bounds = array<i64: 32, 64>}, {pipeline_mode = #tpu.pipeline_mode<synchronous>, transform_indices = @transform_5, window_bounds = array<i64: 1, 64>}, {pipeline_mode = #tpu.pipeline_mode<synchronous>, transform_indices = @transform_6, window_bounds = array<i64: 32, 32>}, {pipeline_mode = #tpu.pipeline_mode<synchronous>, transform_indices = @transform_7, window_bounds = array<i64: 1, 32>}, {pipeline_mode = #tpu.pipeline_mode<synchronous>, transform_indices = @transform_8, window_bounds = array<i64: 2, 32>}, {pipeline_mode = #tpu.pipeline_mode<synchronous>, transform_indices = @transform_9, window_bounds = array<i64: 32, 64>}, {pipeline_mode = #tpu.pipeline_mode<synchronous>, transform_indices = @transform_10, window_bounds = array<i64: 1, 64>}, {pipeline_mode = #tpu.pipeline_mode<synchronous>, transform_indices = @transform_11, window_bounds = array<i64: 64, 32>}, {pipeline_mode = #tpu.pipeline_mode<synchronous>, transform_indices = @transform_12, window_bounds = array<i64: 1, 32>}, {pipeline_mode = #tpu.pipeline_mode<synchronous>, transform_indices = @transform_13, window_bounds = array<i64: 2, 32>}, {pipeline_mode = #tpu.pipeline_mode<synchronous>, transform_indices = @transform_14, window_bounds = array<i64: 32, 18>}, {pipeline_mode = #tpu.pipeline_mode<synchronous>, transform_indices = @transform_15, window_bounds = array<i64: 1, 18>}, {pipeline_mode = #tpu.pipeline_mode<synchronous>, transform_indices = @transform_16, window_bounds = array<i64: 16, 1>}, {pipeline_mode = #tpu.pipeline_mode<synchronous>, transform_indices = @transform_17, window_bounds = array<i64: 1, 1>}, {transform_indices = @transform_18, window_bounds = array<i64: 1, 1, 128>}]} {
    %c0 = arith.constant 0 : index
    %c0_0 = arith.constant 0 : index
    %c0_1 = arith.constant 0 : index
    %0 = vector.load %arg1[%c0, %c0_0, %c0_1] : memref<1x8x32xf32, #tpu.memory_space<vmem>>, vector<1x8x32xf32>
    %1 = vector.shape_cast %0 : vector<1x8x32xf32> to vector<8x32xf32>
    %2 = vector.extract_strided_slice %0 {offsets = [0, 0, 0], sizes = [1, 1, 32], strides = [1, 1, 1]} : vector<1x8x32xf32> to vector<1x1x32xf32>
    %3 = vector.shape_cast %2 : vector<1x1x32xf32> to vector<1x32xf32>
    %c0_2 = arith.constant 0 : index
    %c0_3 = arith.constant 0 : index
    %4 = vector.load %arg5[%c0_2, %c0_3] : memref<32x64xf32, #tpu.memory_space<vmem>>, vector<32x64xf32>
    %5 = arith.truncf %1 : vector<8x32xf32> to vector<8x32xbf16>
    %6 = arith.truncf %4 : vector<32x64xf32> to vector<32x64xbf16>
    %cst = arith.constant dense<0.000000e+00> : vector<8x64xf32>
    %7 = tpu.matmul %5, %6, %cst {dimension_numbers = #tpu.dot_dimension_numbers<[1], [0], [0], [1], [0, 0, 1, 1], [], []>} : vector<8x32xbf16>, vector<32x64xbf16>, vector<8x64xf32> -> vector<8x64xf32>
    %c0_4 = arith.constant 0 : index
    %c0_5 = arith.constant 0 : index
    %8 = vector.load %arg6[%c0_4, %c0_5] : memref<1x64xf32, #tpu.memory_space<vmem>>, vector<1x64xf32>
    %9 = vector.broadcast %8 : vector<1x64xf32> to vector<8x64xf32>
    %10 = arith.addf %7, %9 : vector<8x64xf32>
    %11 = vector.shape_cast %10 : vector<8x64xf32> to vector<1x8x64xf32>
    %c0_6 = arith.constant 0 : index
    %c0_7 = arith.constant 0 : index
    %12 = vector.load %arg3[%c0_6, %c0_7] : memref<32x32xf32, #tpu.memory_space<vmem>>, vector<32x32xf32>
    %13 = arith.truncf %3 : vector<1x32xf32> to vector<1x32xbf16>
    %14 = arith.truncf %12 : vector<32x32xf32> to vector<32x32xbf16>
    %cst_8 = arith.constant dense<0.000000e+00> : vector<1x32xf32>
    %15 = tpu.matmul %13, %14, %cst_8 {dimension_numbers = #tpu.dot_dimension_numbers<[1], [0], [0], [1], [0, 0, 1, 1], [], []>} : vector<1x32xbf16>, vector<32x32xbf16>, vector<1x32xf32> -> vector<1x32xf32>
    %c0_9 = arith.constant 0 : index
    %c0_10 = arith.constant 0 : index
    %16 = vector.load %arg4[%c0_9, %c0_10] : memref<1x32xf32, #tpu.memory_space<vmem>>, vector<1x32xf32>
    %17 = arith.addf %15, %16 : vector<1x32xf32>
    %cst_11 = arith.constant 2.500000e-01 : f32
    %18 = vector.broadcast %cst_11 : f32 to vector<1x32xf32>
    %19 = arith.mulf %17, %18 : vector<1x32xf32>
    %c0_12 = arith.constant 0 : index
    %c0_13 = arith.constant 0 : index
    %c0_14 = arith.constant 0 : index
    %20 = vector.load %arg2[%c0_12, %c0_13, %c0_14] : memref<1x1x8xf32, #tpu.memory_space<vmem>>, vector<1x1x8xf32>
    %21 = vector.shape_cast %20 : vector<1x1x8xf32> to vector<1x8xf32>
    %cst_15 = arith.constant 1.000000e+00 : f32
    %22 = vector.broadcast %cst_15 : f32 to vector<1x8xf32>
    %23 = arith.subf %21, %22 : vector<1x8xf32>
    %cst_16 = arith.constant 1.000000e+09 : f32
    %24 = vector.broadcast %cst_16 : f32 to vector<1x8xf32>
    %25 = arith.mulf %23, %24 : vector<1x8xf32>
    %26 = vector.extract_strided_slice %19 {offsets = [0, 0], sizes = [1, 16], strides = [1, 1]} : vector<1x32xf32> to vector<1x16xf32>
    %27 = vector.extract_strided_slice %11 {offsets = [0, 0, 0], sizes = [1, 8, 16], strides = [1, 1, 1]} : vector<1x8x64xf32> to vector<1x8x16xf32>
    %28 = vector.shape_cast %27 : vector<1x8x16xf32> to vector<8x16xf32>
    %29 = vector.extract_strided_slice %11 {offsets = [0, 0, 32], sizes = [1, 8, 16], strides = [1, 1, 1]} : vector<1x8x64xf32> to vector<1x8x16xf32>
    %30 = vector.shape_cast %29 : vector<1x8x16xf32> to vector<8x16xf32>
    %31 = arith.truncf %26 : vector<1x16xf32> to vector<1x16xbf16>
    %32 = arith.truncf %28 : vector<8x16xf32> to vector<8x16xbf16>
    %cst_17 = arith.constant dense<0.000000e+00> : vector<1x8xf32>
    %33 = tpu.matmul %31, %32, %cst_17 {dimension_numbers = #tpu.dot_dimension_numbers<[1], [1], [0], [0], [0, 0, 1, 0], [], []>} : vector<1x16xbf16>, vector<8x16xbf16>, vector<1x8xf32> -> vector<1x8xf32>
    %34 = arith.addf %33, %25 : vector<1x8xf32>
    %cst_18 = arith.constant dense<0xFF800000> : vector<1xf32>
    %35 = vector.multi_reduction <maximumf>, %34, %cst_18 [1] : vector<1x8xf32> to vector<1xf32>
    %36 = vector.shape_cast %35 : vector<1xf32> to vector<1x1xf32>
    %37 = vector.broadcast %36 : vector<1x1xf32> to vector<1x8xf32>
    %38 = arith.subf %34, %37 : vector<1x8xf32>
    %39 = math.exp %38 : vector<1x8xf32>
    %cst_19 = arith.constant dense<0.000000e+00> : vector<1xf32>
    %40 = vector.multi_reduction <add>, %39, %cst_19 [1] : vector<1x8xf32> to vector<1xf32>
    %41 = vector.shape_cast %40 : vector<1xf32> to vector<1x1xf32>
    %42 = tpu.reciprocal %41 {approx = true} : vector<1x1xf32> -> vector<1x1xf32>
    %43 = vector.broadcast %42 : vector<1x1xf32> to vector<1x8xf32>
    %44 = arith.mulf %39, %43 : vector<1x8xf32>
    %45 = arith.truncf %44 : vector<1x8xf32> to vector<1x8xbf16>
    %46 = arith.truncf %30 : vector<8x16xf32> to vector<8x16xbf16>
    %cst_20 = arith.constant dense<0.000000e+00> : vector<1x16xf32>
    %47 = tpu.matmul %45, %46, %cst_20 {dimension_numbers = #tpu.dot_dimension_numbers<[1], [0], [0], [1], [0, 0, 1, 1], [], []>} : vector<1x8xbf16>, vector<8x16xbf16>, vector<1x16xf32> -> vector<1x16xf32>
    %c0_21 = arith.constant 0 : index
    %c0_22 = arith.constant 0 : index
    %48 = vector.load %arg20[%c0_21, %c0_22] : memref<1x32xf32, #tpu.memory_space<vmem>>, vector<1x16xf32>
    tpu.vector_store %arg20[%c0_21, %c0_22], %47 {strides = array<i32>} : memref<1x32xf32, #tpu.memory_space<vmem>>, vector<1x16xf32>,
    %49 = vector.extract_strided_slice %19 {offsets = [0, 16], sizes = [1, 16], strides = [1, 1]} : vector<1x32xf32> to vector<1x16xf32>
    %50 = vector.extract_strided_slice %11 {offsets = [0, 0, 16], sizes = [1, 8, 16], strides = [1, 1, 1]} : vector<1x8x64xf32> to vector<1x8x16xf32>
    %51 = vector.shape_cast %50 : vector<1x8x16xf32> to vector<8x16xf32>
    %52 = vector.extract_strided_slice %11 {offsets = [0, 0, 48], sizes = [1, 8, 16], strides = [1, 1, 1]} : vector<1x8x64xf32> to vector<1x8x16xf32>
    %53 = vector.shape_cast %52 : vector<1x8x16xf32> to vector<8x16xf32>
    %54 = arith.truncf %49 : vector<1x16xf32> to vector<1x16xbf16>
    %55 = arith.truncf %51 : vector<8x16xf32> to vector<8x16xbf16>
    %cst_23 = arith.constant dense<0.000000e+00> : vector<1x8xf32>
    %56 = tpu.matmul %54, %55, %cst_23 {dimension_numbers = #tpu.dot_dimension_numbers<[1], [1], [0], [0], [0, 0, 1, 0], [], []>} : vector<1x16xbf16>, vector<8x16xbf16>, vector<1x8xf32> -> vector<1x8xf32>
    %57 = arith.addf %56, %25 : vector<1x8xf32>
    %cst_24 = arith.constant dense<0xFF800000> : vector<1xf32>
    %58 = vector.multi_reduction <maximumf>, %57, %cst_24 [1] : vector<1x8xf32> to vector<1xf32>
    %59 = vector.shape_cast %58 : vector<1xf32> to vector<1x1xf32>
    %60 = vector.broadcast %59 : vector<1x1xf32> to vector<1x8xf32>
    %61 = arith.subf %57, %60 : vector<1x8xf32>
    %62 = math.exp %61 : vector<1x8xf32>
    %cst_25 = arith.constant dense<0.000000e+00> : vector<1xf32>
    %63 = vector.multi_reduction <add>, %62, %cst_25 [1] : vector<1x8xf32> to vector<1xf32>
    %64 = vector.shape_cast %63 : vector<1xf32> to vector<1x1xf32>
    %65 = tpu.reciprocal %64 {approx = true} : vector<1x1xf32> -> vector<1x1xf32>
    %66 = vector.broadcast %65 : vector<1x1xf32> to vector<1x8xf32>
    %67 = arith.mulf %62, %66 : vector<1x8xf32>
    %68 = arith.truncf %67 : vector<1x8xf32> to vector<1x8xbf16>
    %69 = arith.truncf %53 : vector<8x16xf32> to vector<8x16xbf16>
    %cst_26 = arith.constant dense<0.000000e+00> : vector<1x16xf32>
    %70 = tpu.matmul %68, %69, %cst_26 {dimension_numbers = #tpu.dot_dimension_numbers<[1], [0], [0], [1], [0, 0, 1, 1], [], []>} : vector<1x8xbf16>, vector<8x16xbf16>, vector<1x16xf32> -> vector<1x16xf32>
    %c0_27 = arith.constant 0 : index
    %c16 = arith.constant 16 : index
    %71 = vector.load %arg20[%c0_27, %c16] : memref<1x32xf32, #tpu.memory_space<vmem>>, vector<1x16xf32>
    tpu.vector_store %arg20[%c0_27, %c16], %70 {strides = array<i32>} : memref<1x32xf32, #tpu.memory_space<vmem>>, vector<1x16xf32>,
    %c0_28 = arith.constant 0 : index
    %c0_29 = arith.constant 0 : index
    %72 = vector.load %arg20[%c0_28, %c0_29] : memref<1x32xf32, #tpu.memory_space<vmem>>, vector<1x32xf32>
    %c0_30 = arith.constant 0 : index
    %c0_31 = arith.constant 0 : index
    %73 = vector.load %arg7[%c0_30, %c0_31] : memref<32x32xf32, #tpu.memory_space<vmem>>, vector<32x32xf32>
    %74 = arith.truncf %72 : vector<1x32xf32> to vector<1x32xbf16>
    %75 = arith.truncf %73 : vector<32x32xf32> to vector<32x32xbf16>
    %cst_32 = arith.constant dense<0.000000e+00> : vector<1x32xf32>
    %76 = tpu.matmul %74, %75, %cst_32 {dimension_numbers = #tpu.dot_dimension_numbers<[1], [0], [0], [1], [0, 0, 1, 1], [], []>} : vector<1x32xbf16>, vector<32x32xbf16>, vector<1x32xf32> -> vector<1x32xf32>
    %c0_33 = arith.constant 0 : index
    %c0_34 = arith.constant 0 : index
    %77 = vector.load %arg8[%c0_33, %c0_34] : memref<1x32xf32, #tpu.memory_space<vmem>>, vector<1x32xf32>
    %78 = arith.addf %76, %77 : vector<1x32xf32>
    %79 = arith.addf %3, %78 : vector<1x32xf32>
    %c0_35 = arith.constant 0 : index
    %c0_36 = arith.constant 0 : index
    %80 = vector.load %arg9[%c0_35, %c0_36] : memref<2x32xf32, #tpu.memory_space<vmem>>, vector<1x32xf32>
    %c1 = arith.constant 1 : index
    %c0_37 = arith.constant 0 : index
    %81 = vector.load %arg9[%c1, %c0_37] : memref<2x32xf32, #tpu.memory_space<vmem>>, vector<1x32xf32>
    %cst_38 = arith.constant dense<0.000000e+00> : vector<1xf32>
    %82 = vector.multi_reduction <add>, %79, %cst_38 [1] : vector<1x32xf32> to vector<1xf32>
    %83 = vector.shape_cast %82 : vector<1xf32> to vector<1x1xf32>
    %cst_39 = arith.constant 3.200000e+01 : f32
    %84 = vector.broadcast %cst_39 : f32 to vector<1x1xf32>
    %85 = arith.divf %83, %84 : vector<1x1xf32>
    %86 = vector.broadcast %85 : vector<1x1xf32> to vector<1x32xf32>
    %87 = arith.subf %79, %86 : vector<1x32xf32>
    %88 = arith.mulf %87, %87 : vector<1x32xf32>
    %cst_40 = arith.constant dense<0.000000e+00> : vector<1xf32>
    %89 = vector.multi_reduction <add>, %88, %cst_40 [1] : vector<1x32xf32> to vector<1xf32>
    %90 = vector.shape_cast %89 : vector<1xf32> to vector<1x1xf32>
    %cst_41 = arith.constant 3.200000e+01 : f32
    %91 = vector.broadcast %cst_41 : f32 to vector<1x1xf32>
    %92 = arith.divf %90, %91 : vector<1x1xf32>
    %93 = vector.broadcast %85 : vector<1x1xf32> to vector<1x32xf32>
    %94 = arith.subf %79, %93 : vector<1x32xf32>
    %cst_42 = arith.constant 9.99999974E-6 : f32
    %95 = vector.broadcast %cst_42 : f32 to vector<1x1xf32>
    %96 = arith.addf %92, %95 : vector<1x1xf32>
    %97 = math.rsqrt %96 : vector<1x1xf32>
    %98 = vector.broadcast %97 : vector<1x1xf32> to vector<1x32xf32>
    %99 = arith.mulf %94, %98 : vector<1x32xf32>
    %100 = arith.mulf %99, %80 : vector<1x32xf32>
    %101 = arith.addf %100, %81 : vector<1x32xf32>
    %c0_43 = arith.constant 0 : index
    %c0_44 = arith.constant 0 : index
    %102 = vector.load %arg10[%c0_43, %c0_44] : memref<32x64xf32, #tpu.memory_space<vmem>>, vector<32x64xf32>
    %103 = arith.truncf %101 : vector<1x32xf32> to vector<1x32xbf16>
    %104 = arith.truncf %102 : vector<32x64xf32> to vector<32x64xbf16>
    %cst_45 = arith.constant dense<0.000000e+00> : vector<1x64xf32>
    %105 = tpu.matmul %103, %104, %cst_45 {dimension_numbers = #tpu.dot_dimension_numbers<[1], [0], [0], [1], [0, 0, 1, 1], [], []>} : vector<1x32xbf16>, vector<32x64xbf16>, vector<1x64xf32> -> vector<1x64xf32>
    %c0_46 = arith.constant 0 : index
    %c0_47 = arith.constant 0 : index
    %106 = vector.load %arg11[%c0_46, %c0_47] : memref<1x64xf32, #tpu.memory_space<vmem>>, vector<1x64xf32>
    %107 = arith.addf %105, %106 : vector<1x64xf32>
    %108 = arith.mulf %107, %107 : vector<1x64xf32>
    %109 = arith.mulf %107, %108 : vector<1x64xf32>
    %cst_48 = arith.constant 4.471500e-02 : f32
    %110 = vector.broadcast %cst_48 : f32 to vector<1x64xf32>
    %111 = arith.mulf %110, %109 : vector<1x64xf32>
    %112 = arith.addf %107, %111 : vector<1x64xf32>
    %cst_49 = arith.constant 0.797884583 : f32
    %113 = vector.broadcast %cst_49 : f32 to vector<1x64xf32>
    %114 = arith.mulf %113, %112 : vector<1x64xf32>
    %115 = math.tanh %114 : vector<1x64xf32>
    %cst_50 = arith.constant 1.000000e+00 : f32
    %116 = vector.broadcast %cst_50 : f32 to vector<1x64xf32>
    %117 = arith.addf %116, %115 : vector<1x64xf32>
    %cst_51 = arith.constant 5.000000e-01 : f32
    %118 = vector.broadcast %cst_51 : f32 to vector<1x64xf32>
    %119 = arith.mulf %118, %117 : vector<1x64xf32>
    %120 = arith.mulf %107, %119 : vector<1x64xf32>
    %c0_52 = arith.constant 0 : index
    %c0_53 = arith.constant 0 : index
    %121 = vector.load %arg12[%c0_52, %c0_53] : memref<64x32xf32, #tpu.memory_space<vmem>>, vector<64x32xf32>
    %122 = arith.truncf %120 : vector<1x64xf32> to vector<1x64xbf16>
    %123 = arith.truncf %121 : vector<64x32xf32> to vector<64x32xbf16>
    %cst_54 = arith.constant dense<0.000000e+00> : vector<1x32xf32>
    %124 = tpu.matmul %122, %123, %cst_54 {dimension_numbers = #tpu.dot_dimension_numbers<[1], [0], [0], [1], [0, 0, 1, 1], [], []>} : vector<1x64xbf16>, vector<64x32xbf16>, vector<1x32xf32> -> vector<1x32xf32>
    %c0_55 = arith.constant 0 : index
    %c0_56 = arith.constant 0 : index
    %125 = vector.load %arg13[%c0_55, %c0_56] : memref<1x32xf32, #tpu.memory_space<vmem>>, vector<1x32xf32>
    %126 = arith.addf %124, %125 : vector<1x32xf32>
    %127 = arith.addf %101, %126 : vector<1x32xf32>
    %c0_57 = arith.constant 0 : index
    %c0_58 = arith.constant 0 : index
    %128 = vector.load %arg14[%c0_57, %c0_58] : memref<2x32xf32, #tpu.memory_space<vmem>>, vector<1x32xf32>
    %c1_59 = arith.constant 1 : index
    %c0_60 = arith.constant 0 : index
    %129 = vector.load %arg14[%c1_59, %c0_60] : memref<2x32xf32, #tpu.memory_space<vmem>>, vector<1x32xf32>
    %cst_61 = arith.constant dense<0.000000e+00> : vector<1xf32>
    %130 = vector.multi_reduction <add>, %127, %cst_61 [1] : vector<1x32xf32> to vector<1xf32>
    %131 = vector.shape_cast %130 : vector<1xf32> to vector<1x1xf32>
    %cst_62 = arith.constant 3.200000e+01 : f32
    %132 = vector.broadcast %cst_62 : f32 to vector<1x1xf32>
    %133 = arith.divf %131, %132 : vector<1x1xf32>
    %134 = vector.broadcast %133 : vector<1x1xf32> to vector<1x32xf32>
    %135 = arith.subf %127, %134 : vector<1x32xf32>
    %136 = arith.mulf %135, %135 : vector<1x32xf32>
    %cst_63 = arith.constant dense<0.000000e+00> : vector<1xf32>
    %137 = vector.multi_reduction <add>, %136, %cst_63 [1] : vector<1x32xf32> to vector<1xf32>
    %138 = vector.shape_cast %137 : vector<1xf32> to vector<1x1xf32>
    %cst_64 = arith.constant 3.200000e+01 : f32
    %139 = vector.broadcast %cst_64 : f32 to vector<1x1xf32>
    %140 = arith.divf %138, %139 : vector<1x1xf32>
    %141 = vector.broadcast %133 : vector<1x1xf32> to vector<1x32xf32>
    %142 = arith.subf %127, %141 : vector<1x32xf32>
    %cst_65 = arith.constant 9.99999974E-6 : f32
    %143 = vector.broadcast %cst_65 : f32 to vector<1x1xf32>
    %144 = arith.addf %140, %143 : vector<1x1xf32>
    %145 = math.rsqrt %144 : vector<1x1xf32>
    %146 = vector.broadcast %145 : vector<1x1xf32> to vector<1x32xf32>
    %147 = arith.mulf %142, %146 : vector<1x32xf32>
    %148 = arith.mulf %147, %128 : vector<1x32xf32>
    %149 = arith.addf %148, %129 : vector<1x32xf32>
    %c0_66 = arith.constant 0 : index
    %c0_67 = arith.constant 0 : index
    %150 = vector.load %arg15[%c0_66, %c0_67] : memref<32x18xf32, #tpu.memory_space<vmem>>, vector<32x18xf32>
    %151 = arith.truncf %149 : vector<1x32xf32> to vector<1x32xbf16>
    %152 = arith.truncf %150 : vector<32x18xf32> to vector<32x18xbf16>
    %cst_68 = arith.constant dense<0.000000e+00> : vector<1x18xf32>
    %153 = tpu.matmul %151, %152, %cst_68 {dimension_numbers = #tpu.dot_dimension_numbers<[1], [0], [0], [1], [0, 0, 1, 1], [], []>} : vector<1x32xbf16>, vector<32x18xbf16>, vector<1x18xf32> -> vector<1x18xf32>
    %c0_69 = arith.constant 0 : index
    %c0_70 = arith.constant 0 : index
    %154 = vector.load %arg16[%c0_69, %c0_70] : memref<1x18xf32, #tpu.memory_space<vmem>>, vector<1x18xf32>
    %155 = arith.addf %153, %154 : vector<1x18xf32>
    %156 = vector.extract_strided_slice %155 {offsets = [0, 0], sizes = [1, 16], strides = [1, 1]} : vector<1x18xf32> to vector<1x16xf32>
    %cst_71 = arith.constant 0.000000e+00 : f32
    %157 = vector.broadcast %cst_71 : f32 to vector<1x16xf32>
    %158 = arith.maximumf %156, %157 : vector<1x16xf32>
    %159 = vector.extract_strided_slice %155 {offsets = [0, 16], sizes = [1, 2], strides = [1, 1]} : vector<1x18xf32> to vector<1x2xf32>
    %cst_72 = arith.constant dense<0xFF800000> : vector<1xf32>
    %160 = vector.multi_reduction <maximumf>, %159, %cst_72 [1] : vector<1x2xf32> to vector<1xf32>
    %161 = vector.shape_cast %160 : vector<1xf32> to vector<1x1xf32>
    %162 = vector.broadcast %161 : vector<1x1xf32> to vector<1x2xf32>
    %163 = arith.subf %159, %162 : vector<1x2xf32>
    %164 = math.exp %163 : vector<1x2xf32>
    %cst_73 = arith.constant dense<0.000000e+00> : vector<1xf32>
    %165 = vector.multi_reduction <add>, %164, %cst_73 [1] : vector<1x2xf32> to vector<1xf32>
    %166 = vector.shape_cast %165 : vector<1xf32> to vector<1x1xf32>
    %167 = vector.broadcast %166 : vector<1x1xf32> to vector<1x2xf32>
    %168 = arith.divf %164, %167 : vector<1x2xf32>
    %c0_74 = arith.constant 0 : index
    %c0_75 = arith.constant 0 : index
    %169 = vector.load %arg17[%c0_74, %c0_75] : memref<16x1xf32, #tpu.memory_space<vmem>>, vector<16x1xf32>
    %170 = arith.truncf %158 : vector<1x16xf32> to vector<1x16xbf16>
    %171 = arith.truncf %169 : vector<16x1xf32> to vector<16x1xbf16>
    %cst_76 = arith.constant dense<0.000000e+00> : vector<1x1xf32>
    %172 = tpu.matmul %170, %171, %cst_76 {dimension_numbers = #tpu.dot_dimension_numbers<[1], [0], [0], [1], [0, 0, 1, 1], [], []>} : vector<1x16xbf16>, vector<16x1xbf16>, vector<1x1xf32> -> vector<1x1xf32>
    %c0_77 = arith.constant 0 : index
    %c0_78 = arith.constant 0 : index
    %173 = vector.load %arg18[%c0_77, %c0_78] : memref<1x1xf32, #tpu.memory_space<vmem>>, vector<1x1xf32>
    %174 = arith.addf %172, %173 : vector<1x1xf32>
    %cst_79 = arith.constant 0.000000e+00 : f32
    %175 = vector.broadcast %cst_79 : f32 to vector<1x125xf32>
    %176 = tpu.concatenate %168, %174, %175 in 1 : vector<1x2xf32>, vector<1x1xf32>, vector<1x125xf32> -> vector<1x128xf32>
    %177 = vector.shape_cast %176 : vector<1x128xf32> to vector<1x1x128xf32>
    %c0_80 = arith.constant 0 : index
    %c0_81 = arith.constant 0 : index
    %c0_82 = arith.constant 0 : index
    %178 = vector.load %arg19[%c0_80, %c0_81, %c0_82] : memref<1x1x128xf32, #tpu.memory_space<vmem>>, vector<1x1x128xf32>
    tpu.vector_store %arg19[%c0_80, %c0_81, %c0_82], %177 {strides = array<i32>} : memref<1x1x128xf32, #tpu.memory_space<vmem>>, vector<1x1x128xf32>,
    return
  }
  func.func @transform_0(%arg0: i32) -> (i32, i32, i32) {
    %c0_i32 = arith.constant 0 : i32
    %c0_i32_0 = arith.constant 0 : i32
    %c0_i32_1 = arith.constant 0 : i32
    return %arg0, %c0_i32, %c0_i32_0 : i32, i32, i32
  }
  func.func @transform_1(%arg0: i32) -> (i32, i32, i32) {
    %c0_i32 = arith.constant 0 : i32
    %c0_i32_0 = arith.constant 0 : i32
    %c0_i32_1 = arith.constant 0 : i32
    return %arg0, %c0_i32, %c0_i32_0 : i32, i32, i32
  }
  func.func @transform_2(%arg0: i32) -> (i32, i32) {
    %c0_i32 = arith.constant 0 : i32
    %c0_i32_0 = arith.constant 0 : i32
    %c0_i32_1 = arith.constant 0 : i32
    return %c0_i32, %c0_i32_0 : i32, i32
  }
  func.func @transform_3(%arg0: i32) -> (i32, i32) {
    %c0_i32 = arith.constant 0 : i32
    %c0_i32_0 = arith.constant 0 : i32
    %c0_i32_1 = arith.constant 0 : i32
    return %c0_i32, %c0_i32_0 : i32, i32
  }
  func.func @transform_4(%arg0: i32) -> (i32, i32) {
    %c0_i32 = arith.constant 0 : i32
    %c0_i32_0 = arith.constant 0 : i32
    %c0_i32_1 = arith.constant 0 : i32
    return %c0_i32, %c0_i32_0 : i32, i32
  }
  func.func @transform_5(%arg0: i32) -> (i32, i32) {
    %c0_i32 = arith.constant 0 : i32
    %c0_i32_0 = arith.constant 0 : i32
    %c0_i32_1 = arith.constant 0 : i32
    return %c0_i32, %c0_i32_0 : i32, i32
  }
  func.func @transform_6(%arg0: i32) -> (i32, i32) {
    %c0_i32 = arith.constant 0 : i32
    %c0_i32_0 = arith.constant 0 : i32
    %c0_i32_1 = arith.constant 0 : i32
    return %c0_i32, %c0_i32_0 : i32, i32
  }
  func.func @transform_7(%arg0: i32) -> (i32, i32) {
    %c0_i32 = arith.constant 0 : i32
    %c0_i32_0 = arith.constant 0 : i32
    %c0_i32_1 = arith.constant 0 : i32
    return %c0_i32, %c0_i32_0 : i32, i32
  }
  func.func @transform_8(%arg0: i32) -> (i32, i32) {
    %c0_i32 = arith.constant 0 : i32
    %c0_i32_0 = arith.constant 0 : i32
    %c0_i32_1 = arith.constant 0 : i32
    return %c0_i32, %c0_i32_0 : i32, i32
  }
  func.func @transform_9(%arg0: i32) -> (i32, i32) {
    %c0_i32 = arith.constant 0 : i32
    %c0_i32_0 = arith.constant 0 : i32
    %c0_i32_1 = arith.constant 0 : i32
    return %c0_i32, %c0_i32_0 : i32, i32
  }
  func.func @transform_10(%arg0: i32) -> (i32, i32) {
    %c0_i32 = arith.constant 0 : i32
    %c0_i32_0 = arith.constant 0 : i32
    %c0_i32_1 = arith.constant 0 : i32
    return %c0_i32, %c0_i32_0 : i32, i32
  }
  func.func @transform_11(%arg0: i32) -> (i32, i32) {
    %c0_i32 = arith.constant 0 : i32
    %c0_i32_0 = arith.constant 0 : i32
    %c0_i32_1 = arith.constant 0 : i32
    return %c0_i32, %c0_i32_0 : i32, i32
  }
  func.func @transform_12(%arg0: i32) -> (i32, i32) {
    %c0_i32 = arith.constant 0 : i32
    %c0_i32_0 = arith.constant 0 : i32
    %c0_i32_1 = arith.constant 0 : i32
    return %c0_i32, %c0_i32_0 : i32, i32
  }
  func.func @transform_13(%arg0: i32) -> (i32, i32) {
    %c0_i32 = arith.constant 0 : i32
    %c0_i32_0 = arith.constant 0 : i32
    %c0_i32_1 = arith.constant 0 : i32
    return %c0_i32, %c0_i32_0 : i32, i32
  }
  func.func @transform_14(%arg0: i32) -> (i32, i32) {
    %c0_i32 = arith.constant 0 : i32
    %c0_i32_0 = arith.constant 0 : i32
    %c0_i32_1 = arith.constant 0 : i32
    return %c0_i32, %c0_i32_0 : i32, i32
  }
  func.func @transform_15(%arg0: i32) -> (i32, i32) {
    %c0_i32 = arith.constant 0 : i32
    %c0_i32_0 = arith.constant 0 : i32
    %c0_i32_1 = arith.constant 0 : i32
    return %c0_i32, %c0_i32_0 : i32, i32
  }
  func.func @transform_16(%arg0: i32) -> (i32, i32) {
    %c0_i32 = arith.constant 0 : i32
    %c0_i32_0 = arith.constant 0 : i32
    %c0_i32_1 = arith.constant 0 : i32
    return %c0_i32, %c0_i32_0 : i32, i32
  }
  func.func @transform_17(%arg0: i32) -> (i32, i32) {
    %c0_i32 = arith.constant 0 : i32
    %c0_i32_0 = arith.constant 0 : i32
    %c0_i32_1 = arith.constant 0 : i32
    return %c0_i32, %c0_i32_0 : i32, i32
  }
  func.func @transform_18(%arg0: i32) -> (i32, i32, i32) {
    %c0_i32 = arith.constant 0 : i32
    %c0_i32_0 = arith.constant 0 : i32
    %c0_i32_1 = arith.constant 0 : i32
    return %arg0, %c0_i32, %c0_i32_0 : i32, i32, i32
  }
}

module attributes {stable_mosaic.version = 11 : i64} {
  func.func @_fused_kernel(%arg0: i32, %arg1: memref<1x8x32xf32, #tpu.memory_space<vmem>>, %arg2: memref<1x1x8xf32, #tpu.memory_space<vmem>>, %arg3: memref<32x32xf32, #tpu.memory_space<vmem>>, %arg4: memref<1x32xf32, #tpu.memory_space<vmem>>, %arg5: memref<32x64xf32, #tpu.memory_space<vmem>>, %arg6: memref<1x64xf32, #tpu.memory_space<vmem>>, %arg7: memref<32x32xf32, #tpu.memory_space<vmem>>, %arg8: memref<1x32xf32, #tpu.memory_space<vmem>>, %arg9: memref<2x32xf32, #tpu.memory_space<vmem>>, %arg10: memref<32x64xf32, #tpu.memory_space<vmem>>, %arg11: memref<1x64xf32, #tpu.memory_space<vmem>>, %arg12: memref<64x32xf32, #tpu.memory_space<vmem>>, %arg13: memref<1x32xf32, #tpu.memory_space<vmem>>, %arg14: memref<2x32xf32, #tpu.memory_space<vmem>>, %arg15: memref<32x18xf32, #tpu.memory_space<vmem>>, %arg16: memref<1x18xf32, #tpu.memory_space<vmem>>, %arg17: memref<16x1xf32, #tpu.memory_space<vmem>>, %arg18: memref<1x1xf32, #tpu.memory_space<vmem>>, %arg19: memref<1x1x128xf32, #tpu.memory_space<vmem>>, %arg20: memref<1x32xf32, #tpu.memory_space<vmem>>) attributes {dimension_semantics = [#tpu.dimension_semantics<parallel>], iteration_bounds = array<i64: 2>, scalar_prefetch = 0 : i64, scratch_operands = 1 : i64, tpu.core_type = #tpu.core_type<tc>, window_params = [{transform_indices = @transform_0, window_bounds = array<i64: 1, 8, 32>}, {transform_indices = @transform_1, window_bounds = array<i64: 1, 1, 8>}, {pipeline_mode = #tpu.pipeline_mode<synchronous>, transform_indices = @transform_2, window_bounds = array<i64: 32, 32>}, {pipeline_mode = #tpu.pipeline_mode<synchronous>, transform_indices = @transform_3, window_bounds = array<i64: 1, 32>}, {pipeline_mode = #tpu.pipeline_mode<synchronous>, transform_indices = @transform_4, window_bounds = array<i64: 32, 64>}, {pipeline_mode = #tpu.pipeline_mode<synchronous>, transform_indices = @transform_5, window_bounds = array<i64: 1, 64>}, {pipeline_mode = #tpu.pipeline_mode<synchronous>, transform_indices = @transform_6, window_bounds = array<i64: 32, 32>}, {pipeline_mode = #tpu.pipeline_mode<synchronous>, transform_indices = @transform_7, window_bounds = array<i64: 1, 32>}, {pipeline_mode = #tpu.pipeline_mode<synchronous>, transform_indices = @transform_8, window_bounds = array<i64: 2, 32>}, {pipeline_mode = #tpu.pipeline_mode<synchronous>, transform_indices = @transform_9, window_bounds = array<i64: 32, 64>}, {pipeline_mode = #tpu.pipeline_mode<synchronous>, transform_indices = @transform_10, window_bounds = array<i64: 1, 64>}, {pipeline_mode = #tpu.pipeline_mode<synchronous>, transform_indices = @transform_11, window_bounds = array<i64: 64, 32>}, {pipeline_mode = #tpu.pipeline_mode<synchronous>, transform_indices = @transform_12, window_bounds = array<i64: 1, 32>}, {pipeline_mode = #tpu.pipeline_mode<synchronous>, transform_indices = @transform_13, window_bounds = array<i64: 2, 32>}, {pipeline_mode = #tpu.pipeline_mode<synchronous>, transform_indices = @transform_14, window_bounds = array<i64: 32, 18>}, {pipeline_mode = #tpu.pipeline_mode<synchronous>, transform_indices = @transform_15, window_bounds = array<i64: 1, 18>}, {pipeline_mode = #tpu.pipeline_mode<synchronous>, transform_indices = @transform_16, window_bounds = array<i64: 16, 1>}, {pipeline_mode = #tpu.pipeline_mode<synchronous>, transform_indices = @transform_17, window_bounds = array<i64: 1, 1>}, {transform_indices = @transform_18, window_bounds = array<i64: 1, 1, 128>}]} {
    %c0 = arith.constant 0 : index
    %c0_0 = arith.constant 0 : index
    %c0_1 = arith.constant 0 : index
    %0 = vector.load %arg1[%c0, %c0_0, %c0_1] : memref<1x8x32xf32, #tpu.memory_space<vmem>>, vector<1x8x32xf32>
    %1 = vector.shape_cast %0 : vector<1x8x32xf32> to vector<8x32xf32>
    %2 = vector.extract_strided_slice %0 {offsets = [0, 0, 0], sizes = [1, 1, 32], strides = [1, 1, 1]} : vector<1x8x32xf32> to vector<1x1x32xf32>
    %3 = vector.shape_cast %2 : vector<1x1x32xf32> to vector<1x32xf32>
    %c0_2 = arith.constant 0 : index
    %c0_3 = arith.constant 0 : index
    %4 = vector.load %arg5[%c0_2, %c0_3] : memref<32x64xf32, #tpu.memory_space<vmem>>, vector<32x64xf32>
    %5 = arith.truncf %1 : vector<8x32xf32> to vector<8x32xbf16>
    %6 = arith.truncf %4 : vector<32x64xf32> to vector<32x64xbf16>
    %cst = arith.constant dense<0.000000e+00> : vector<8x64xf32>
    %7 = tpu.matmul %5, %6, %cst {dimension_numbers = #tpu.dot_dimension_numbers<[1], [0], [0], [1], [0, 0, 1, 1], [], []>} : vector<8x32xbf16>, vector<32x64xbf16>, vector<8x64xf32> -> vector<8x64xf32>
    %c0_4 = arith.constant 0 : index
    %c0_5 = arith.constant 0 : index
    %8 = vector.load %arg6[%c0_4, %c0_5] : memref<1x64xf32, #tpu.memory_space<vmem>>, vector<1x64xf32>
    %9 = vector.broadcast %8 : vector<1x64xf32> to vector<8x64xf32>
    %10 = arith.addf %7, %9 : vector<8x64xf32>
    %11 = vector.shape_cast %10 : vector<8x64xf32> to vector<1x8x64xf32>
    %c0_6 = arith.constant 0 : index
    %c0_7 = arith.constant 0 : index
    %12 = vector.load %arg3[%c0_6, %c0_7] : memref<32x32xf32, #tpu.memory_space<vmem>>, vector<32x32xf32>
    %13 = arith.truncf %3 : vector<1x32xf32> to vector<1x32xbf16>
    %14 = arith.truncf %12 : vector<32x32xf32> to vector<32x32xbf16>
    %cst_8 = arith.constant dense<0.000000e+00> : vector<1x32xf32>
    %15 = tpu.matmul %13, %14, %cst_8 {dimension_numbers = #tpu.dot_dimension_numbers<[1], [0], [0], [1], [0, 0, 1, 1], [], []>} : vector<1x32xbf16>, vector<32x32xbf16>, vector<1x32xf32> -> vector<1x32xf32>
    %c0_9 = arith.constant 0 : index
    %c0_10 = arith.constant 0 : index
    %16 = vector.load %arg4[%c0_9, %c0_10] : memref<1x32xf32, #tpu.memory_space<vmem>>, vector<1x32xf32>
    %17 = arith.addf %15, %16 : vector<1x32xf32>
    %cst_11 = arith.constant 2.500000e-01 : f32
    %18 = vector.broadcast %cst_11 : f32 to vector<1x32xf32>
    %19 = arith.mulf %17, %18 : vector<1x32xf32>
    %c0_12 = arith.constant 0 : index
    %c0_13 = arith.constant 0 : index
    %c0_14 = arith.constant 0 : index
    %20 = vector.load %arg2[%c0_12, %c0_13, %c0_14] : memref<1x1x8xf32, #tpu.memory_space<vmem>>, vector<1x1x8xf32>
    %21 = vector.shape_cast %20 : vector<1x1x8xf32> to vector<1x8xf32>
    %cst_15 = arith.constant 1.000000e+00 : f32
    %22 = vector.broadcast %cst_15 : f32 to vector<1x8xf32>
    %23 = arith.subf %21, %22 : vector<1x8xf32>
    %cst_16 = arith.constant 1.000000e+09 : f32
    %24 = vector.broadcast %cst_16 : f32 to vector<1x8xf32>
    %25 = arith.mulf %23, %24 : vector<1x8xf32>
    %26 = vector.extract_strided_slice %19 {offsets = [0, 0], sizes = [1, 16], strides = [1, 1]} : vector<1x32xf32> to vector<1x16xf32>
    %27 = vector.extract_strided_slice %11 {offsets = [0, 0, 0], sizes = [1, 8, 16], strides = [1, 1, 1]} : vector<1x8x64xf32> to vector<1x8x16xf32>
    %28 = vector.shape_cast %27 : vector<1x8x16xf32> to vector<8x16xf32>
    %29 = vector.extract_strided_slice %11 {offsets = [0, 0, 32], sizes = [1, 8, 16], strides = [1, 1, 1]} : vector<1x8x64xf32> to vector<1x8x16xf32>
    %30 = vector.shape_cast %29 : vector<1x8x16xf32> to vector<8x16xf32>
    %31 = arith.truncf %26 : vector<1x16xf32> to vector<1x16xbf16>
    %32 = arith.truncf %28 : vector<8x16xf32> to vector<8x16xbf16>
    %cst_17 = arith.constant dense<0.000000e+00> : vector<1x8xf32>
    %33 = tpu.matmul %31, %32, %cst_17 {dimension_numbers = #tpu.dot_dimension_numbers<[1], [1], [0], [0], [0, 0, 1, 0], [], []>} : vector<1x16xbf16>, vector<8x16xbf16>, vector<1x8xf32> -> vector<1x8xf32>
    %34 = arith.addf %33, %25 : vector<1x8xf32>
    %cst_18 = arith.constant dense<0xFF800000> : vector<1xf32>
    %35 = vector.multi_reduction <maximumf>, %34, %cst_18 [1] : vector<1x8xf32> to vector<1xf32>
    %36 = vector.shape_cast %35 : vector<1xf32> to vector<1x1xf32>
    %37 = vector.broadcast %36 : vector<1x1xf32> to vector<1x8xf32>
    %38 = arith.subf %34, %37 : vector<1x8xf32>
    %39 = math.exp %38 : vector<1x8xf32>
    %cst_19 = arith.constant dense<0.000000e+00> : vector<1xf32>
    %40 = vector.multi_reduction <add>, %39, %cst_19 [1] : vector<1x8xf32> to vector<1xf32>
    %41 = vector.shape_cast %40 : vector<1xf32> to vector<1x1xf32>
    %42 = tpu.reciprocal %41 {approx = true} : vector<1x1xf32> -> vector<1x1xf32>
    %43 = vector.broadcast %42 : vector<1x1xf32> to vector<1x8xf32>
    %44 = arith.mulf %39, %43 : vector<1x8xf32>
    %45 = arith.truncf %44 : vector<1x8xf32> to vector<1x8xbf16>
    %46 = arith.truncf %30 : vector<8x16xf32> to vector<8x16xbf16>
    %cst_20 = arith.constant dense<0.000000e+00> : vector<1x16xf32>
    %47 = tpu.matmul %45, %46, %cst_20 {dimension_numbers = #tpu.dot_dimension_numbers<[1], [0], [0], [1], [0, 0, 1, 1], [], []>} : vector<1x8xbf16>, vector<8x16xbf16>, vector<1x16xf32> -> vector<1x16xf32>
    %c0_21 = arith.constant 0 : index
    %c0_22 = arith.constant 0 : index
    %48 = vector.load %arg20[%c0_21, %c0_22] : memref<1x32xf32, #tpu.memory_space<vmem>>, vector<1x16xf32>
    tpu.vector_store %arg20[%c0_21, %c0_22], %47 {strides = array<i32>} : memref<1x32xf32, #tpu.memory_space<vmem>>, vector<1x16xf32>,
    %49 = vector.extract_strided_slice %19 {offsets = [0, 16], sizes = [1, 16], strides = [1, 1]} : vector<1x32xf32> to vector<1x16xf32>
    %50 = vector.extract_strided_slice %11 {offsets = [0, 0, 16], sizes = [1, 8, 16], strides = [1, 1, 1]} : vector<1x8x64xf32> to vector<1x8x16xf32>
    %51 = vector.shape_cast %50 : vector<1x8x16xf32> to vector<8x16xf32>
    %52 = vector.extract_strided_slice %11 {offsets = [0, 0, 48], sizes = [1, 8, 16], strides = [1, 1, 1]} : vector<1x8x64xf32> to vector<1x8x16xf32>
    %53 = vector.shape_cast %52 : vector<1x8x16xf32> to vector<8x16xf32>
    %54 = arith.truncf %49 : vector<1x16xf32> to vector<1x16xbf16>
    %55 = arith.truncf %51 : vector<8x16xf32> to vector<8x16xbf16>
    %cst_23 = arith.constant dense<0.000000e+00> : vector<1x8xf32>
    %56 = tpu.matmul %54, %55, %cst_23 {dimension_numbers = #tpu.dot_dimension_numbers<[1], [1], [0], [0], [0, 0, 1, 0], [], []>} : vector<1x16xbf16>, vector<8x16xbf16>, vector<1x8xf32> -> vector<1x8xf32>
    %57 = arith.addf %56, %25 : vector<1x8xf32>
    %cst_24 = arith.constant dense<0xFF800000> : vector<1xf32>
    %58 = vector.multi_reduction <maximumf>, %57, %cst_24 [1] : vector<1x8xf32> to vector<1xf32>
    %59 = vector.shape_cast %58 : vector<1xf32> to vector<1x1xf32>
    %60 = vector.broadcast %59 : vector<1x1xf32> to vector<1x8xf32>
    %61 = arith.subf %57, %60 : vector<1x8xf32>
    %62 = math.exp %61 : vector<1x8xf32>
    %cst_25 = arith.constant dense<0.000000e+00> : vector<1xf32>
    %63 = vector.multi_reduction <add>, %62, %cst_25 [1] : vector<1x8xf32> to vector<1xf32>
    %64 = vector.shape_cast %63 : vector<1xf32> to vector<1x1xf32>
    %65 = tpu.reciprocal %64 {approx = true} : vector<1x1xf32> -> vector<1x1xf32>
    %66 = vector.broadcast %65 : vector<1x1xf32> to vector<1x8xf32>
    %67 = arith.mulf %62, %66 : vector<1x8xf32>
    %68 = arith.truncf %67 : vector<1x8xf32> to vector<1x8xbf16>
    %69 = arith.truncf %53 : vector<8x16xf32> to vector<8x16xbf16>
    %cst_26 = arith.constant dense<0.000000e+00> : vector<1x16xf32>
    %70 = tpu.matmul %68, %69, %cst_26 {dimension_numbers = #tpu.dot_dimension_numbers<[1], [0], [0], [1], [0, 0, 1, 1], [], []>} : vector<1x8xbf16>, vector<8x16xbf16>, vector<1x16xf32> -> vector<1x16xf32>
    %c0_27 = arith.constant 0 : index
    %c16 = arith.constant 16 : index
    %71 = vector.load %arg20[%c0_27, %c16] : memref<1x32xf32, #tpu.memory_space<vmem>>, vector<1x16xf32>
    tpu.vector_store %arg20[%c0_27, %c16], %70 {strides = array<i32>} : memref<1x32xf32, #tpu.memory_space<vmem>>, vector<1x16xf32>,
    %c0_28 = arith.constant 0 : index
    %c0_29 = arith.constant 0 : index
    %72 = vector.load %arg20[%c0_28, %c0_29] : memref<1x32xf32, #tpu.memory_space<vmem>>, vector<1x32xf32>
    %c0_30 = arith.constant 0 : index
    %c0_31 = arith.constant 0 : index
    %73 = vector.load %arg7[%c0_30, %c0_31] : memref<32x32xf32, #tpu.memory_space<vmem>>, vector<32x32xf32>
    %74 = arith.truncf %72 : vector<1x32xf32> to vector<1x32xbf16>
    %75 = arith.truncf %73 : vector<32x32xf32> to vector<32x32xbf16>
    %cst_32 = arith.constant dense<0.000000e+00> : vector<1x32xf32>
    %76 = tpu.matmul %74, %75, %cst_32 {dimension_numbers = #tpu.dot_dimension_numbers<[1], [0], [0], [1], [0, 0, 1, 1], [], []>} : vector<1x32xbf16>, vector<32x32xbf16>, vector<1x32xf32> -> vector<1x32xf32>
    %c0_33 = arith.constant 0 : index
    %c0_34 = arith.constant 0 : index
    %77 = vector.load %arg8[%c0_33, %c0_34] : memref<1x32xf32, #tpu.memory_space<vmem>>, vector<1x32xf32>
    %78 = arith.addf %76, %77 : vector<1x32xf32>
    %79 = arith.addf %3, %78 : vector<1x32xf32>
    %c0_35 = arith.constant 0 : index
    %c0_36 = arith.constant 0 : index
    %80 = vector.load %arg9[%c0_35, %c0_36] : memref<2x32xf32, #tpu.memory_space<vmem>>, vector<1x32xf32>
    %c1 = arith.constant 1 : index
    %c0_37 = arith.constant 0 : index
    %81 = vector.load %arg9[%c1, %c0_37] : memref<2x32xf32, #tpu.memory_space<vmem>>, vector<1x32xf32>
    %cst_38 = arith.constant dense<0.000000e+00> : vector<1xf32>
    %82 = vector.multi_reduction <add>, %79, %cst_38 [1] : vector<1x32xf32> to vector<1xf32>
    %83 = vector.shape_cast %82 : vector<1xf32> to vector<1x1xf32>
    %cst_39 = arith.constant 3.200000e+01 : f32
    %84 = vector.broadcast %cst_39 : f32 to vector<1x1xf32>
    %85 = arith.divf %83, %84 : vector<1x1xf32>
    %86 = vector.broadcast %85 : vector<1x1xf32> to vector<1x32xf32>
    %87 = arith.subf %79, %86 : vector<1x32xf32>
    %88 = arith.mulf %87, %87 : vector<1x32xf32>
    %cst_40 = arith.constant dense<0.000000e+00> : vector<1xf32>
    %89 = vector.multi_reduction <add>, %88, %cst_40 [1] : vector<1x32xf32> to vector<1xf32>
    %90 = vector.shape_cast %89 : vector<1xf32> to vector<1x1xf32>
    %cst_41 = arith.constant 3.200000e+01 : f32
    %91 = vector.broadcast %cst_41 : f32 to vector<1x1xf32>
    %92 = arith.divf %90, %91 : vector<1x1xf32>
    %93 = vector.broadcast %85 : vector<1x1xf32> to vector<1x32xf32>
    %94 = arith.subf %79, %93 : vector<1x32xf32>
    %cst_42 = arith.constant 9.99999974E-6 : f32
    %95 = vector.broadcast %cst_42 : f32 to vector<1x1xf32>
    %96 = arith.addf %92, %95 : vector<1x1xf32>
    %97 = math.rsqrt %96 : vector<1x1xf32>
    %98 = vector.broadcast %97 : vector<1x1xf32> to vector<1x32xf32>
    %99 = arith.mulf %94, %98 : vector<1x32xf32>
    %100 = arith.mulf %99, %80 : vector<1x32xf32>
    %101 = arith.addf %100, %81 : vector<1x32xf32>
    %c0_43 = arith.constant 0 : index
    %c0_44 = arith.constant 0 : index
    %102 = vector.load %arg10[%c0_43, %c0_44] : memref<32x64xf32, #tpu.memory_space<vmem>>, vector<32x64xf32>
    %103 = arith.truncf %101 : vector<1x32xf32> to vector<1x32xbf16>
    %104 = arith.truncf %102 : vector<32x64xf32> to vector<32x64xbf16>
    %cst_45 = arith.constant dense<0.000000e+00> : vector<1x64xf32>
    %105 = tpu.matmul %103, %104, %cst_45 {dimension_numbers = #tpu.dot_dimension_numbers<[1], [0], [0], [1], [0, 0, 1, 1], [], []>} : vector<1x32xbf16>, vector<32x64xbf16>, vector<1x64xf32> -> vector<1x64xf32>
    %c0_46 = arith.constant 0 : index
    %c0_47 = arith.constant 0 : index
    %106 = vector.load %arg11[%c0_46, %c0_47] : memref<1x64xf32, #tpu.memory_space<vmem>>, vector<1x64xf32>
    %107 = arith.addf %105, %106 : vector<1x64xf32>
    %108 = arith.mulf %107, %107 : vector<1x64xf32>
    %109 = arith.mulf %107, %108 : vector<1x64xf32>
    %cst_48 = arith.constant 4.471500e-02 : f32
    %110 = vector.broadcast %cst_48 : f32 to vector<1x64xf32>
    %111 = arith.mulf %110, %109 : vector<1x64xf32>
    %112 = arith.addf %107, %111 : vector<1x64xf32>
    %cst_49 = arith.constant 0.797884583 : f32
    %113 = vector.broadcast %cst_49 : f32 to vector<1x64xf32>
    %114 = arith.mulf %113, %112 : vector<1x64xf32>
    %115 = math.tanh %114 : vector<1x64xf32>
    %cst_50 = arith.constant 1.000000e+00 : f32
    %116 = vector.broadcast %cst_50 : f32 to vector<1x64xf32>
    %117 = arith.addf %116, %115 : vector<1x64xf32>
    %cst_51 = arith.constant 5.000000e-01 : f32
    %118 = vector.broadcast %cst_51 : f32 to vector<1x64xf32>
    %119 = arith.mulf %118, %117 : vector<1x64xf32>
    %120 = arith.mulf %107, %119 : vector<1x64xf32>
    %c0_52 = arith.constant 0 : index
    %c0_53 = arith.constant 0 : index
    %121 = vector.load %arg12[%c0_52, %c0_53] : memref<64x32xf32, #tpu.memory_space<vmem>>, vector<64x32xf32>
    %122 = arith.truncf %120 : vector<1x64xf32> to vector<1x64xbf16>
    %123 = arith.truncf %121 : vector<64x32xf32> to vector<64x32xbf16>
    %cst_54 = arith.constant dense<0.000000e+00> : vector<1x32xf32>
    %124 = tpu.matmul %122, %123, %cst_54 {dimension_numbers = #tpu.dot_dimension_numbers<[1], [0], [0], [1], [0, 0, 1, 1], [], []>} : vector<1x64xbf16>, vector<64x32xbf16>, vector<1x32xf32> -> vector<1x32xf32>
    %c0_55 = arith.constant 0 : index
    %c0_56 = arith.constant 0 : index
    %125 = vector.load %arg13[%c0_55, %c0_56] : memref<1x32xf32, #tpu.memory_space<vmem>>, vector<1x32xf32>
    %126 = arith.addf %124, %125 : vector<1x32xf32>
    %127 = arith.addf %101, %126 : vector<1x32xf32>
    %c0_57 = arith.constant 0 : index
    %c0_58 = arith.constant 0 : index
    %128 = vector.load %arg14[%c0_57, %c0_58] : memref<2x32xf32, #tpu.memory_space<vmem>>, vector<1x32xf32>
    %c1_59 = arith.constant 1 : index
    %c0_60 = arith.constant 0 : index
    %129 = vector.load %arg14[%c1_59, %c0_60] : memref<2x32xf32, #tpu.memory_space<vmem>>, vector<1x32xf32>
    %cst_61 = arith.constant dense<0.000000e+00> : vector<1xf32>
    %130 = vector.multi_reduction <add>, %127, %cst_61 [1] : vector<1x32xf32> to vector<1xf32>
    %131 = vector.shape_cast %130 : vector<1xf32> to vector<1x1xf32>
    %cst_62 = arith.constant 3.200000e+01 : f32
    %132 = vector.broadcast %cst_62 : f32 to vector<1x1xf32>
    %133 = arith.divf %131, %132 : vector<1x1xf32>
    %134 = vector.broadcast %133 : vector<1x1xf32> to vector<1x32xf32>
    %135 = arith.subf %127, %134 : vector<1x32xf32>
    %136 = arith.mulf %135, %135 : vector<1x32xf32>
    %cst_63 = arith.constant dense<0.000000e+00> : vector<1xf32>
    %137 = vector.multi_reduction <add>, %136, %cst_63 [1] : vector<1x32xf32> to vector<1xf32>
    %138 = vector.shape_cast %137 : vector<1xf32> to vector<1x1xf32>
    %cst_64 = arith.constant 3.200000e+01 : f32
    %139 = vector.broadcast %cst_64 : f32 to vector<1x1xf32>
    %140 = arith.divf %138, %139 : vector<1x1xf32>
    %141 = vector.broadcast %133 : vector<1x1xf32> to vector<1x32xf32>
    %142 = arith.subf %127, %141 : vector<1x32xf32>
    %cst_65 = arith.constant 9.99999974E-6 : f32
    %143 = vector.broadcast %cst_65 : f32 to vector<1x1xf32>
    %144 = arith.addf %140, %143 : vector<1x1xf32>
    %145 = math.rsqrt %144 : vector<1x1xf32>
    %146 = vector.broadcast %145 : vector<1x1xf32> to vector<1x32xf32>
    %147 = arith.mulf %142, %146 : vector<1x32xf32>
    %148 = arith.mulf %147, %128 : vector<1x32xf32>
    %149 = arith.addf %148, %129 : vector<1x32xf32>
    %c0_66 = arith.constant 0 : index
    %c0_67 = arith.constant 0 : index
    %150 = vector.load %arg15[%c0_66, %c0_67] : memref<32x18xf32, #tpu.memory_space<vmem>>, vector<32x18xf32>
    %151 = arith.truncf %149 : vector<1x32xf32> to vector<1x32xbf16>
    %152 = arith.truncf %150 : vector<32x18xf32> to vector<32x18xbf16>
    %cst_68 = arith.constant dense<0.000000e+00> : vector<1x18xf32>
    %153 = tpu.matmul %151, %152, %cst_68 {dimension_numbers = #tpu.dot_dimension_numbers<[1], [0], [0], [1], [0, 0, 1, 1], [], []>} : vector<1x32xbf16>, vector<32x18xbf16>, vector<1x18xf32> -> vector<1x18xf32>
    %c0_69 = arith.constant 0 : index
    %c0_70 = arith.constant 0 : index
    %154 = vector.load %arg16[%c0_69, %c0_70] : memref<1x18xf32, #tpu.memory_space<vmem>>, vector<1x18xf32>
    %155 = arith.addf %153, %154 : vector<1x18xf32>
    %156 = vector.extract_strided_slice %155 {offsets = [0, 0], sizes = [1, 16], strides = [1, 1]} : vector<1x18xf32> to vector<1x16xf32>
    %cst_71 = arith.constant 0.000000e+00 : f32
    %157 = vector.broadcast %cst_71 : f32 to vector<1x16xf32>
    %158 = arith.maximumf %156, %157 : vector<1x16xf32>
    %159 = vector.extract_strided_slice %155 {offsets = [0, 16], sizes = [1, 2], strides = [1, 1]} : vector<1x18xf32> to vector<1x2xf32>
    %cst_72 = arith.constant dense<0xFF800000> : vector<1xf32>
    %160 = vector.multi_reduction <maximumf>, %159, %cst_72 [1] : vector<1x2xf32> to vector<1xf32>
    %161 = vector.shape_cast %160 : vector<1xf32> to vector<1x1xf32>
    %162 = vector.broadcast %161 : vector<1x1xf32> to vector<1x2xf32>
    %163 = arith.subf %159, %162 : vector<1x2xf32>
    %164 = math.exp %163 : vector<1x2xf32>
    %cst_73 = arith.constant dense<0.000000e+00> : vector<1xf32>
    %165 = vector.multi_reduction <add>, %164, %cst_73 [1] : vector<1x2xf32> to vector<1xf32>
    %166 = vector.shape_cast %165 : vector<1xf32> to vector<1x1xf32>
    %167 = vector.broadcast %166 : vector<1x1xf32> to vector<1x2xf32>
    %168 = arith.divf %164, %167 : vector<1x2xf32>
    %c0_74 = arith.constant 0 : index
    %c0_75 = arith.constant 0 : index
    %169 = vector.load %arg17[%c0_74, %c0_75] : memref<16x1xf32, #tpu.memory_space<vmem>>, vector<16x1xf32>
    %170 = arith.truncf %158 : vector<1x16xf32> to vector<1x16xbf16>
    %171 = arith.truncf %169 : vector<16x1xf32> to vector<16x1xbf16>
    %cst_76 = arith.constant dense<0.000000e+00> : vector<1x1xf32>
    %172 = tpu.matmul %170, %171, %cst_76 {dimension_numbers = #tpu.dot_dimension_numbers<[1], [0], [0], [1], [0, 0, 1, 1], [], []>} : vector<1x16xbf16>, vector<16x1xbf16>, vector<1x1xf32> -> vector<1x1xf32>
    %c0_77 = arith.constant 0 : index
    %c0_78 = arith.constant 0 : index
    %173 = vector.load %arg18[%c0_77, %c0_78] : memref<1x1xf32, #tpu.memory_space<vmem>>, vector<1x1xf32>
    %174 = arith.addf %172, %173 : vector<1x1xf32>
    %cst_79 = arith.constant 0.000000e+00 : f32
    %175 = vector.broadcast %cst_79 : f32 to vector<1x125xf32>
    %176 = tpu.concatenate %168, %174, %175 in 1 : vector<1x2xf32>, vector<1x1xf32>, vector<1x125xf32> -> vector<1x128xf32>
    %177 = vector.shape_cast %176 : vector<1x128xf32> to vector<1x1x128xf32>
    %c0_80 = arith.constant 0 : index
    %c0_81 = arith.constant 0 : index
    %c0_82 = arith.constant 0 : index
    %178 = vector.load %arg19[%c0_80, %c0_81, %c0_82] : memref<1x1x128xf32, #tpu.memory_space<vmem>>, vector<1x1x128xf32>
    tpu.vector_store %arg19[%c0_80, %c0_81, %c0_82], %177 {strides = array<i32>} : memref<1x1x128xf32, #tpu.memory_space<vmem>>, vector<1x1x128xf32>,
    return
  }
  func.func @transform_0(%arg0: i32) -> (i32, i32, i32) {
    %c0_i32 = arith.constant 0 : i32
    %c0_i32_0 = arith.constant 0 : i32
    %c0_i32_1 = arith.constant 0 : i32
    return %arg0, %c0_i32, %c0_i32_0 : i32, i32, i32
  }
  func.func @transform_1(%arg0: i32) -> (i32, i32, i32) {
    %c0_i32 = arith.constant 0 : i32
    %c0_i32_0 = arith.constant 0 : i32
    %c0_i32_1 = arith.constant 0 : i32
    return %arg0, %c0_i32, %c0_i32_0 : i32, i32, i32
  }
  func.func @transform_2(%arg0: i32) -> (i32, i32) {
    %c0_i32 = arith.constant 0 : i32
    %c0_i32_0 = arith.constant 0 : i32
    %c0_i32_1 = arith.constant 0 : i32
    return %c0_i32, %c0_i32_0 : i32, i32
  }
  func.func @transform_3(%arg0: i32) -> (i32, i32) {
    %c0_i32 = arith.constant 0 : i32
    %c0_i32_0 = arith.constant 0 : i32
    %c0_i32_1 = arith.constant 0 : i32
    return %c0_i32, %c0_i32_0 : i32, i32
  }
  func.func @transform_4(%arg0: i32) -> (i32, i32) {
    %c0_i32 = arith.constant 0 : i32
    %c0_i32_0 = arith.constant 0 : i32
    %c0_i32_1 = arith.constant 0 : i32
    return %c0_i32, %c0_i32_0 : i32, i32
  }
  func.func @transform_5(%arg0: i32) -> (i32, i32) {
    %c0_i32 = arith.constant 0 : i32
    %c0_i32_0 = arith.constant 0 : i32
    %c0_i32_1 = arith.constant 0 : i32
    return %c0_i32, %c0_i32_0 : i32, i32
  }
  func.func @transform_6(%arg0: i32) -> (i32, i32) {
    %c0_i32 = arith.constant 0 : i32
    %c0_i32_0 = arith.constant 0 : i32
    %c0_i32_1 = arith.constant 0 : i32
    return %c0_i32, %c0_i32_0 : i32, i32
  }
  func.func @transform_7(%arg0: i32) -> (i32, i32) {
    %c0_i32 = arith.constant 0 : i32
    %c0_i32_0 = arith.constant 0 : i32
    %c0_i32_1 = arith.constant 0 : i32
    return %c0_i32, %c0_i32_0 : i32, i32
  }
  func.func @transform_8(%arg0: i32) -> (i32, i32) {
    %c0_i32 = arith.constant 0 : i32
    %c0_i32_0 = arith.constant 0 : i32
    %c0_i32_1 = arith.constant 0 : i32
    return %c0_i32, %c0_i32_0 : i32, i32
  }
  func.func @transform_9(%arg0: i32) -> (i32, i32) {
    %c0_i32 = arith.constant 0 : i32
    %c0_i32_0 = arith.constant 0 : i32
    %c0_i32_1 = arith.constant 0 : i32
    return %c0_i32, %c0_i32_0 : i32, i32
  }
  func.func @transform_10(%arg0: i32) -> (i32, i32) {
    %c0_i32 = arith.constant 0 : i32
    %c0_i32_0 = arith.constant 0 : i32
    %c0_i32_1 = arith.constant 0 : i32
    return %c0_i32, %c0_i32_0 : i32, i32
  }
  func.func @transform_11(%arg0: i32) -> (i32, i32) {
    %c0_i32 = arith.constant 0 : i32
    %c0_i32_0 = arith.constant 0 : i32
    %c0_i32_1 = arith.constant 0 : i32
    return %c0_i32, %c0_i32_0 : i32, i32
  }
  func.func @transform_12(%arg0: i32) -> (i32, i32) {
    %c0_i32 = arith.constant 0 : i32
    %c0_i32_0 = arith.constant 0 : i32
    %c0_i32_1 = arith.constant 0 : i32
    return %c0_i32, %c0_i32_0 : i32, i32
  }
  func.func @transform_13(%arg0: i32) -> (i32, i32) {
    %c0_i32 = arith.constant 0 : i32
    %c0_i32_0 = arith.constant 0 : i32
    %c0_i32_1 = arith.constant 0 : i32
    return %c0_i32, %c0_i32_0 : i32, i32
  }
  func.func @transform_14(%arg0: i32) -> (i32, i32) {
    %c0_i32 = arith.constant 0 : i32
    %c0_i32_0 = arith.constant 0 : i32
    %c0_i32_1 = arith.constant 0 : i32
    return %c0_i32, %c0_i32_0 : i32, i32
  }
  func.func @transform_15(%arg0: i32) -> (i32, i32) {
    %c0_i32 = arith.constant 0 : i32
    %c0_i32_0 = arith.constant 0 : i32
    %c0_i32_1 = arith.constant 0 : i32
    return %c0_i32, %c0_i32_0 : i32, i32
  }
  func.func @transform_16(%arg0: i32) -> (i32, i32) {
    %c0_i32 = arith.constant 0 : i32
    %c0_i32_0 = arith.constant 0 : i32
    %c0_i32_1 = arith.constant 0 : i32
    return %c0_i32, %c0_i32_0 : i32, i32
  }
  func.func @transform_17(%arg0: i32) -> (i32, i32) {
    %c0_i32 = arith.constant 0 : i32
    %c0_i32_0 = arith.constant 0 : i32
    %c0_i32_1 = arith.constant 0 : i32
    return %c0_i32, %c0_i32_0 : i32, i32
  }
  func.func @transform_18(%arg0: i32) -> (i32, i32, i32) {
    %c0_i32 = arith.constant 0 : i32
    %c0_i32_0 = arith.constant 0 : i32
    %c0_i32_1 = arith.constant 0 : i32
    return %arg0, %c0_i32, %c0_i32_0 : i32, i32, i32
  }
}

module attributes {stable_mosaic.version = 11 : i64} {
  func.func @_fused_kernel(%arg0: i32, %arg1: memref<1x8x32xf32, #tpu.memory_space<vmem>>, %arg2: memref<1x1x8xf32, #tpu.memory_space<vmem>>, %arg3: memref<32x32xf32, #tpu.memory_space<vmem>>, %arg4: memref<1x32xf32, #tpu.memory_space<vmem>>, %arg5: memref<32x64xf32, #tpu.memory_space<vmem>>, %arg6: memref<1x64xf32, #tpu.memory_space<vmem>>, %arg7: memref<32x32xf32, #tpu.memory_space<vmem>>, %arg8: memref<1x32xf32, #tpu.memory_space<vmem>>, %arg9: memref<2x32xf32, #tpu.memory_space<vmem>>, %arg10: memref<32x64xf32, #tpu.memory_space<vmem>>, %arg11: memref<1x64xf32, #tpu.memory_space<vmem>>, %arg12: memref<64x32xf32, #tpu.memory_space<vmem>>, %arg13: memref<1x32xf32, #tpu.memory_space<vmem>>, %arg14: memref<2x32xf32, #tpu.memory_space<vmem>>, %arg15: memref<32x18xf32, #tpu.memory_space<vmem>>, %arg16: memref<1x18xf32, #tpu.memory_space<vmem>>, %arg17: memref<16x1xf32, #tpu.memory_space<vmem>>, %arg18: memref<1x1xf32, #tpu.memory_space<vmem>>, %arg19: memref<1x1x128xf32, #tpu.memory_space<vmem>>, %arg20: memref<1x32xf32, #tpu.memory_space<vmem>>) attributes {dimension_semantics = [#tpu.dimension_semantics<parallel>], iteration_bounds = array<i64: 2>, scalar_prefetch = 0 : i64, scratch_operands = 1 : i64, tpu.core_type = #tpu.core_type<tc>, window_params = [{transform_indices = @transform_0, window_bounds = array<i64: 1, 8, 32>}, {transform_indices = @transform_1, window_bounds = array<i64: 1, 1, 8>}, {pipeline_mode = #tpu.pipeline_mode<synchronous>, transform_indices = @transform_2, window_bounds = array<i64: 32, 32>}, {pipeline_mode = #tpu.pipeline_mode<synchronous>, transform_indices = @transform_3, window_bounds = array<i64: 1, 32>}, {pipeline_mode = #tpu.pipeline_mode<synchronous>, transform_indices = @transform_4, window_bounds = array<i64: 32, 64>}, {pipeline_mode = #tpu.pipeline_mode<synchronous>, transform_indices = @transform_5, window_bounds = array<i64: 1, 64>}, {pipeline_mode = #tpu.pipeline_mode<synchronous>, transform_indices = @transform_6, window_bounds = array<i64: 32, 32>}, {pipeline_mode = #tpu.pipeline_mode<synchronous>, transform_indices = @transform_7, window_bounds = array<i64: 1, 32>}, {pipeline_mode = #tpu.pipeline_mode<synchronous>, transform_indices = @transform_8, window_bounds = array<i64: 2, 32>}, {pipeline_mode = #tpu.pipeline_mode<synchronous>, transform_indices = @transform_9, window_bounds = array<i64: 32, 64>}, {pipeline_mode = #tpu.pipeline_mode<synchronous>, transform_indices = @transform_10, window_bounds = array<i64: 1, 64>}, {pipeline_mode = #tpu.pipeline_mode<synchronous>, transform_indices = @transform_11, window_bounds = array<i64: 64, 32>}, {pipeline_mode = #tpu.pipeline_mode<synchronous>, transform_indices = @transform_12, window_bounds = array<i64: 1, 32>}, {pipeline_mode = #tpu.pipeline_mode<synchronous>, transform_indices = @transform_13, window_bounds = array<i64: 2, 32>}, {pipeline_mode = #tpu.pipeline_mode<synchronous>, transform_indices = @transform_14, window_bounds = array<i64: 32, 18>}, {pipeline_mode = #tpu.pipeline_mode<synchronous>, transform_indices = @transform_15, window_bounds = array<i64: 1, 18>}, {pipeline_mode = #tpu.pipeline_mode<synchronous>, transform_indices = @transform_16, window_bounds = array<i64: 16, 1>}, {pipeline_mode = #tpu.pipeline_mode<synchronous>, transform_indices = @transform_17, window_bounds = array<i64: 1, 1>}, {transform_indices = @transform_18, window_bounds = array<i64: 1, 1, 128>}]} {
    %c0 = arith.constant 0 : index
    %c0_0 = arith.constant 0 : index
    %c0_1 = arith.constant 0 : index
    %0 = vector.load %arg1[%c0, %c0_0, %c0_1] : memref<1x8x32xf32, #tpu.memory_space<vmem>>, vector<1x8x32xf32>
    %1 = vector.shape_cast %0 : vector<1x8x32xf32> to vector<8x32xf32>
    %2 = vector.extract_strided_slice %0 {offsets = [0, 0, 0], sizes = [1, 1, 32], strides = [1, 1, 1]} : vector<1x8x32xf32> to vector<1x1x32xf32>
    %3 = vector.shape_cast %2 : vector<1x1x32xf32> to vector<1x32xf32>
    %c0_2 = arith.constant 0 : index
    %c0_3 = arith.constant 0 : index
    %4 = vector.load %arg5[%c0_2, %c0_3] : memref<32x64xf32, #tpu.memory_space<vmem>>, vector<32x64xf32>
    %5 = arith.truncf %1 : vector<8x32xf32> to vector<8x32xbf16>
    %6 = arith.truncf %4 : vector<32x64xf32> to vector<32x64xbf16>
    %cst = arith.constant dense<0.000000e+00> : vector<8x64xf32>
    %7 = tpu.matmul %5, %6, %cst {dimension_numbers = #tpu.dot_dimension_numbers<[1], [0], [0], [1], [0, 0, 1, 1], [], []>} : vector<8x32xbf16>, vector<32x64xbf16>, vector<8x64xf32> -> vector<8x64xf32>
    %c0_4 = arith.constant 0 : index
    %c0_5 = arith.constant 0 : index
    %8 = vector.load %arg6[%c0_4, %c0_5] : memref<1x64xf32, #tpu.memory_space<vmem>>, vector<1x64xf32>
    %9 = vector.broadcast %8 : vector<1x64xf32> to vector<8x64xf32>
    %10 = arith.addf %7, %9 : vector<8x64xf32>
    %11 = vector.shape_cast %10 : vector<8x64xf32> to vector<1x8x64xf32>
    %c0_6 = arith.constant 0 : index
    %c0_7 = arith.constant 0 : index
    %12 = vector.load %arg3[%c0_6, %c0_7] : memref<32x32xf32, #tpu.memory_space<vmem>>, vector<32x32xf32>
    %13 = arith.truncf %3 : vector<1x32xf32> to vector<1x32xbf16>
    %14 = arith.truncf %12 : vector<32x32xf32> to vector<32x32xbf16>
    %cst_8 = arith.constant dense<0.000000e+00> : vector<1x32xf32>
    %15 = tpu.matmul %13, %14, %cst_8 {dimension_numbers = #tpu.dot_dimension_numbers<[1], [0], [0], [1], [0, 0, 1, 1], [], []>} : vector<1x32xbf16>, vector<32x32xbf16>, vector<1x32xf32> -> vector<1x32xf32>
    %c0_9 = arith.constant 0 : index
    %c0_10 = arith.constant 0 : index
    %16 = vector.load %arg4[%c0_9, %c0_10] : memref<1x32xf32, #tpu.memory_space<vmem>>, vector<1x32xf32>
    %17 = arith.addf %15, %16 : vector<1x32xf32>
    %cst_11 = arith.constant 2.500000e-01 : f32
    %18 = vector.broadcast %cst_11 : f32 to vector<1x32xf32>
    %19 = arith.mulf %17, %18 : vector<1x32xf32>
    %c0_12 = arith.constant 0 : index
    %c0_13 = arith.constant 0 : index
    %c0_14 = arith.constant 0 : index
    %20 = vector.load %arg2[%c0_12, %c0_13, %c0_14] : memref<1x1x8xf32, #tpu.memory_space<vmem>>, vector<1x1x8xf32>
    %21 = vector.shape_cast %20 : vector<1x1x8xf32> to vector<1x8xf32>
    %cst_15 = arith.constant 1.000000e+00 : f32
    %22 = vector.broadcast %cst_15 : f32 to vector<1x8xf32>
    %23 = arith.subf %21, %22 : vector<1x8xf32>
    %cst_16 = arith.constant 1.000000e+09 : f32
    %24 = vector.broadcast %cst_16 : f32 to vector<1x8xf32>
    %25 = arith.mulf %23, %24 : vector<1x8xf32>
    %26 = vector.extract_strided_slice %19 {offsets = [0, 0], sizes = [1, 16], strides = [1, 1]} : vector<1x32xf32> to vector<1x16xf32>
    %27 = vector.extract_strided_slice %11 {offsets = [0, 0, 0], sizes = [1, 8, 16], strides = [1, 1, 1]} : vector<1x8x64xf32> to vector<1x8x16xf32>
    %28 = vector.shape_cast %27 : vector<1x8x16xf32> to vector<8x16xf32>
    %29 = vector.extract_strided_slice %11 {offsets = [0, 0, 32], sizes = [1, 8, 16], strides = [1, 1, 1]} : vector<1x8x64xf32> to vector<1x8x16xf32>
    %30 = vector.shape_cast %29 : vector<1x8x16xf32> to vector<8x16xf32>
    %31 = arith.truncf %26 : vector<1x16xf32> to vector<1x16xbf16>
    %32 = arith.truncf %28 : vector<8x16xf32> to vector<8x16xbf16>
    %cst_17 = arith.constant dense<0.000000e+00> : vector<1x8xf32>
    %33 = tpu.matmul %31, %32, %cst_17 {dimension_numbers = #tpu.dot_dimension_numbers<[1], [1], [0], [0], [0, 0, 1, 0], [], []>} : vector<1x16xbf16>, vector<8x16xbf16>, vector<1x8xf32> -> vector<1x8xf32>
    %34 = arith.addf %33, %25 : vector<1x8xf32>
    %cst_18 = arith.constant dense<0xFF800000> : vector<1xf32>
    %35 = vector.multi_reduction <maximumf>, %34, %cst_18 [1] : vector<1x8xf32> to vector<1xf32>
    %36 = vector.shape_cast %35 : vector<1xf32> to vector<1x1xf32>
    %37 = vector.broadcast %36 : vector<1x1xf32> to vector<1x8xf32>
    %38 = arith.subf %34, %37 : vector<1x8xf32>
    %39 = math.exp %38 : vector<1x8xf32>
    %cst_19 = arith.constant dense<0.000000e+00> : vector<1xf32>
    %40 = vector.multi_reduction <add>, %39, %cst_19 [1] : vector<1x8xf32> to vector<1xf32>
    %41 = vector.shape_cast %40 : vector<1xf32> to vector<1x1xf32>
    %42 = tpu.reciprocal %41 {approx = true} : vector<1x1xf32> -> vector<1x1xf32>
    %43 = vector.broadcast %42 : vector<1x1xf32> to vector<1x8xf32>
    %44 = arith.mulf %39, %43 : vector<1x8xf32>
    %45 = arith.truncf %44 : vector<1x8xf32> to vector<1x8xbf16>
    %46 = arith.truncf %30 : vector<8x16xf32> to vector<8x16xbf16>
    %cst_20 = arith.constant dense<0.000000e+00> : vector<1x16xf32>
    %47 = tpu.matmul %45, %46, %cst_20 {dimension_numbers = #tpu.dot_dimension_numbers<[1], [0], [0], [1], [0, 0, 1, 1], [], []>} : vector<1x8xbf16>, vector<8x16xbf16>, vector<1x16xf32> -> vector<1x16xf32>
    %c0_21 = arith.constant 0 : index
    %c0_22 = arith.constant 0 : index
    %48 = vector.load %arg20[%c0_21, %c0_22] : memref<1x32xf32, #tpu.memory_space<vmem>>, vector<1x16xf32>
    tpu.vector_store %arg20[%c0_21, %c0_22], %47 {strides = array<i32>} : memref<1x32xf32, #tpu.memory_space<vmem>>, vector<1x16xf32>,
    %49 = vector.extract_strided_slice %19 {offsets = [0, 16], sizes = [1, 16], strides = [1, 1]} : vector<1x32xf32> to vector<1x16xf32>
    %50 = vector.extract_strided_slice %11 {offsets = [0, 0, 16], sizes = [1, 8, 16], strides = [1, 1, 1]} : vector<1x8x64xf32> to vector<1x8x16xf32>
    %51 = vector.shape_cast %50 : vector<1x8x16xf32> to vector<8x16xf32>
    %52 = vector.extract_strided_slice %11 {offsets = [0, 0, 48], sizes = [1, 8, 16], strides = [1, 1, 1]} : vector<1x8x64xf32> to vector<1x8x16xf32>
    %53 = vector.shape_cast %52 : vector<1x8x16xf32> to vector<8x16xf32>
    %54 = arith.truncf %49 : vector<1x16xf32> to vector<1x16xbf16>
    %55 = arith.truncf %51 : vector<8x16xf32> to vector<8x16xbf16>
    %cst_23 = arith.constant dense<0.000000e+00> : vector<1x8xf32>
    %56 = tpu.matmul %54, %55, %cst_23 {dimension_numbers = #tpu.dot_dimension_numbers<[1], [1], [0], [0], [0, 0, 1, 0], [], []>} : vector<1x16xbf16>, vector<8x16xbf16>, vector<1x8xf32> -> vector<1x8xf32>
    %57 = arith.addf %56, %25 : vector<1x8xf32>
    %cst_24 = arith.constant dense<0xFF800000> : vector<1xf32>
    %58 = vector.multi_reduction <maximumf>, %57, %cst_24 [1] : vector<1x8xf32> to vector<1xf32>
    %59 = vector.shape_cast %58 : vector<1xf32> to vector<1x1xf32>
    %60 = vector.broadcast %59 : vector<1x1xf32> to vector<1x8xf32>
    %61 = arith.subf %57, %60 : vector<1x8xf32>
    %62 = math.exp %61 : vector<1x8xf32>
    %cst_25 = arith.constant dense<0.000000e+00> : vector<1xf32>
    %63 = vector.multi_reduction <add>, %62, %cst_25 [1] : vector<1x8xf32> to vector<1xf32>
    %64 = vector.shape_cast %63 : vector<1xf32> to vector<1x1xf32>
    %65 = tpu.reciprocal %64 {approx = true} : vector<1x1xf32> -> vector<1x1xf32>
    %66 = vector.broadcast %65 : vector<1x1xf32> to vector<1x8xf32>
    %67 = arith.mulf %62, %66 : vector<1x8xf32>
    %68 = arith.truncf %67 : vector<1x8xf32> to vector<1x8xbf16>
    %69 = arith.truncf %53 : vector<8x16xf32> to vector<8x16xbf16>
    %cst_26 = arith.constant dense<0.000000e+00> : vector<1x16xf32>
    %70 = tpu.matmul %68, %69, %cst_26 {dimension_numbers = #tpu.dot_dimension_numbers<[1], [0], [0], [1], [0, 0, 1, 1], [], []>} : vector<1x8xbf16>, vector<8x16xbf16>, vector<1x16xf32> -> vector<1x16xf32>
    %c0_27 = arith.constant 0 : index
    %c16 = arith.constant 16 : index
    %71 = vector.load %arg20[%c0_27, %c16] : memref<1x32xf32, #tpu.memory_space<vmem>>, vector<1x16xf32>
    tpu.vector_store %arg20[%c0_27, %c16], %70 {strides = array<i32>} : memref<1x32xf32, #tpu.memory_space<vmem>>, vector<1x16xf32>,
    %c0_28 = arith.constant 0 : index
    %c0_29 = arith.constant 0 : index
    %72 = vector.load %arg20[%c0_28, %c0_29] : memref<1x32xf32, #tpu.memory_space<vmem>>, vector<1x32xf32>
    %c0_30 = arith.constant 0 : index
    %c0_31 = arith.constant 0 : index
    %73 = vector.load %arg7[%c0_30, %c0_31] : memref<32x32xf32, #tpu.memory_space<vmem>>, vector<32x32xf32>
    %74 = arith.truncf %72 : vector<1x32xf32> to vector<1x32xbf16>
    %75 = arith.truncf %73 : vector<32x32xf32> to vector<32x32xbf16>
    %cst_32 = arith.constant dense<0.000000e+00> : vector<1x32xf32>
    %76 = tpu.matmul %74, %75, %cst_32 {dimension_numbers = #tpu.dot_dimension_numbers<[1], [0], [0], [1], [0, 0, 1, 1], [], []>} : vector<1x32xbf16>, vector<32x32xbf16>, vector<1x32xf32> -> vector<1x32xf32>
    %c0_33 = arith.constant 0 : index
    %c0_34 = arith.constant 0 : index
    %77 = vector.load %arg8[%c0_33, %c0_34] : memref<1x32xf32, #tpu.memory_space<vmem>>, vector<1x32xf32>
    %78 = arith.addf %76, %77 : vector<1x32xf32>
    %79 = arith.addf %3, %78 : vector<1x32xf32>
    %c0_35 = arith.constant 0 : index
    %c0_36 = arith.constant 0 : index
    %80 = vector.load %arg9[%c0_35, %c0_36] : memref<2x32xf32, #tpu.memory_space<vmem>>, vector<1x32xf32>
    %c1 = arith.constant 1 : index
    %c0_37 = arith.constant 0 : index
    %81 = vector.load %arg9[%c1, %c0_37] : memref<2x32xf32, #tpu.memory_space<vmem>>, vector<1x32xf32>
    %cst_38 = arith.constant dense<0.000000e+00> : vector<1xf32>
    %82 = vector.multi_reduction <add>, %79, %cst_38 [1] : vector<1x32xf32> to vector<1xf32>
    %83 = vector.shape_cast %82 : vector<1xf32> to vector<1x1xf32>
    %cst_39 = arith.constant 3.200000e+01 : f32
    %84 = vector.broadcast %cst_39 : f32 to vector<1x1xf32>
    %85 = arith.divf %83, %84 : vector<1x1xf32>
    %86 = vector.broadcast %85 : vector<1x1xf32> to vector<1x32xf32>
    %87 = arith.subf %79, %86 : vector<1x32xf32>
    %88 = arith.mulf %87, %87 : vector<1x32xf32>
    %cst_40 = arith.constant dense<0.000000e+00> : vector<1xf32>
    %89 = vector.multi_reduction <add>, %88, %cst_40 [1] : vector<1x32xf32> to vector<1xf32>
    %90 = vector.shape_cast %89 : vector<1xf32> to vector<1x1xf32>
    %cst_41 = arith.constant 3.200000e+01 : f32
    %91 = vector.broadcast %cst_41 : f32 to vector<1x1xf32>
    %92 = arith.divf %90, %91 : vector<1x1xf32>
    %93 = vector.broadcast %85 : vector<1x1xf32> to vector<1x32xf32>
    %94 = arith.subf %79, %93 : vector<1x32xf32>
    %cst_42 = arith.constant 9.99999974E-6 : f32
    %95 = vector.broadcast %cst_42 : f32 to vector<1x1xf32>
    %96 = arith.addf %92, %95 : vector<1x1xf32>
    %97 = math.rsqrt %96 : vector<1x1xf32>
    %98 = vector.broadcast %97 : vector<1x1xf32> to vector<1x32xf32>
    %99 = arith.mulf %94, %98 : vector<1x32xf32>
    %100 = arith.mulf %99, %80 : vector<1x32xf32>
    %101 = arith.addf %100, %81 : vector<1x32xf32>
    %c0_43 = arith.constant 0 : index
    %c0_44 = arith.constant 0 : index
    %102 = vector.load %arg10[%c0_43, %c0_44] : memref<32x64xf32, #tpu.memory_space<vmem>>, vector<32x64xf32>
    %103 = arith.truncf %101 : vector<1x32xf32> to vector<1x32xbf16>
    %104 = arith.truncf %102 : vector<32x64xf32> to vector<32x64xbf16>
    %cst_45 = arith.constant dense<0.000000e+00> : vector<1x64xf32>
    %105 = tpu.matmul %103, %104, %cst_45 {dimension_numbers = #tpu.dot_dimension_numbers<[1], [0], [0], [1], [0, 0, 1, 1], [], []>} : vector<1x32xbf16>, vector<32x64xbf16>, vector<1x64xf32> -> vector<1x64xf32>
    %c0_46 = arith.constant 0 : index
    %c0_47 = arith.constant 0 : index
    %106 = vector.load %arg11[%c0_46, %c0_47] : memref<1x64xf32, #tpu.memory_space<vmem>>, vector<1x64xf32>
    %107 = arith.addf %105, %106 : vector<1x64xf32>
    %108 = arith.mulf %107, %107 : vector<1x64xf32>
    %109 = arith.mulf %107, %108 : vector<1x64xf32>
    %cst_48 = arith.constant 4.471500e-02 : f32
    %110 = vector.broadcast %cst_48 : f32 to vector<1x64xf32>
    %111 = arith.mulf %110, %109 : vector<1x64xf32>
    %112 = arith.addf %107, %111 : vector<1x64xf32>
    %cst_49 = arith.constant 0.797884583 : f32
    %113 = vector.broadcast %cst_49 : f32 to vector<1x64xf32>
    %114 = arith.mulf %113, %112 : vector<1x64xf32>
    %115 = math.tanh %114 : vector<1x64xf32>
    %cst_50 = arith.constant 1.000000e+00 : f32
    %116 = vector.broadcast %cst_50 : f32 to vector<1x64xf32>
    %117 = arith.addf %116, %115 : vector<1x64xf32>
    %cst_51 = arith.constant 5.000000e-01 : f32
    %118 = vector.broadcast %cst_51 : f32 to vector<1x64xf32>
    %119 = arith.mulf %118, %117 : vector<1x64xf32>
    %120 = arith.mulf %107, %119 : vector<1x64xf32>
    %c0_52 = arith.constant 0 : index
    %c0_53 = arith.constant 0 : index
    %121 = vector.load %arg12[%c0_52, %c0_53] : memref<64x32xf32, #tpu.memory_space<vmem>>, vector<64x32xf32>
    %122 = arith.truncf %120 : vector<1x64xf32> to vector<1x64xbf16>
    %123 = arith.truncf %121 : vector<64x32xf32> to vector<64x32xbf16>
    %cst_54 = arith.constant dense<0.000000e+00> : vector<1x32xf32>
    %124 = tpu.matmul %122, %123, %cst_54 {dimension_numbers = #tpu.dot_dimension_numbers<[1], [0], [0], [1], [0, 0, 1, 1], [], []>} : vector<1x64xbf16>, vector<64x32xbf16>, vector<1x32xf32> -> vector<1x32xf32>
    %c0_55 = arith.constant 0 : index
    %c0_56 = arith.constant 0 : index
    %125 = vector.load %arg13[%c0_55, %c0_56] : memref<1x32xf32, #tpu.memory_space<vmem>>, vector<1x32xf32>
    %126 = arith.addf %124, %125 : vector<1x32xf32>
    %127 = arith.addf %101, %126 : vector<1x32xf32>
    %c0_57 = arith.constant 0 : index
    %c0_58 = arith.constant 0 : index
    %128 = vector.load %arg14[%c0_57, %c0_58] : memref<2x32xf32, #tpu.memory_space<vmem>>, vector<1x32xf32>
    %c1_59 = arith.constant 1 : index
    %c0_60 = arith.constant 0 : index
    %129 = vector.load %arg14[%c1_59, %c0_60] : memref<2x32xf32, #tpu.memory_space<vmem>>, vector<1x32xf32>
    %cst_61 = arith.constant dense<0.000000e+00> : vector<1xf32>
    %130 = vector.multi_reduction <add>, %127, %cst_61 [1] : vector<1x32xf32> to vector<1xf32>
    %131 = vector.shape_cast %130 : vector<1xf32> to vector<1x1xf32>
    %cst_62 = arith.constant 3.200000e+01 : f32
    %132 = vector.broadcast %cst_62 : f32 to vector<1x1xf32>
    %133 = arith.divf %131, %132 : vector<1x1xf32>
    %134 = vector.broadcast %133 : vector<1x1xf32> to vector<1x32xf32>
    %135 = arith.subf %127, %134 : vector<1x32xf32>
    %136 = arith.mulf %135, %135 : vector<1x32xf32>
    %cst_63 = arith.constant dense<0.000000e+00> : vector<1xf32>
    %137 = vector.multi_reduction <add>, %136, %cst_63 [1] : vector<1x32xf32> to vector<1xf32>
    %138 = vector.shape_cast %137 : vector<1xf32> to vector<1x1xf32>
    %cst_64 = arith.constant 3.200000e+01 : f32
    %139 = vector.broadcast %cst_64 : f32 to vector<1x1xf32>
    %140 = arith.divf %138, %139 : vector<1x1xf32>
    %141 = vector.broadcast %133 : vector<1x1xf32> to vector<1x32xf32>
    %142 = arith.subf %127, %141 : vector<1x32xf32>
    %cst_65 = arith.constant 9.99999974E-6 : f32
    %143 = vector.broadcast %cst_65 : f32 to vector<1x1xf32>
    %144 = arith.addf %140, %143 : vector<1x1xf32>
    %145 = math.rsqrt %144 : vector<1x1xf32>
    %146 = vector.broadcast %145 : vector<1x1xf32> to vector<1x32xf32>
    %147 = arith.mulf %142, %146 : vector<1x32xf32>
    %148 = arith.mulf %147, %128 : vector<1x32xf32>
    %149 = arith.addf %148, %129 : vector<1x32xf32>
    %c0_66 = arith.constant 0 : index
    %c0_67 = arith.constant 0 : index
    %150 = vector.load %arg15[%c0_66, %c0_67] : memref<32x18xf32, #tpu.memory_space<vmem>>, vector<32x18xf32>
    %151 = arith.truncf %149 : vector<1x32xf32> to vector<1x32xbf16>
    %152 = arith.truncf %150 : vector<32x18xf32> to vector<32x18xbf16>
    %cst_68 = arith.constant dense<0.000000e+00> : vector<1x18xf32>
    %153 = tpu.matmul %151, %152, %cst_68 {dimension_numbers = #tpu.dot_dimension_numbers<[1], [0], [0], [1], [0, 0, 1, 1], [], []>} : vector<1x32xbf16>, vector<32x18xbf16>, vector<1x18xf32> -> vector<1x18xf32>
    %c0_69 = arith.constant 0 : index
    %c0_70 = arith.constant 0 : index
    %154 = vector.load %arg16[%c0_69, %c0_70] : memref<1x18xf32, #tpu.memory_space<vmem>>, vector<1x18xf32>
    %155 = arith.addf %153, %154 : vector<1x18xf32>
    %156 = vector.extract_strided_slice %155 {offsets = [0, 0], sizes = [1, 16], strides = [1, 1]} : vector<1x18xf32> to vector<1x16xf32>
    %cst_71 = arith.constant 0.000000e+00 : f32
    %157 = vector.broadcast %cst_71 : f32 to vector<1x16xf32>
    %158 = arith.maximumf %156, %157 : vector<1x16xf32>
    %159 = vector.extract_strided_slice %155 {offsets = [0, 16], sizes = [1, 2], strides = [1, 1]} : vector<1x18xf32> to vector<1x2xf32>
    %cst_72 = arith.constant dense<0xFF800000> : vector<1xf32>
    %160 = vector.multi_reduction <maximumf>, %159, %cst_72 [1] : vector<1x2xf32> to vector<1xf32>
    %161 = vector.shape_cast %160 : vector<1xf32> to vector<1x1xf32>
    %162 = vector.broadcast %161 : vector<1x1xf32> to vector<1x2xf32>
    %163 = arith.subf %159, %162 : vector<1x2xf32>
    %164 = math.exp %163 : vector<1x2xf32>
    %cst_73 = arith.constant dense<0.000000e+00> : vector<1xf32>
    %165 = vector.multi_reduction <add>, %164, %cst_73 [1] : vector<1x2xf32> to vector<1xf32>
    %166 = vector.shape_cast %165 : vector<1xf32> to vector<1x1xf32>
    %167 = vector.broadcast %166 : vector<1x1xf32> to vector<1x2xf32>
    %168 = arith.divf %164, %167 : vector<1x2xf32>
    %c0_74 = arith.constant 0 : index
    %c0_75 = arith.constant 0 : index
    %169 = vector.load %arg17[%c0_74, %c0_75] : memref<16x1xf32, #tpu.memory_space<vmem>>, vector<16x1xf32>
    %170 = arith.truncf %158 : vector<1x16xf32> to vector<1x16xbf16>
    %171 = arith.truncf %169 : vector<16x1xf32> to vector<16x1xbf16>
    %cst_76 = arith.constant dense<0.000000e+00> : vector<1x1xf32>
    %172 = tpu.matmul %170, %171, %cst_76 {dimension_numbers = #tpu.dot_dimension_numbers<[1], [0], [0], [1], [0, 0, 1, 1], [], []>} : vector<1x16xbf16>, vector<16x1xbf16>, vector<1x1xf32> -> vector<1x1xf32>
    %c0_77 = arith.constant 0 : index
    %c0_78 = arith.constant 0 : index
    %173 = vector.load %arg18[%c0_77, %c0_78] : memref<1x1xf32, #tpu.memory_space<vmem>>, vector<1x1xf32>
    %174 = arith.addf %172, %173 : vector<1x1xf32>
    %cst_79 = arith.constant 0.000000e+00 : f32
    %175 = vector.broadcast %cst_79 : f32 to vector<1x125xf32>
    %176 = tpu.concatenate %168, %174, %175 in 1 : vector<1x2xf32>, vector<1x1xf32>, vector<1x125xf32> -> vector<1x128xf32>
    %177 = vector.shape_cast %176 : vector<1x128xf32> to vector<1x1x128xf32>
    %c0_80 = arith.constant 0 : index
    %c0_81 = arith.constant 0 : index
    %c0_82 = arith.constant 0 : index
    %178 = vector.load %arg19[%c0_80, %c0_81, %c0_82] : memref<1x1x128xf32, #tpu.memory_space<vmem>>, vector<1x1x128xf32>
    tpu.vector_store %arg19[%c0_80, %c0_81, %c0_82], %177 {strides = array<i32>} : memref<1x1x128xf32, #tpu.memory_space<vmem>>, vector<1x1x128xf32>,
    return
  }
  func.func @transform_0(%arg0: i32) -> (i32, i32, i32) {
    %c0_i32 = arith.constant 0 : i32
    %c0_i32_0 = arith.constant 0 : i32
    %c0_i32_1 = arith.constant 0 : i32
    return %arg0, %c0_i32, %c0_i32_0 : i32, i32, i32
  }
  func.func @transform_1(%arg0: i32) -> (i32, i32, i32) {
    %c0_i32 = arith.constant 0 : i32
    %c0_i32_0 = arith.constant 0 : i32
    %c0_i32_1 = arith.constant 0 : i32
    return %arg0, %c0_i32, %c0_i32_0 : i32, i32, i32
  }
  func.func @transform_2(%arg0: i32) -> (i32, i32) {
    %c0_i32 = arith.constant 0 : i32
    %c0_i32_0 = arith.constant 0 : i32
    %c0_i32_1 = arith.constant 0 : i32
    return %c0_i32, %c0_i32_0 : i32, i32
  }
  func.func @transform_3(%arg0: i32) -> (i32, i32) {
    %c0_i32 = arith.constant 0 : i32
    %c0_i32_0 = arith.constant 0 : i32
    %c0_i32_1 = arith.constant 0 : i32
    return %c0_i32, %c0_i32_0 : i32, i32
  }
  func.func @transform_4(%arg0: i32) -> (i32, i32) {
    %c0_i32 = arith.constant 0 : i32
    %c0_i32_0 = arith.constant 0 : i32
    %c0_i32_1 = arith.constant 0 : i32
    return %c0_i32, %c0_i32_0 : i32, i32
  }
  func.func @transform_5(%arg0: i32) -> (i32, i32) {
    %c0_i32 = arith.constant 0 : i32
    %c0_i32_0 = arith.constant 0 : i32
    %c0_i32_1 = arith.constant 0 : i32
    return %c0_i32, %c0_i32_0 : i32, i32
  }
  func.func @transform_6(%arg0: i32) -> (i32, i32) {
    %c0_i32 = arith.constant 0 : i32
    %c0_i32_0 = arith.constant 0 : i32
    %c0_i32_1 = arith.constant 0 : i32
    return %c0_i32, %c0_i32_0 : i32, i32
  }
  func.func @transform_7(%arg0: i32) -> (i32, i32) {
    %c0_i32 = arith.constant 0 : i32
    %c0_i32_0 = arith.constant 0 : i32
    %c0_i32_1 = arith.constant 0 : i32
    return %c0_i32, %c0_i32_0 : i32, i32
  }
  func.func @transform_8(%arg0: i32) -> (i32, i32) {
    %c0_i32 = arith.constant 0 : i32
    %c0_i32_0 = arith.constant 0 : i32
    %c0_i32_1 = arith.constant 0 : i32
    return %c0_i32, %c0_i32_0 : i32, i32
  }
  func.func @transform_9(%arg0: i32) -> (i32, i32) {
    %c0_i32 = arith.constant 0 : i32
    %c0_i32_0 = arith.constant 0 : i32
    %c0_i32_1 = arith.constant 0 : i32
    return %c0_i32, %c0_i32_0 : i32, i32
  }
  func.func @transform_10(%arg0: i32) -> (i32, i32) {
    %c0_i32 = arith.constant 0 : i32
    %c0_i32_0 = arith.constant 0 : i32
    %c0_i32_1 = arith.constant 0 : i32
    return %c0_i32, %c0_i32_0 : i32, i32
  }
  func.func @transform_11(%arg0: i32) -> (i32, i32) {
    %c0_i32 = arith.constant 0 : i32
    %c0_i32_0 = arith.constant 0 : i32
    %c0_i32_1 = arith.constant 0 : i32
    return %c0_i32, %c0_i32_0 : i32, i32
  }
  func.func @transform_12(%arg0: i32) -> (i32, i32) {
    %c0_i32 = arith.constant 0 : i32
    %c0_i32_0 = arith.constant 0 : i32
    %c0_i32_1 = arith.constant 0 : i32
    return %c0_i32, %c0_i32_0 : i32, i32
  }
  func.func @transform_13(%arg0: i32) -> (i32, i32) {
    %c0_i32 = arith.constant 0 : i32
    %c0_i32_0 = arith.constant 0 : i32
    %c0_i32_1 = arith.constant 0 : i32
    return %c0_i32, %c0_i32_0 : i32, i32
  }
  func.func @transform_14(%arg0: i32) -> (i32, i32) {
    %c0_i32 = arith.constant 0 : i32
    %c0_i32_0 = arith.constant 0 : i32
    %c0_i32_1 = arith.constant 0 : i32
    return %c0_i32, %c0_i32_0 : i32, i32
  }
  func.func @transform_15(%arg0: i32) -> (i32, i32) {
    %c0_i32 = arith.constant 0 : i32
    %c0_i32_0 = arith.constant 0 : i32
    %c0_i32_1 = arith.constant 0 : i32
    return %c0_i32, %c0_i32_0 : i32, i32
  }
  func.func @transform_16(%arg0: i32) -> (i32, i32) {
    %c0_i32 = arith.constant 0 : i32
    %c0_i32_0 = arith.constant 0 : i32
    %c0_i32_1 = arith.constant 0 : i32
    return %c0_i32, %c0_i32_0 : i32, i32
  }
  func.func @transform_17(%arg0: i32) -> (i32, i32) {
    %c0_i32 = arith.constant 0 : i32
    %c0_i32_0 = arith.constant 0 : i32
    %c0_i32_1 = arith.constant 0 : i32
    return %c0_i32, %c0_i32_0 : i32, i32
  }
  func.func @transform_18(%arg0: i32) -> (i32, i32, i32) {
    %c0_i32 = arith.constant 0 : i32
    %c0_i32_0 = arith.constant 0 : i32
    %c0_i32_1 = arith.constant 0 : i32
    return %arg0, %c0_i32, %c0_i32_0 : i32, i32, i32
  }
}

</mosaic_0001>

<llo_original>
// kernel: tpu_custom_call.1
$region0: #{tpu_custom_call.1}
  #allocation0 [shape = 'u32[]', space=smem, size = 0x4, offset = 0x4, fixed_abs, tag = 'smem constant byte address 0x4 - core index']
  #allocation1 [shape = 'u32[144,128]{1,0:T(1,128)}', space=vmem, size = 0x12000, scoped, tag = 'internal scratch']
  #allocation2 [shape = 'f32[1,32]{1,0:T(1,128)}', space=vmem, size = 0x200, scoped, tag = 'scratch operand']
  #allocation3 [shape = 'f32[1,1]{1,0:T(1,128)S(1)}', space=vmem, size = 0x200, scoped, tag = 'scoped memory for tpu_custom_call.1']
  %s0 = inlined_call_operand.hbm [shape: f32[2,8,32], index: 0, kind: input, shape index: {}]
  %s1 = inlined_call_operand.hbm [shape: f32[2,1,8], index: 1, kind: input, shape index: {}]
  %s2 = inlined_call_operand.hbm [shape: f32[32,32], index: 2, kind: input, shape index: {}]
  %s3 = inlined_call_operand.hbm [shape: f32[1,32], index: 3, kind: input, shape index: {}]
  %s4 = inlined_call_operand.hbm [shape: f32[32,64], index: 4, kind: input, shape index: {}]
  %s5 = inlined_call_operand.hbm [shape: f32[1,64], index: 5, kind: input, shape index: {}]
  %s6 = inlined_call_operand.hbm [shape: f32[32,32], index: 6, kind: input, shape index: {}]
  %s7 = inlined_call_operand.hbm [shape: f32[1,32], index: 7, kind: input, shape index: {}]
  %s8 = inlined_call_operand.hbm [shape: f32[2,32], index: 8, kind: input, shape index: {}]
  %s9 = inlined_call_operand.hbm [shape: f32[32,64], index: 9, kind: input, shape index: {}]
  %s10 = inlined_call_operand.hbm [shape: f32[1,64], index: 10, kind: input, shape index: {}]
  %s11 = inlined_call_operand.hbm [shape: f32[64,32], index: 11, kind: input, shape index: {}]
  %s12 = inlined_call_operand.hbm [shape: f32[1,32], index: 12, kind: input, shape index: {}]
  %s13 = inlined_call_operand.hbm [shape: f32[2,32], index: 13, kind: input, shape index: {}]
  %s14 = inlined_call_operand.hbm [shape: f32[32,18], index: 14, kind: input, shape index: {}]
  %s15 = inlined_call_operand.hbm [shape: f32[1,18], index: 15, kind: input, shape index: {}]
  %s16 = inlined_call_operand.hbm [shape: f32[16,1], index: 16, kind: input, shape index: {}]
  %s17 = inlined_call_operand.<no memory space> [shape: f32[1,1], index: 17, kind: input, shape index: {}]
  %s18 = inlined_call_operand.hbm [shape: f32[2,1,128], index: 18, kind: output, shape index: {}]
  %s19 = sld [smem:[#allocation0]]
  $region173: #{tpu_custom_call.1} parent=0
    _
  %s21 = ssub.s32 1, %s19
  %s22 = scalar_select 0, %s21, %s19
  %v23 = vstv %s17
  %24 = vst [vmem:[#allocation3] sm:$0x1] %v23
  $region1: #{tpu_custom_call.1} parent=0
    #allocation4 [shape = 'u8[8192]{0}', space=vmem, size = 0x2000, scoped, tag = 'input window, operand 0']
    #allocation5 [shape = 's32[2]{0}', space=sflag, size = 0x8, scoped, tag = 'scoped memory for tpu_custom_call.1']
    #allocation6 [shape = 's32[2]{0}', space=sflag, size = 0x8, scoped, tag = 'scoped memory for tpu_custom_call.1']
    #allocation7 [shape = 'u8[1024]{0}', space=vmem, size = 0x400, scoped, tag = 'input window, operand 1']
    #allocation8 [shape = 's32[2]{0}', space=sflag, size = 0x8, scoped, tag = 'scoped memory for tpu_custom_call.1']
    #allocation9 [shape = 'u8[16384]{0}', space=vmem, size = 0x4000, scoped, tag = 'input window, operand 2, single buffered']
    #allocation10 [shape = 'u8[512]{0}', space=vmem, size = 0x400, scoped, tag = 'input window, operand 3, single buffered']
    #allocation11 [shape = 's32[1]{0}', space=sflag, size = 0x4, scoped, tag = 'scoped memory for tpu_custom_call.1']
    #allocation12 [shape = 'u8[16384]{0}', space=vmem, size = 0x4000, scoped, tag = 'input window, operand 4, single buffered']
    #allocation13 [shape = 'u8[512]{0}', space=vmem, size = 0x400, scoped, tag = 'input window, operand 5, single buffered']
    #allocation14 [shape = 's32[1]{0}', space=sflag, size = 0x4, scoped, tag = 'scoped memory for tpu_custom_call.1']
    #allocation15 [shape = 'u8[16384]{0}', space=vmem, size = 0x4000, scoped, tag = 'input window, operand 6, single buffered']
    #allocation16 [shape = 'u8[512]{0}', space=vmem, size = 0x400, scoped, tag = 'input window, operand 7, single buffered']
    #allocation17 [shape = 's32[1]{0}', space=sflag, size = 0x4, scoped, tag = 'scoped memory for tpu_custom_call.1']
    #allocation18 [shape = 'u8[1024]{0}', space=vmem, size = 0x400, scoped, tag = 'input window, operand 8, single buffered']
    #allocation19 [shape = 'u8[16384]{0}', space=vmem, size = 0x4000, scoped, tag = 'input window, operand 9, single buffered']
    #allocation20 [shape = 's32[1]{0}', space=sflag, size = 0x4, scoped, tag = 'scoped memory for tpu_custom_call.1']
    #allocation21 [shape = 'u8[512]{0}', space=vmem, size = 0x400, scoped, tag = 'input window, operand 10, single buffered']
    #allocation22 [shape = 'u8[32768]{0}', space=vmem, size = 0x8000, scoped, tag = 'input window, operand 11, single buffered']
    #allocation23 [shape = 's32[1]{0}', space=sflag, size = 0x4, scoped, tag = 'scoped memory for tpu_custom_call.1']
    #allocation24 [shape = 'u8[512]{0}', space=vmem, size = 0x400, scoped, tag = 'input window, operand 12, single buffered']
    #allocation25 [shape = 'u8[1024]{0}', space=vmem, size = 0x400, scoped, tag = 'input window, operand 13, single buffered']
    #allocation26 [shape = 's32[1]{0}', space=sflag, size = 0x4, scoped, tag = 'scoped memory for tpu_custom_call.1']
    #allocation27 [shape = 'u8[16384]{0}', space=vmem, size = 0x4000, scoped, tag = 'input window, operand 14, single buffered']
    #allocation28 [shape = 'u8[512]{0}', space=vmem, size = 0x400, scoped, tag = 'input window, operand 15, single buffered']
    #allocation29 [shape = 's32[1]{0}', space=sflag, size = 0x4, scoped, tag = 'scoped memory for tpu_custom_call.1']
    #allocation30 [shape = 'u8[8192]{0}', space=vmem, size = 0x2000, scoped, tag = 'input window, operand 16, single buffered']
    #allocation31 [shape = 'u8[1024]{0}', space=vmem, size = 0x400, scoped, tag = 'output window, operand 0']
    %25 = vsyncpa [#allocation5], 0
    %s26 = scalar_lea.sflag [#allocation5], 1
    %27 = vsyncpa %s26, 0
    %28 = vsyncpa [#allocation8], 0
    %s29 = scalar_lea.sflag [#allocation8], 1
    %30 = vsyncpa %s29, 0
    %31 = vsyncpa [#allocation11], 0
    %32 = vsyncpa [#allocation14], 0
    %33 = vsyncpa [#allocation17], 0
    %34 = vsyncpa [#allocation20], 0
    %35 = vsyncpa [#allocation23], 0
    %36 = vsyncpa [#allocation26], 0
    %37 = vsyncpa [#allocation29], 0
    %38 = vsyncpa [#allocation6], 0
    %s39 = scalar_lea.sflag [#allocation6], 1
    %40 = vsyncpa %s39, 0
    loop: start=0, step=1, limit=4
    $region2: #{tpu_custom_call.1} parent=1 // loop_pre_header
      _
    $region3: #{tpu_custom_call.1} parent=1 // loop_header
      %s42 = sphi 0, %s46
      %p43 = scmp.ge.s32.totalorder %s42, 4
      %s52 = sphi 0, %s54
      %s55 = sphi 0, %s52
      %s56 = sphi 0, %s55
      %s72 = sphi 0, %s56
      %s78 = sphi 0, %s80
      %s81 = sphi 0, %s78
      %s82 = sphi 0, %s81
      %s98 = sphi 0, %s82
      %s102 = sphi 0, %s102
      %s104 = sphi 0, %s102
      %s105 = sphi 0, %s104
      %s119 = sphi 0, %s105
      %s123 = sphi 0, %s123
      %s125 = sphi 0, %s123
      %s126 = sphi 0, %s125
      %s140 = sphi 0, %s126
      %s144 = sphi 0, %s144
      %s146 = sphi 0, %s144
      %s147 = sphi 0, %s146
      %s161 = sphi 0, %s147
      %s165 = sphi 0, %s165
      %s167 = sphi 0, %s165
      %s168 = sphi 0, %s167
      %s182 = sphi 0, %s168
      %s186 = sphi 0, %s186
      %s188 = sphi 0, %s186
      %s189 = sphi 0, %s188
      %s203 = sphi 0, %s189
      %s207 = sphi 0, %s207
      %s209 = sphi 0, %s207
      %s210 = sphi 0, %s209
      %s224 = sphi 0, %s210
      %s228 = sphi 0, %s228
      %s230 = sphi 0, %s228
      %s231 = sphi 0, %s230
      %s245 = sphi 0, %s231
      %s249 = sphi 0, %s249
      %s251 = sphi 0, %s249
      %s252 = sphi 0, %s251
      %s266 = sphi 0, %s252
      %s270 = sphi 0, %s270
      %s272 = sphi 0, %s270
      %s273 = sphi 0, %s272
      %s287 = sphi 0, %s273
      %s291 = sphi 0, %s291
      %s293 = sphi 0, %s291
      %s294 = sphi 0, %s293
      %s308 = sphi 0, %s294
      %s312 = sphi 0, %s312
      %s314 = sphi 0, %s312
      %s315 = sphi 0, %s314
      %s329 = sphi 0, %s315
      %s333 = sphi 0, %s333
      %s335 = sphi 0, %s333
      %s336 = sphi 0, %s335
      %s350 = sphi 0, %s336
      %s354 = sphi 0, %s354
      %s356 = sphi 0, %s354
      %s357 = sphi 0, %s356
      %s371 = sphi 0, %s357
      %s375 = sphi 0, %s375
      %s377 = sphi 0, %s375
      %s378 = sphi 0, %s377
      %s392 = sphi 0, %s378
      %s396 = sphi 0, %s396
      %s398 = sphi 0, %s396
      %s399 = sphi 0, %s398
      %s413 = sphi 0, %s399
      %s417 = sphi 0, %s417
      %s419 = sphi 0, %s417
      %s420 = sphi 0, %s419
      %s434 = sphi 0, %s420
      %s440 = sphi 0, %s442
      %s443 = sphi 0, %s440
      %s444 = sphi 0, %s443
      %s460 = sphi 0, %s444
    $region4: #{tpu_custom_call.1} parent=1 // loop_header_branch
      %45 = sbr.rel (%p43) target = $region8
    $region5: #{tpu_custom_call.1} parent=1 // loop_body
      %s47 = ssub.s32 %s42, 1
      %s48 = ssub.s32 %s42, 2
      %s49 = sadd.s32 %s42, 1
      %s50 = ssub.s32 %s42, %s49
      %p51 = scmp.eq.s32.totalorder %s50, 0
      %s53 = sadd.s32 %s52, 1
      %s54 = scalar_select %p51, %s52, %s53
      %p57 = pneg %p51
      %p58 = scmp.eq.s32.totalorder %s42, 1
      %p59 = por %p57, %p58
      %p60 = scmp.ne.s32.totalorder %s52, %s55
      %p61 = scmp.eq.s32.totalorder %s42, 0
      %p62 = por %p60, %p61
      %p63 = scmp.ne.s32.totalorder %s52, %s55
      %p64 = scmp.eq.s32.totalorder %s47, 1
      %p65 = por %p63, %p64
      %p66 = scmp.ne.s32.totalorder %s55, %s56
      %p67 = scmp.eq.s32.totalorder %s47, 0
      %p68 = por %p66, %p67
      %p69 = scmp.ne.s32.totalorder %s55, %s56
      %p70 = scmp.eq.s32.totalorder %s48, 1
      %p71 = por %p69, %p70
      %p73 = scmp.ne.s32.totalorder %s56, %s72
      %p74 = scmp.eq.s32.totalorder %s48, 0
      %p75 = por %p73, %p74
      %s76 = ssub.s32 %s42, %s49
      %p77 = scmp.eq.s32.totalorder %s76, 0
      %s79 = sadd.s32 %s78, 1
      %s80 = scalar_select %p77, %s78, %s79
      %p83 = pneg %p77
      %p84 = scmp.eq.s32.totalorder %s42, 1
      %p85 = por %p83, %p84
      %p86 = scmp.ne.s32.totalorder %s78, %s81
      %p87 = scmp.eq.s32.totalorder %s42, 0
      %p88 = por %p86, %p87
      %p89 = scmp.ne.s32.totalorder %s78, %s81
      %p90 = scmp.eq.s32.totalorder %s47, 1
      %p91 = por %p89, %p90
      %p92 = scmp.ne.s32.totalorder %s81, %s82
      %p93 = scmp.eq.s32.totalorder %s47, 0
      %p94 = por %p92, %p93
      %p95 = scmp.ne.s32.totalorder %s81, %s82
      %p96 = scmp.eq.s32.totalorder %s48, 1
      %p97 = por %p95, %p96
      %p99 = scmp.ne.s32.totalorder %s82, %s98
      %p100 = scmp.eq.s32.totalorder %s48, 0
      %p101 = por %p99, %p100
      %s103 = sadd.s32 %s102, 1
      %p106 = scmp.eq.s32.totalorder %s42, 1
      %p107 = scmp.ne.s32.totalorder %s102, %s104
      %p108 = scmp.eq.s32.totalorder %s42, 0
      %p109 = por %p107, %p108
      %p110 = scmp.ne.s32.totalorder %s102, %s104
      %p111 = scmp.eq.s32.totalorder %s47, 1
      %p112 = por %p110, %p111
      %p113 = scmp.ne.s32.totalorder %s104, %s105
      %p114 = scmp.eq.s32.totalorder %s47, 0
      %p115 = por %p113, %p114
      %p116 = scmp.ne.s32.totalorder %s104, %s105
      %p117 = scmp.eq.s32.totalorder %s48, 1
      %p118 = por %p116, %p117
      %p120 = scmp.ne.s32.totalorder %s105, %s119
      %p121 = scmp.eq.s32.totalorder %s48, 0
      %p122 = por %p120, %p121
      %s124 = sadd.s32 %s123, 1
      %p127 = scmp.eq.s32.totalorder %s42, 1
      %p128 = scmp.ne.s32.totalorder %s123, %s125
      %p129 = scmp.eq.s32.totalorder %s42, 0
      %p130 = por %p128, %p129
      %p131 = scmp.ne.s32.totalorder %s123, %s125
      %p132 = scmp.eq.s32.totalorder %s47, 1
      %p133 = por %p131, %p132
      %p134 = scmp.ne.s32.totalorder %s125, %s126
      %p135 = scmp.eq.s32.totalorder %s47, 0
      %p136 = por %p134, %p135
      %p137 = scmp.ne.s32.totalorder %s125, %s126
      %p138 = scmp.eq.s32.totalorder %s48, 1
      %p139 = por %p137, %p138
      %p141 = scmp.ne.s32.totalorder %s126, %s140
      %p142 = scmp.eq.s32.totalorder %s48, 0
      %p143 = por %p141, %p142
      %s145 = sadd.s32 %s144, 1
      %p148 = scmp.eq.s32.totalorder %s42, 1
      %p149 = scmp.ne.s32.totalorder %s144, %s146
      %p150 = scmp.eq.s32.totalorder %s42, 0
      %p151 = por %p149, %p150
      %p152 = scmp.ne.s32.totalorder %s144, %s146
      %p153 = scmp.eq.s32.totalorder %s47, 1
      %p154 = por %p152, %p153
      %p155 = scmp.ne.s32.totalorder %s146, %s147
      %p156 = scmp.eq.s32.totalorder %s47, 0
      %p157 = por %p155, %p156
      %p158 = scmp.ne.s32.totalorder %s146, %s147
      %p159 = scmp.eq.s32.totalorder %s48, 1
      %p160 = por %p158, %p159
      %p162 = scmp.ne.s32.totalorder %s147, %s161
      %p163 = scmp.eq.s32.totalorder %s48, 0
      %p164 = por %p162, %p163
      %s166 = sadd.s32 %s165, 1
      %p169 = scmp.eq.s32.totalorder %s42, 1
      %p170 = scmp.ne.s32.totalorder %s165, %s167
      %p171 = scmp.eq.s32.totalorder %s42, 0
      %p172 = por %p170, %p171
      %p173 = scmp.ne.s32.totalorder %s165, %s167
      %p174 = scmp.eq.s32.totalorder %s47, 1
      %p175 = por %p173, %p174
      %p176 = scmp.ne.s32.totalorder %s167, %s168
      %p177 = scmp.eq.s32.totalorder %s47, 0
      %p178 = por %p176, %p177
      %p179 = scmp.ne.s32.totalorder %s167, %s168
      %p180 = scmp.eq.s32.totalorder %s48, 1
      %p181 = por %p179, %p180
      %p183 = scmp.ne.s32.totalorder %s168, %s182
      %p184 = scmp.eq.s32.totalorder %s48, 0
      %p185 = por %p183, %p184
      %s187 = sadd.s32 %s186, 1
      %p190 = scmp.eq.s32.totalorder %s42, 1
      %p191 = scmp.ne.s32.totalorder %s186, %s188
      %p192 = scmp.eq.s32.totalorder %s42, 0
      %p193 = por %p191, %p192
      %p194 = scmp.ne.s32.totalorder %s186, %s188
      %p195 = scmp.eq.s32.totalorder %s47, 1
      %p196 = por %p194, %p195
      %p197 = scmp.ne.s32.totalorder %s188, %s189
      %p198 = scmp.eq.s32.totalorder %s47, 0
      %p199 = por %p197, %p198
      %p200 = scmp.ne.s32.totalorder %s188, %s189
      %p201 = scmp.eq.s32.totalorder %s48, 1
      %p202 = por %p200, %p201
      %p204 = scmp.ne.s32.totalorder %s189, %s203
      %p205 = scmp.eq.s32.totalorder %s48, 0
      %p206 = por %p204, %p205
      %s208 = sadd.s32 %s207, 1
      %p211 = scmp.eq.s32.totalorder %s42, 1
      %p212 = scmp.ne.s32.totalorder %s207, %s209
      %p213 = scmp.eq.s32.totalorder %s42, 0
      %p214 = por %p212, %p213
      %p215 = scmp.ne.s32.totalorder %s207, %s209
      %p216 = scmp.eq.s32.totalorder %s47, 1
      %p217 = por %p215, %p216
      %p218 = scmp.ne.s32.totalorder %s209, %s210
      %p219 = scmp.eq.s32.totalorder %s47, 0
      %p220 = por %p218, %p219
      %p221 = scmp.ne.s32.totalorder %s209, %s210
      %p222 = scmp.eq.s32.totalorder %s48, 1
      %p223 = por %p221, %p222
      %p225 = scmp.ne.s32.totalorder %s210, %s224
      %p226 = scmp.eq.s32.totalorder %s48, 0
      %p227 = por %p225, %p226
      %s229 = sadd.s32 %s228, 1
      %p232 = scmp.eq.s32.totalorder %s42, 1
      %p233 = scmp.ne.s32.totalorder %s228, %s230
      %p234 = scmp.eq.s32.totalorder %s42, 0
      %p235 = por %p233, %p234
      %p236 = scmp.ne.s32.totalorder %s228, %s230
      %p237 = scmp.eq.s32.totalorder %s47, 1
      %p238 = por %p236, %p237
      %p239 = scmp.ne.s32.totalorder %s230, %s231
      %p240 = scmp.eq.s32.totalorder %s47, 0
      %p241 = por %p239, %p240
      %p242 = scmp.ne.s32.totalorder %s230, %s231
      %p243 = scmp.eq.s32.totalorder %s48, 1
      %p244 = por %p242, %p243
      %p246 = scmp.ne.s32.totalorder %s231, %s245
      %p247 = scmp.eq.s32.totalorder %s48, 0
      %p248 = por %p246, %p247
      %s250 = sadd.s32 %s249, 1
      %p253 = scmp.eq.s32.totalorder %s42, 1
      %p254 = scmp.ne.s32.totalorder %s249, %s251
      %p255 = scmp.eq.s32.totalorder %s42, 0
      %p256 = por %p254, %p255
      %p257 = scmp.ne.s32.totalorder %s249, %s251
      %p258 = scmp.eq.s32.totalorder %s47, 1
      %p259 = por %p257, %p258
      %p260 = scmp.ne.s32.totalorder %s251, %s252
      %p261 = scmp.eq.s32.totalorder %s47, 0
      %p262 = por %p260, %p261
      %p263 = scmp.ne.s32.totalorder %s251, %s252
      %p264 = scmp.eq.s32.totalorder %s48, 1
      %p265 = por %p263, %p264
      %p267 = scmp.ne.s32.totalorder %s252, %s266
      %p268 = scmp.eq.s32.totalorder %s48, 0
      %p269 = por %p267, %p268
      %s271 = sadd.s32 %s270, 1
      %p274 = scmp.eq.s32.totalorder %s42, 1
      %p275 = scmp.ne.s32.totalorder %s270, %s272
      %p276 = scmp.eq.s32.totalorder %s42, 0
      %p277 = por %p275, %p276
      %p278 = scmp.ne.s32.totalorder %s270, %s272
      %p279 = scmp.eq.s32.totalorder %s47, 1
      %p280 = por %p278, %p279
      %p281 = scmp.ne.s32.totalorder %s272, %s273
      %p282 = scmp.eq.s32.totalorder %s47, 0
      %p283 = por %p281, %p282
      %p284 = scmp.ne.s32.totalorder %s272, %s273
      %p285 = scmp.eq.s32.totalorder %s48, 1
      %p286 = por %p284, %p285
      %p288 = scmp.ne.s32.totalorder %s273, %s287
      %p289 = scmp.eq.s32.totalorder %s48, 0
      %p290 = por %p288, %p289
      %s292 = sadd.s32 %s291, 1
      %p295 = scmp.eq.s32.totalorder %s42, 1
      %p296 = scmp.ne.s32.totalorder %s291, %s293
      %p297 = scmp.eq.s32.totalorder %s42, 0
      %p298 = por %p296, %p297
      %p299 = scmp.ne.s32.totalorder %s291, %s293
      %p300 = scmp.eq.s32.totalorder %s47, 1
      %p301 = por %p299, %p300
      %p302 = scmp.ne.s32.totalorder %s293, %s294
      %p303 = scmp.eq.s32.totalorder %s47, 0
      %p304 = por %p302, %p303
      %p305 = scmp.ne.s32.totalorder %s293, %s294
      %p306 = scmp.eq.s32.totalorder %s48, 1
      %p307 = por %p305, %p306
      %p309 = scmp.ne.s32.totalorder %s294, %s308
      %p310 = scmp.eq.s32.totalorder %s48, 0
      %p311 = por %p309, %p310
      %s313 = sadd.s32 %s312, 1
      %p316 = scmp.eq.s32.totalorder %s42, 1
      %p317 = scmp.ne.s32.totalorder %s312, %s314
      %p318 = scmp.eq.s32.totalorder %s42, 0
      %p319 = por %p317, %p318
      %p320 = scmp.ne.s32.totalorder %s312, %s314
      %p321 = scmp.eq.s32.totalorder %s47, 1
      %p322 = por %p320, %p321
      %p323 = scmp.ne.s32.totalorder %s314, %s315
      %p324 = scmp.eq.s32.totalorder %s47, 0
      %p325 = por %p323, %p324
      %p326 = scmp.ne.s32.totalorder %s314, %s315
      %p327 = scmp.eq.s32.totalorder %s48, 1
      %p328 = por %p326, %p327
      %p330 = scmp.ne.s32.totalorder %s315, %s329
      %p331 = scmp.eq.s32.totalorder %s48, 0
      %p332 = por %p330, %p331
      %s334 = sadd.s32 %s333, 1
      %p337 = scmp.eq.s32.totalorder %s42, 1
      %p338 = scmp.ne.s32.totalorder %s333, %s335
      %p339 = scmp.eq.s32.totalorder %s42, 0
      %p340 = por %p338, %p339
      %p341 = scmp.ne.s32.totalorder %s333, %s335
      %p342 = scmp.eq.s32.totalorder %s47, 1
      %p343 = por %p341, %p342
      %p344 = scmp.ne.s32.totalorder %s335, %s336
      %p345 = scmp.eq.s32.totalorder %s47, 0
      %p346 = por %p344, %p345
      %p347 = scmp.ne.s32.totalorder %s335, %s336
      %p348 = scmp.eq.s32.totalorder %s48, 1
      %p349 = por %p347, %p348
      %p351 = scmp.ne.s32.totalorder %s336, %s350
      %p352 = scmp.eq.s32.totalorder %s48, 0
      %p353 = por %p351, %p352
      %s355 = sadd.s32 %s354, 1
      %p358 = scmp.eq.s32.totalorder %s42, 1
      %p359 = scmp.ne.s32.totalorder %s354, %s356
      %p360 = scmp.eq.s32.totalorder %s42, 0
      %p361 = por %p359, %p360
      %p362 = scmp.ne.s32.totalorder %s354, %s356
      %p363 = scmp.eq.s32.totalorder %s47, 1
      %p364 = por %p362, %p363
      %p365 = scmp.ne.s32.totalorder %s356, %s357
      %p366 = scmp.eq.s32.totalorder %s47, 0
      %p367 = por %p365, %p366
      %p368 = scmp.ne.s32.totalorder %s356, %s357
      %p369 = scmp.eq.s32.totalorder %s48, 1
      %p370 = por %p368, %p369
      %p372 = scmp.ne.s32.totalorder %s357, %s371
      %p373 = scmp.eq.s32.totalorder %s48, 0
      %p374 = por %p372, %p373
      %s376 = sadd.s32 %s375, 1
      %p379 = scmp.eq.s32.totalorder %s42, 1
      %p380 = scmp.ne.s32.totalorder %s375, %s377
      %p381 = scmp.eq.s32.totalorder %s42, 0
      %p382 = por %p380, %p381
      %p383 = scmp.ne.s32.totalorder %s375, %s377
      %p384 = scmp.eq.s32.totalorder %s47, 1
      %p385 = por %p383, %p384
      %p386 = scmp.ne.s32.totalorder %s377, %s378
      %p387 = scmp.eq.s32.totalorder %s47, 0
      %p388 = por %p386, %p387
      %p389 = scmp.ne.s32.totalorder %s377, %s378
      %p390 = scmp.eq.s32.totalorder %s48, 1
      %p391 = por %p389, %p390
      %p393 = scmp.ne.s32.totalorder %s378, %s392
      %p394 = scmp.eq.s32.totalorder %s48, 0
      %p395 = por %p393, %p394
      %s397 = sadd.s32 %s396, 1
      %p400 = scmp.eq.s32.totalorder %s42, 1
      %p401 = scmp.ne.s32.totalorder %s396, %s398
      %p402 = scmp.eq.s32.totalorder %s42, 0
      %p403 = por %p401, %p402
      %p404 = scmp.ne.s32.totalorder %s396, %s398
      %p405 = scmp.eq.s32.totalorder %s47, 1
      %p406 = por %p404, %p405
      %p407 = scmp.ne.s32.totalorder %s398, %s399
      %p408 = scmp.eq.s32.totalorder %s47, 0
      %p409 = por %p407, %p408
      %p410 = scmp.ne.s32.totalorder %s398, %s399
      %p411 = scmp.eq.s32.totalorder %s48, 1
      %p412 = por %p410, %p411
      %p414 = scmp.ne.s32.totalorder %s399, %s413
      %p415 = scmp.eq.s32.totalorder %s48, 0
      %p416 = por %p414, %p415
      %s418 = sadd.s32 %s417, 1
      %p421 = scmp.eq.s32.totalorder %s42, 1
      %p422 = scmp.ne.s32.totalorder %s417, %s419
      %p423 = scmp.eq.s32.totalorder %s42, 0
      %p424 = por %p422, %p423
      %p425 = scmp.ne.s32.totalorder %s417, %s419
      %p426 = scmp.eq.s32.totalorder %s47, 1
      %p427 = por %p425, %p426
      %p428 = scmp.ne.s32.totalorder %s419, %s420
      %p429 = scmp.eq.s32.totalorder %s47, 0
      %p430 = por %p428, %p429
      %p431 = scmp.ne.s32.totalorder %s419, %s420
      %p432 = scmp.eq.s32.totalorder %s48, 1
      %p433 = por %p431, %p432
      %p435 = scmp.ne.s32.totalorder %s420, %s434
      %p436 = scmp.eq.s32.totalorder %s48, 0
      %p437 = por %p435, %p436
      %s438 = ssub.s32 %s42, %s49
      %p439 = scmp.eq.s32.totalorder %s438, 0
      %s441 = sadd.s32 %s440, 1
      %s442 = scalar_select %p439, %s440, %s441
      %p445 = pneg %p439
      %p446 = scmp.eq.s32.totalorder %s42, 1
      %p447 = por %p445, %p446
      %p448 = scmp.ne.s32.totalorder %s440, %s443
      %p449 = scmp.eq.s32.totalorder %s42, 0
      %p450 = por %p448, %p449
      %p451 = scmp.ne.s32.totalorder %s440, %s443
      %p452 = scmp.eq.s32.totalorder %s47, 1
      %p453 = por %p451, %p452
      %p454 = scmp.ne.s32.totalorder %s443, %s444
      %p455 = scmp.eq.s32.totalorder %s47, 0
      %p456 = por %p454, %p455
      %p457 = scmp.ne.s32.totalorder %s443, %s444
      %p458 = scmp.eq.s32.totalorder %s48, 1
      %p459 = por %p457, %p458
      %p461 = scmp.ne.s32.totalorder %s444, %s460
      %p462 = scmp.eq.s32.totalorder %s48, 0
      %p463 = por %p461, %p462
      %p464 = scmp.le.s32.totalorder 1, %s42
      %p465 = scmp.lt.s32.totalorder %s42, 3
      %p466 = pnand %p464, %p465
      %p467 = pneg %p466
      // Predicated region
      $region9: #{tpu_custom_call.1} parent=5 // pred_check
        _
      $region10: #{tpu_custom_call.1} parent=5 // pred_check_branch
        %469 = sbr.rel (%p466) target = $region12
      $region11: #{tpu_custom_call.1} parent=5 // pred_region
        %s470 = ssub.s32 %s42, 1
        // Predicated region
        $region13: #{tpu_custom_call.1} parent=11 // pred_check
          %p471 = pneg %p115
        $region14: #{tpu_custom_call.1} parent=11 // pred_check_branch
          %473 = sbr.rel (%p471) target = $region16
        $region15: #{tpu_custom_call.1} parent=11 // pred_region
          %s475 = ssub.s32 512, 512
          %476 = vsyncadd [#allocation8], %s475
          %s477 = sshll.u32 [#allocation9], 4
          %s478 = int_to_ptr.vmem [resolvable:$true] %s477
          %483 = dma.hbm_to_vmem [thread:$0]  %s2, 512, %s478, [#allocation8], 128, 128, 8
        $region16: #{tpu_custom_call.1} parent=11 // pred_fallthru
          _
        // Predicated region
        $region17: #{tpu_custom_call.1} parent=11 // pred_check
          %p484 = pneg %p136
        $region18: #{tpu_custom_call.1} parent=11 // pred_check_branch
          %486 = sbr.rel (%p484) target = $region20
        $region19: #{tpu_custom_call.1} parent=11 // pred_region
          %s488 = ssub.s32 16, 16
          %489 = vsyncadd [#allocation11], %s488
          %s491 = sshll.u32 [#allocation10], 4
          %s492 = int_to_ptr.vmem [resolvable:$true] %s491
          %494 = dma.hbm_to_vmem [thread:$0]  %s3, 16, %s492, [#allocation11]
        $region20: #{tpu_custom_call.1} parent=11 // pred_fallthru
          _
        // Predicated region
        $region21: #{tpu_custom_call.1} parent=11 // pred_check
          %p495 = pneg %p157
        $region22: #{tpu_custom_call.1} parent=11 // pred_check_branch
          %497 = sbr.rel (%p495) target = $region24
        $region23: #{tpu_custom_call.1} parent=11 // pred_region
          %s499 = ssub.s32 512, 512
          %500 = vsyncadd [#allocation11], %s499
          %s501 = sshll.u32 [#allocation12], 4
          %s502 = int_to_ptr.vmem [resolvable:$true] %s501
          %507 = dma.hbm_to_vmem [thread:$0]  %s4, 512, %s502, [#allocation11], 128, 128, 8
        $region24: #{tpu_custom_call.1} parent=11 // pred_fallthru
          _
        // Predicated region
        $region25: #{tpu_custom_call.1} parent=11 // pred_check
          %p508 = pneg %p178
        $region26: #{tpu_custom_call.1} parent=11 // pred_check_branch
          %510 = sbr.rel (%p508) target = $region28
        $region27: #{tpu_custom_call.1} parent=11 // pred_region
          %s512 = ssub.s32 16, 16
          %513 = vsyncadd [#allocation14], %s512
          %s515 = sshll.u32 [#allocation13], 4
          %s516 = int_to_ptr.vmem [resolvable:$true] %s515
          %518 = dma.hbm_to_vmem [thread:$0]  %s5, 16, %s516, [#allocation14]
        $region28: #{tpu_custom_call.1} parent=11 // pred_fallthru
          _
        // Predicated region
        $region29: #{tpu_custom_call.1} parent=11 // pred_check
          %p519 = pneg %p199
        $region30: #{tpu_custom_call.1} parent=11 // pred_check_branch
          %521 = sbr.rel (%p519) target = $region32
        $region31: #{tpu_custom_call.1} parent=11 // pred_region
          %s523 = ssub.s32 512, 512
          %524 = vsyncadd [#allocation14], %s523
          %s525 = sshll.u32 [#allocation15], 4
          %s526 = int_to_ptr.vmem [resolvable:$true] %s525
          %531 = dma.hbm_to_vmem [thread:$0]  %s6, 512, %s526, [#allocation14], 128, 128, 8
        $region32: #{tpu_custom_call.1} parent=11 // pred_fallthru
          _
        // Predicated region
        $region33: #{tpu_custom_call.1} parent=11 // pred_check
          %p532 = pneg %p220
        $region34: #{tpu_custom_call.1} parent=11 // pred_check_branch
          %534 = sbr.rel (%p532) target = $region36
        $region35: #{tpu_custom_call.1} parent=11 // pred_region
          %s536 = ssub.s32 16, 16
          %537 = vsyncadd [#allocation17], %s536
          %s539 = sshll.u32 [#allocation16], 4
          %s540 = int_to_ptr.vmem [resolvable:$true] %s539
          %542 = dma.hbm_to_vmem [thread:$0]  %s7, 16, %s540, [#allocation17]
        $region36: #{tpu_custom_call.1} parent=11 // pred_fallthru
          _
        // Predicated region
        $region37: #{tpu_custom_call.1} parent=11 // pred_check
          %p543 = pneg %p241
        $region38: #{tpu_custom_call.1} parent=11 // pred_check_branch
          %545 = sbr.rel (%p543) target = $region40
        $region39: #{tpu_custom_call.1} parent=11 // pred_region
          %s547 = ssub.s32 32, 32
          %548 = vsyncadd [#allocation17], %s547
          %s550 = sshll.u32 [#allocation18], 4
          %s551 = int_to_ptr.vmem [resolvable:$true] %s550
          %553 = dma.hbm_to_vmem [thread:$0]  %s8, 32, %s551, [#allocation17]
        $region40: #{tpu_custom_call.1} parent=11 // pred_fallthru
          _
        // Predicated region
        $region41: #{tpu_custom_call.1} parent=11 // pred_check
          %p554 = pneg %p262
        $region42: #{tpu_custom_call.1} parent=11 // pred_check_branch
          %556 = sbr.rel (%p554) target = $region44
        $region43: #{tpu_custom_call.1} parent=11 // pred_region
          %s558 = ssub.s32 512, 512
          %559 = vsyncadd [#allocation20], %s558
          %s560 = sshll.u32 [#allocation19], 4
          %s561 = int_to_ptr.vmem [resolvable:$true] %s560
          %566 = dma.hbm_to_vmem [thread:$0]  %s9, 512, %s561, [#allocation20], 128, 128, 8
        $region44: #{tpu_custom_call.1} parent=11 // pred_fallthru
          _
        // Predicated region
        $region45: #{tpu_custom_call.1} parent=11 // pred_check
          %p567 = pneg %p283
        $region46: #{tpu_custom_call.1} parent=11 // pred_check_branch
          %569 = sbr.rel (%p567) target = $region48
        $region47: #{tpu_custom_call.1} parent=11 // pred_region
          %s571 = ssub.s32 16, 16
          %572 = vsyncadd [#allocation20], %s571
          %s574 = sshll.u32 [#allocation21], 4
          %s575 = int_to_ptr.vmem [resolvable:$true] %s574
          %577 = dma.hbm_to_vmem [thread:$0]  %s10, 16, %s575, [#allocation20]
        $region48: #{tpu_custom_call.1} parent=11 // pred_fallthru
          _
        // Predicated region
        $region49: #{tpu_custom_call.1} parent=11 // pred_check
          %p578 = pneg %p304
        $region50: #{tpu_custom_call.1} parent=11 // pred_check_branch
          %580 = sbr.rel (%p578) target = $region52
        $region51: #{tpu_custom_call.1} parent=11 // pred_region
          %s582 = ssub.s32 1024, 1024
          %583 = vsyncadd [#allocation23], %s582
          %s584 = sshll.u32 [#allocation22], 4
          %s585 = int_to_ptr.vmem [resolvable:$true] %s584
          %590 = dma.hbm_to_vmem [thread:$0]  %s11, 1024, %s585, [#allocation23], 128, 128, 8
        $region52: #{tpu_custom_call.1} parent=11 // pred_fallthru
          _
        // Predicated region
        $region53: #{tpu_custom_call.1} parent=11 // pred_check
          %p591 = pneg %p325
        $region54: #{tpu_custom_call.1} parent=11 // pred_check_branch
          %593 = sbr.rel (%p591) target = $region56
        $region55: #{tpu_custom_call.1} parent=11 // pred_region
          %s595 = ssub.s32 16, 16
          %596 = vsyncadd [#allocation23], %s595
          %s598 = sshll.u32 [#allocation24], 4
          %s599 = int_to_ptr.vmem [resolvable:$true] %s598
          %601 = dma.hbm_to_vmem [thread:$0]  %s12, 16, %s599, [#allocation23]
        $region56: #{tpu_custom_call.1} parent=11 // pred_fallthru
          _
        // Predicated region
        $region57: #{tpu_custom_call.1} parent=11 // pred_check
          %p602 = pneg %p346
        $region58: #{tpu_custom_call.1} parent=11 // pred_check_branch
          %604 = sbr.rel (%p602) target = $region60
        $region59: #{tpu_custom_call.1} parent=11 // pred_region
          %s606 = ssub.s32 32, 32
          %607 = vsyncadd [#allocation26], %s606
          %s609 = sshll.u32 [#allocation25], 4
          %s610 = int_to_ptr.vmem [resolvable:$true] %s609
          %612 = dma.hbm_to_vmem [thread:$0]  %s13, 32, %s610, [#allocation26]
        $region60: #{tpu_custom_call.1} parent=11 // pred_fallthru
          _
        // Predicated region
        $region61: #{tpu_custom_call.1} parent=11 // pred_check
          %p613 = pneg %p367
        $region62: #{tpu_custom_call.1} parent=11 // pred_check_branch
          %615 = sbr.rel (%p613) target = $region64
        $region63: #{tpu_custom_call.1} parent=11 // pred_region
          %s617 = ssub.s32 512, 512
          %618 = vsyncadd [#allocation26], %s617
          %s619 = sshll.u32 [#allocation27], 4
          %s620 = int_to_ptr.vmem [resolvable:$true] %s619
          %625 = dma.hbm_to_vmem [thread:$0]  %s14, 512, %s620, [#allocation26], 128, 128, 8
        $region64: #{tpu_custom_call.1} parent=11 // pred_fallthru
          _
        // Predicated region
        $region65: #{tpu_custom_call.1} parent=11 // pred_check
          %p626 = pneg %p388
        $region66: #{tpu_custom_call.1} parent=11 // pred_check_branch
          %628 = sbr.rel (%p626) target = $region68
        $region67: #{tpu_custom_call.1} parent=11 // pred_region
          %s630 = ssub.s32 16, 16
          %631 = vsyncadd [#allocation29], %s630
          %s633 = sshll.u32 [#allocation28], 4
          %s634 = int_to_ptr.vmem [resolvable:$true] %s633
          %636 = dma.hbm_to_vmem [thread:$0]  %s15, 16, %s634, [#allocation29]
        $region68: #{tpu_custom_call.1} parent=11 // pred_fallthru
          _
        // Predicated region
        $region69: #{tpu_custom_call.1} parent=11 // pred_check
          %p637 = pneg %p409
        $region70: #{tpu_custom_call.1} parent=11 // pred_check_branch
          %639 = sbr.rel (%p637) target = $region72
        $region71: #{tpu_custom_call.1} parent=11 // pred_region
          %s641 = ssub.s32 256, 256
          %642 = vsyncadd [#allocation29], %s641
          %s643 = sshll.u32 [#allocation30], 4
          %s644 = int_to_ptr.vmem [resolvable:$true] %s643
          %649 = dma.hbm_to_vmem [thread:$0]  %s16, 256, %s644, [#allocation29], 128, 128, 8
        $region72: #{tpu_custom_call.1} parent=11 // pred_fallthru
          _
        // Predicated region
        $region73: #{tpu_custom_call.1} parent=11 // pred_check
          %p650 = pneg %p430
        $region74: #{tpu_custom_call.1} parent=11 // pred_check_branch
          %652 = sbr.rel (%p650) target = $region76
        $region75: #{tpu_custom_call.1} parent=11 // pred_region
          _
        $region76: #{tpu_custom_call.1} parent=11 // pred_fallthru
          _
      $region12: #{tpu_custom_call.1} parent=5 // pred_fallthru
        _
      %p653 = scmp.lt.s32.totalorder %s42, 2
      // Predicated region
      $region77: #{tpu_custom_call.1} parent=5 // pred_check
        %p654 = pneg %p653
      $region78: #{tpu_custom_call.1} parent=5 // pred_check_branch
        %656 = sbr.rel (%p654) target = $region80
      $region79: #{tpu_custom_call.1} parent=5 // pred_region
        // Predicated region
        $region81: #{tpu_custom_call.1} parent=79 // pred_check
          %p657 = pneg %p62
        $region82: #{tpu_custom_call.1} parent=79 // pred_check_branch
          %659 = sbr.rel (%p657) target = $region84
        $region83: #{tpu_custom_call.1} parent=79 // pred_region
          %s660 = sand.u32 %s52, 1
          %s661 = scalar_lea.sflag [#allocation5], %s660
          %s662 = sand.u32 %s52, 1
          %s663 = smul.addr %s662, 8
          %s664 = scalar_lea.vmem [#allocation4], %s663
          %s666 = ssub.s32 128, 128
          %667 = vsyncadd %s661, %s666
          %s668 = smul.addr %s42, 128
          %s669 = scalar_lea.hbm %s0, %s668
          %s671 = sshll.u32 %s664, 4
          %s672 = int_to_ptr.vmem [resolvable:$true] %s671
          %674 = dma.hbm_to_vmem [thread:$0]  %s669, 128, %s672, %s661
        $region84: #{tpu_custom_call.1} parent=79 // pred_fallthru
          _
        // Predicated region
        $region85: #{tpu_custom_call.1} parent=79 // pred_check
          %p675 = pneg %p88
        $region86: #{tpu_custom_call.1} parent=79 // pred_check_branch
          %677 = sbr.rel (%p675) target = $region88
        $region87: #{tpu_custom_call.1} parent=79 // pred_region
          %s678 = sand.u32 %s42, 1
          %s679 = scalar_lea.sflag [#allocation8], %s678
          %s680 = sand.u32 %s78, 1
          %s681 = scalar_lea.vmem [#allocation7], %s680
          %s683 = ssub.s32 16, 16
          %684 = vsyncadd %s679, %s683
          %s685 = smul.addr %s42, 16
          %s686 = scalar_lea.hbm %s1, %s685
          %s688 = sshll.u32 %s681, 4
          %s689 = int_to_ptr.vmem [resolvable:$true] %s688
          %691 = dma.hbm_to_vmem [thread:$0]  %s686, 16, %s689, %s679
        $region88: #{tpu_custom_call.1} parent=79 // pred_fallthru
          _
      $region80: #{tpu_custom_call.1} parent=5 // pred_fallthru
        _
      %p692 = scmp.le.s32.totalorder 1, %s42
      %p693 = scmp.lt.s32.totalorder %s42, 3
      %p694 = pnand %p692, %p693
      %p695 = pneg %p694
      // Predicated region
      $region89: #{tpu_custom_call.1} parent=5 // pred_check
        _
      $region90: #{tpu_custom_call.1} parent=5 // pred_check_branch
        %697 = sbr.rel (%p694) target = $region92
      $region91: #{tpu_custom_call.1} parent=5 // pred_region
        %s698 = ssub.s32 %s42, 1
        %s699 = sand.u32 %s55, 1
        %s700 = scalar_lea.sflag [#allocation5], %s699
        %s701 = sand.u32 %s55, 1
        %s702 = smul.addr %s701, 8
        %s703 = scalar_lea.vmem [#allocation4], %s702
        // Predicated region
        $region93: #{tpu_custom_call.1} parent=91 // pred_check
          %p704 = pneg %p68
        $region94: #{tpu_custom_call.1} parent=91 // pred_check_branch
          %706 = sbr.rel (%p704) target = $region96
        $region95: #{tpu_custom_call.1} parent=91 // pred_region
          %707 = dma.done %s700, 128
        $region96: #{tpu_custom_call.1} parent=91 // pred_fallthru
          _
        %s708 = sand.u32 %s47, 1
        %s709 = scalar_lea.sflag [#allocation8], %s708
        %s710 = sand.u32 %s81, 1
        %s711 = scalar_lea.vmem [#allocation7], %s710
        // Predicated region
        $region97: #{tpu_custom_call.1} parent=91 // pred_check
          %p712 = pneg %p94
        $region98: #{tpu_custom_call.1} parent=91 // pred_check_branch
          %714 = sbr.rel (%p712) target = $region100
        $region99: #{tpu_custom_call.1} parent=91 // pred_region
          %715 = dma.done %s709, 16
        $region100: #{tpu_custom_call.1} parent=91 // pred_fallthru
          _
        // Predicated region
        $region101: #{tpu_custom_call.1} parent=91 // pred_check
          %p716 = pneg %p115
        $region102: #{tpu_custom_call.1} parent=91 // pred_check_branch
          %718 = sbr.rel (%p716) target = $region104
        $region103: #{tpu_custom_call.1} parent=91 // pred_region
          %719 = dma.done [#allocation8], 512
        $region104: #{tpu_custom_call.1} parent=91 // pred_fallthru
          _
        // Predicated region
        $region105: #{tpu_custom_call.1} parent=91 // pred_check
          %p720 = pneg %p136
        $region106: #{tpu_custom_call.1} parent=91 // pred_check_branch
          %722 = sbr.rel (%p720) target = $region108
        $region107: #{tpu_custom_call.1} parent=91 // pred_region
          %723 = dma.done [#allocation11], 16
        $region108: #{tpu_custom_call.1} parent=91 // pred_fallthru
          _
        // Predicated region
        $region109: #{tpu_custom_call.1} parent=91 // pred_check
          %p724 = pneg %p157
        $region110: #{tpu_custom_call.1} parent=91 // pred_check_branch
          %726 = sbr.rel (%p724) target = $region112
        $region111: #{tpu_custom_call.1} parent=91 // pred_region
          %727 = dma.done [#allocation11], 512
        $region112: #{tpu_custom_call.1} parent=91 // pred_fallthru
          _
        // Predicated region
        $region113: #{tpu_custom_call.1} parent=91 // pred_check
          %p728 = pneg %p178
        $region114: #{tpu_custom_call.1} parent=91 // pred_check_branch
          %730 = sbr.rel (%p728) target = $region116
        $region115: #{tpu_custom_call.1} parent=91 // pred_region
          %731 = dma.done [#allocation14], 16
        $region116: #{tpu_custom_call.1} parent=91 // pred_fallthru
          _
        // Predicated region
        $region117: #{tpu_custom_call.1} parent=91 // pred_check
          %p732 = pneg %p199
        $region118: #{tpu_custom_call.1} parent=91 // pred_check_branch
          %734 = sbr.rel (%p732) target = $region120
        $region119: #{tpu_custom_call.1} parent=91 // pred_region
          %735 = dma.done [#allocation14], 512
        $region120: #{tpu_custom_call.1} parent=91 // pred_fallthru
          _
        // Predicated region
        $region121: #{tpu_custom_call.1} parent=91 // pred_check
          %p736 = pneg %p220
        $region122: #{tpu_custom_call.1} parent=91 // pred_check_branch
          %738 = sbr.rel (%p736) target = $region124
        $region123: #{tpu_custom_call.1} parent=91 // pred_region
          %739 = dma.done [#allocation17], 16
        $region124: #{tpu_custom_call.1} parent=91 // pred_fallthru
          _
        // Predicated region
        $region125: #{tpu_custom_call.1} parent=91 // pred_check
          %p740 = pneg %p241
        $region126: #{tpu_custom_call.1} parent=91 // pred_check_branch
          %742 = sbr.rel (%p740) target = $region128
        $region127: #{tpu_custom_call.1} parent=91 // pred_region
          %743 = dma.done [#allocation17], 32
        $region128: #{tpu_custom_call.1} parent=91 // pred_fallthru
          _
        // Predicated region
        $region129: #{tpu_custom_call.1} parent=91 // pred_check
          %p744 = pneg %p262
        $region130: #{tpu_custom_call.1} parent=91 // pred_check_branch
          %746 = sbr.rel (%p744) target = $region132
        $region131: #{tpu_custom_call.1} parent=91 // pred_region
          %747 = dma.done [#allocation20], 512
        $region132: #{tpu_custom_call.1} parent=91 // pred_fallthru
          _
        // Predicated region
        $region133: #{tpu_custom_call.1} parent=91 // pred_check
          %p748 = pneg %p283
        $region134: #{tpu_custom_call.1} parent=91 // pred_check_branch
          %750 = sbr.rel (%p748) target = $region136
        $region135: #{tpu_custom_call.1} parent=91 // pred_region
          %751 = dma.done [#allocation20], 16
        $region136: #{tpu_custom_call.1} parent=91 // pred_fallthru
          _
        // Predicated region
        $region137: #{tpu_custom_call.1} parent=91 // pred_check
          %p752 = pneg %p304
        $region138: #{tpu_custom_call.1} parent=91 // pred_check_branch
          %754 = sbr.rel (%p752) target = $region140
        $region139: #{tpu_custom_call.1} parent=91 // pred_region
          %755 = dma.done [#allocation23], 1024
        $region140: #{tpu_custom_call.1} parent=91 // pred_fallthru
          _
        // Predicated region
        $region141: #{tpu_custom_call.1} parent=91 // pred_check
          %p756 = pneg %p325
        $region142: #{tpu_custom_call.1} parent=91 // pred_check_branch
          %758 = sbr.rel (%p756) target = $region144
        $region143: #{tpu_custom_call.1} parent=91 // pred_region
          %759 = dma.done [#allocation23], 16
        $region144: #{tpu_custom_call.1} parent=91 // pred_fallthru
          _
        // Predicated region
        $region145: #{tpu_custom_call.1} parent=91 // pred_check
          %p760 = pneg %p346
        $region146: #{tpu_custom_call.1} parent=91 // pred_check_branch
          %762 = sbr.rel (%p760) target = $region148
        $region147: #{tpu_custom_call.1} parent=91 // pred_region
          %763 = dma.done [#allocation26], 32
        $region148: #{tpu_custom_call.1} parent=91 // pred_fallthru
          _
        // Predicated region
        $region149: #{tpu_custom_call.1} parent=91 // pred_check
          %p764 = pneg %p367
        $region150: #{tpu_custom_call.1} parent=91 // pred_check_branch
          %766 = sbr.rel (%p764) target = $region152
        $region151: #{tpu_custom_call.1} parent=91 // pred_region
          %767 = dma.done [#allocation26], 512
        $region152: #{tpu_custom_call.1} parent=91 // pred_fallthru
          _
        // Predicated region
        $region153: #{tpu_custom_call.1} parent=91 // pred_check
          %p768 = pneg %p388
        $region154: #{tpu_custom_call.1} parent=91 // pred_check_branch
          %770 = sbr.rel (%p768) target = $region156
        $region155: #{tpu_custom_call.1} parent=91 // pred_region
          %771 = dma.done [#allocation29], 16
        $region156: #{tpu_custom_call.1} parent=91 // pred_fallthru
          _
        // Predicated region
        $region157: #{tpu_custom_call.1} parent=91 // pred_check
          %p772 = pneg %p409
        $region158: #{tpu_custom_call.1} parent=91 // pred_check_branch
          %774 = sbr.rel (%p772) target = $region160
        $region159: #{tpu_custom_call.1} parent=91 // pred_region
          %775 = dma.done [#allocation29], 256
        $region160: #{tpu_custom_call.1} parent=91 // pred_fallthru
          _
        %s776 = sand.u32 %s55, 1
        %s777 = scalar_lea.sflag [#allocation5], %s776
        %s778 = sand.u32 %s55, 1
        %s779 = smul.addr %s778, 8
        %s780 = scalar_lea.vmem [#allocation4], %s779
        %p781 = pneg %p68
        %p782 = pneg %p65
        %s783 = sand.u32 %s47, 1
        %s784 = scalar_lea.sflag [#allocation8], %s783
        %s785 = sand.u32 %s81, 1
        %s786 = scalar_lea.vmem [#allocation7], %s785
        %p787 = pneg %p94
        %p788 = pneg %p91
        %p789 = pneg %p115
        %p790 = pneg %p112
        %p791 = pneg %p136
        %p792 = pneg %p133
        %p793 = pneg %p157
        %p794 = pneg %p154
        %p795 = pneg %p178
        %p796 = pneg %p175
        %p797 = pneg %p199
        %p798 = pneg %p196
        %p799 = pneg %p220
        %p800 = pneg %p217
        %p801 = pneg %p241
        %p802 = pneg %p238
        %p803 = pneg %p262
        %p804 = pneg %p259
        %p805 = pneg %p283
        %p806 = pneg %p280
        %p807 = pneg %p304
        %p808 = pneg %p301
        %p809 = pneg %p325
        %p810 = pneg %p322
        %p811 = pneg %p346
        %p812 = pneg %p343
        %p813 = pneg %p367
        %p814 = pneg %p364
        %p815 = pneg %p388
        %p816 = pneg %p385
        %p817 = pneg %p409
        %p818 = pneg %p406
        %p819 = pneg %p430
        %p820 = pneg %p427
        %p821 = pneg %p456
        %p822 = pneg %p453
        %s823 = sand.u32 %s443, 1
        %s824 = scalar_lea.sflag [#allocation6], %s823
        %s825 = sand.u32 %s443, 1
        %s826 = scalar_lea.vmem [#allocation31], %s825
        %v828 = vld [vmem:[%s703] sm:$0xff]
        %v829 = vld [vmem:[#allocation12] sm:$0xff]
        %v830 = vld [vmem:[#allocation12 + $0x8] sm:$0xff]
        %v831 = vld [vmem:[#allocation12 + $0x10] sm:$0xff]
        %v832 = vld [vmem:[#allocation12 + $0x18] sm:$0xff]
        %v833 = vpack.c.bf16 %v828, %v828
        %v834 = vpack.c.bf16 %v830, %v829
        %v835 = vpack.c.bf16 %v832, %v831
        %v836 = vld [vmem:[#allocation13] sm:$0x1]
        %v838 = vlaneseq
        %v839 = vshrl.u32 %v838, 7
        %v840 = vsub.s32 0, %v839
        %v841 = vrot.slane %v836, %v840
        %vm843 = vcmask 261120
        %v845 = vsel %vm843, %v833, 0
        %847 = vmatprep.subr.bf16.mxu0 0
        %848 = vmatpush1.bf16.msra.mxu0 %v834
        %849 = vmatprep.subr.bf16.mxu0 0
        %850 = vmatpush1.bf16.msra.mxu0 %v835
        %851 = vmatprep.subr.bf16.mxu0 0
        %852 = vmatpush1.bf16.msra.mxu0 0
        %853 = vmatprep.subr.bf16.mxu0 0
        %854 = vmatpush1.bf16.msra.mxu0 0
        %855 = vmatprep.subr.bf16.mxu0 0
        %856 = vmatpush1.bf16.msra.mxu0 0
        %857 = vmatprep.subr.bf16.mxu0 0
        %858 = vmatpush1.bf16.msra.mxu0 0
        %859 = vmatprep.subr.bf16.mxu0 0
        %860 = vmatpush1.bf16.msra.mxu0 0
        %861 = vmatprep.subr.bf16.mxu0 0
        %862 = vmatpush1.bf16.msra.mxu0 0
        %863 = vmatprep.subr.bf16.mxu0 0
        %864 = vmatpush1.bf16.msra.mxu0 0
        %865 = vmatprep.subr.bf16.mxu0 0
        %866 = vmatpush1.bf16.msra.mxu0 0
        %867 = vmatprep.subr.bf16.mxu0 0
        %868 = vmatpush1.bf16.msra.mxu0 0
        %869 = vmatprep.subr.bf16.mxu0 0
        %870 = vmatpush1.bf16.msra.mxu0 0
        %871 = vmatprep.subr.bf16.mxu0 0
        %872 = vmatpush1.bf16.msra.mxu0 0
        %873 = vmatprep.subr.bf16.mxu0 0
        %874 = vmatpush1.bf16.msra.mxu0 0
        %875 = vmatprep.subr.bf16.mxu0 0
        %876 = vmatpush1.bf16.msra.mxu0 0
        %877 = vmatprep.subr.bf16.mxu0 0
        %878 = vmatpush1.bf16.msra.mxu0 0
        %879 = vmatprep.mubr.bf16.mxu0 0
        %880 = vmatmul.mubr.bf16.gmra.mrb[0].mxu0 %v845
        %v881 = vpop.f32.mrb[0].mxu0
        %v882 = vadd.f32 %v841, %v881
        %v883 = vpop.f32.mrb[0].mxu0
        %v884 = vpop.f32.mrb[0].mxu0
        %v885 = vpop.f32.mrb[0].mxu0
        %886 = vdwg.mxu0
        %v887 = vld [vmem:[#allocation9] sm:$0xff]
        %v888 = vld [vmem:[#allocation9 + $0x8] sm:$0xff]
        %v889 = vld [vmem:[#allocation9 + $0x10] sm:$0xff]
        %v890 = vld [vmem:[#allocation9 + $0x18] sm:$0xff]
        %v891 = vpack.c.bf16 %v888, %v887
        %v892 = vpack.c.bf16 %v890, %v889
        %v893 = vld [vmem:[#allocation10] sm:$0x1]
        %894 = vmatprep.subr.bf16.mxu0 0
        %895 = vmatpush1.bf16.msra.mxu0 %v891
        %896 = vmatprep.subr.bf16.mxu0 0
        %897 = vmatpush1.bf16.msra.mxu0 %v892
        %898 = vmatprep.subr.bf16.mxu0 0
        %899 = vmatpush1.bf16.msra.mxu0 0
        %900 = vmatprep.subr.bf16.mxu0 0
        %901 = vmatpush1.bf16.msra.mxu0 0
        %902 = vmatprep.subr.bf16.mxu0 0
        %903 = vmatpush1.bf16.msra.mxu0 0
        %904 = vmatprep.subr.bf16.mxu0 0
        %905 = vmatpush1.bf16.msra.mxu0 0
        %906 = vmatprep.subr.bf16.mxu0 0
        %907 = vmatpush1.bf16.msra.mxu0 0
        %908 = vmatprep.subr.bf16.mxu0 0
        %909 = vmatpush1.bf16.msra.mxu0 0
        %910 = vmatprep.subr.bf16.mxu0 0
        %911 = vmatpush1.bf16.msra.mxu0 0
        %912 = vmatprep.subr.bf16.mxu0 0
        %913 = vmatpush1.bf16.msra.mxu0 0
        %914 = vmatprep.subr.bf16.mxu0 0
        %915 = vmatpush1.bf16.msra.mxu0 0
        %916 = vmatprep.subr.bf16.mxu0 0
        %917 = vmatpush1.bf16.msra.mxu0 0
        %918 = vmatprep.subr.bf16.mxu0 0
        %919 = vmatpush1.bf16.msra.mxu0 0
        %920 = vmatprep.subr.bf16.mxu0 0
        %921 = vmatpush1.bf16.msra.mxu0 0
        %922 = vmatprep.subr.bf16.mxu0 0
        %923 = vmatpush1.bf16.msra.mxu0 0
        %924 = vmatprep.subr.bf16.mxu0 0
        %925 = vmatpush1.bf16.msra.mxu0 0
        %926 = vmatprep.mubr.bf16.mxu0 0
        %927 = vmatmul.mubr.bf16.gmra.mrb[0].mxu0 %v845
        %v928 = vpop.f32.mrb[0].mxu0
        %v929 = vadd.f32 %v893, %v928
        %v930 = vpop.f32.mrb[0].mxu0
        %v931 = vpop.f32.mrb[0].mxu0
        %v932 = vpop.f32.mrb[0].mxu0
        %933 = vdwg.mxu0
        %v934 = vmul.f32 %v929, 0.25
        %v935 = vld [vmem:[%s711] sm:$0x1]
        %v936 = vsub.f32 %v935, 1.0
        %v937 = vmul.f32 %v936, 1e+09
        %v938 = vpack.c.bf16 %v934, %v934
        %v939 = vpack.c.bf16 %v882, %v882
        %vm940 = vcmask 130048
        %v942 = vsel %vm940, %v938, 0
        %v945 = vsel %vm940, %v939, 0
        %947 = vmatprep.subr.bf16.mxu0 0
        %948 = vmatpush1.bf16.xpose.msra.mxu0 %v945
        %949 = vmatprep.subr.bf16.mxu0 0
        %950 = vmatpush1.bf16.xpose.msra.mxu0 0
        %951 = vmatprep.subr.bf16.mxu0 0
        %952 = vmatpush1.bf16.xpose.msra.mxu0 0
        %953 = vmatprep.subr.bf16.mxu0 0
        %954 = vmatpush1.bf16.xpose.msra.mxu0 0
        %955 = vmatprep.subr.bf16.mxu0 0
        %956 = vmatpush1.bf16.xpose.msra.mxu0 0
        %957 = vmatprep.subr.bf16.mxu0 0
        %958 = vmatpush1.bf16.xpose.msra.mxu0 0
        %959 = vmatprep.subr.bf16.mxu0 0
        %960 = vmatpush1.bf16.xpose.msra.mxu0 0
        %961 = vmatprep.subr.bf16.mxu0 0
        %962 = vmatpush1.bf16.xpose.msra.mxu0 0
        %963 = vmatprep.subr.bf16.mxu0 0
        %964 = vmatpush1.bf16.xpose.msra.mxu0 0
        %965 = vmatprep.subr.bf16.mxu0 0
        %966 = vmatpush1.bf16.xpose.msra.mxu0 0
        %967 = vmatprep.subr.bf16.mxu0 0
        %968 = vmatpush1.bf16.xpose.msra.mxu0 0
        %969 = vmatprep.subr.bf16.mxu0 0
        %970 = vmatpush1.bf16.xpose.msra.mxu0 0
        %971 = vmatprep.subr.bf16.mxu0 0
        %972 = vmatpush1.bf16.xpose.msra.mxu0 0
        %973 = vmatprep.subr.bf16.mxu0 0
        %974 = vmatpush1.bf16.xpose.msra.mxu0 0
        %975 = vmatprep.subr.bf16.mxu0 0
        %976 = vmatpush1.bf16.xpose.msra.mxu0 0
        %977 = vmatprep.subr.bf16.mxu0 0
        %978 = vmatpush1.bf16.xpose.msra.mxu0 0
        %979 = vmatprep.mubr.bf16.mxu0 0
        %980 = vmatmul.mubr.bf16.gmra.mrb[0].mxu0 %v942
        %v981 = vpop.f32.mrb[0].mxu0
        %v982 = vadd.f32 %v937, %v981
        %v983 = vpop.f32.mrb[0].mxu0
        %v984 = vpop.f32.mrb[0].mxu0
        %v985 = vpop.f32.mrb[0].mxu0
        %986 = vdwg.mxu0
        %vm987 = vcmask 57344
        %v988 = vsel %vm987, %v982, -inf
        %989 = vmax.xlane.f32.xlu0 %v988
        %v990 = vpop.xlane.xlu0 %989
        %v991 = vsub.f32 %v982, %v990
        %v992 = vmul.f32 %v991, 1.442695
        %v993 = vpow.pop %v992
        %v994 = vsel %vm987, %v993, 0.0
        %995 = vadd.xlane.f32.xlu0 %v994
        %v996 = vpop.xlane.xlu0 %995
        %v997 = vrcp.pop %v996
        %v998 = vmul.f32 %v993, %v997
        %v999 = vpack.c.bf16 %v998, %v998
        %1001 = vrot.lane.b32.xlu0 %v939, 96
        %v1002 = vpop.permute.xlu0 %1001
        %vm1003 = vcmask 64512
        %v1005 = vsel %vm1003, %v999, 0
        %vm1007 = vcmask 1043456
        %v1009 = vsel %vm1007, %v1002, 0
        %1011 = vmatprep.subr.bf16.mxu0 0
        %1012 = vmatpush1.bf16.msra.mxu0 %v1009
        %1013 = vmatprep.subr.bf16.mxu0 0
        %1014 = vmatpush1.bf16.msra.mxu0 0
        %1015 = vmatprep.subr.bf16.mxu0 0
        %1016 = vmatpush1.bf16.msra.mxu0 0
        %1017 = vmatprep.subr.bf16.mxu0 0
        %1018 = vmatpush1.bf16.msra.mxu0 0
        %1019 = vmatprep.subr.bf16.mxu0 0
        %1020 = vmatpush1.bf16.msra.mxu0 0
        %1021 = vmatprep.subr.bf16.mxu0 0
        %1022 = vmatpush1.bf16.msra.mxu0 0
        %1023 = vmatprep.subr.bf16.mxu0 0
        %1024 = vmatpush1.bf16.msra.mxu0 0
        %1025 = vmatprep.subr.bf16.mxu0 0
        %1026 = vmatpush1.bf16.msra.mxu0 0
        %1027 = vmatprep.subr.bf16.mxu0 0
        %1028 = vmatpush1.bf16.msra.mxu0 0
        %1029 = vmatprep.subr.bf16.mxu0 0
        %1030 = vmatpush1.bf16.msra.mxu0 0
        %1031 = vmatprep.subr.bf16.mxu0 0
        %1032 = vmatpush1.bf16.msra.mxu0 0
        %1033 = vmatprep.subr.bf16.mxu0 0
        %1034 = vmatpush1.bf16.msra.mxu0 0
        %1035 = vmatprep.subr.bf16.mxu0 0
        %1036 = vmatpush1.bf16.msra.mxu0 0
        %1037 = vmatprep.subr.bf16.mxu0 0
        %1038 = vmatpush1.bf16.msra.mxu0 0
        %1039 = vmatprep.subr.bf16.mxu0 0
        %1040 = vmatpush1.bf16.msra.mxu0 0
        %1041 = vmatprep.subr.bf16.mxu0 0
        %1042 = vmatpush1.bf16.msra.mxu0 0
        %1043 = vmatprep.mubr.bf16.mxu0 0
        %1044 = vmatmul.mubr.bf16.gmra.mrb[0].mxu0 %v1005
        %v1045 = vpop.f32.mrb[0].mxu0
        %v1046 = vadd.f32 0.0, %v1045
        %v1047 = vpop.f32.mrb[0].mxu0
        %v1048 = vpop.f32.mrb[0].mxu0
        %v1049 = vpop.f32.mrb[0].mxu0
        %1050 = vdwg.mxu0
        %vm1051 = vcmask 122880
        %1052 = vst.msk [vmem:[#allocation2] sm:$0x1] %vm1051, %v1046
        %1054 = vrot.lane.b32.xlu0 %v938, 112
        %v1055 = vpop.permute.xlu0 %1054
        %1056 = vrot.lane.b32.xlu0 %v939, 112
        %v1057 = vpop.permute.xlu0 %1056
        %v1059 = vsel %vm940, %v1055, 0
        %v1062 = vsel %vm940, %v1057, 0
        %1064 = vmatprep.subr.bf16.mxu0 0
        %1065 = vmatpush1.bf16.xpose.msra.mxu0 %v1062
        %1066 = vmatprep.subr.bf16.mxu0 0
        %1067 = vmatpush1.bf16.xpose.msra.mxu0 0
        %1068 = vmatprep.subr.bf16.mxu0 0
        %1069 = vmatpush1.bf16.xpose.msra.mxu0 0
        %1070 = vmatprep.subr.bf16.mxu0 0
        %1071 = vmatpush1.bf16.xpose.msra.mxu0 0
        %1072 = vmatprep.subr.bf16.mxu0 0
        %1073 = vmatpush1.bf16.xpose.msra.mxu0 0
        %1074 = vmatprep.subr.bf16.mxu0 0
        %1075 = vmatpush1.bf16.xpose.msra.mxu0 0
        %1076 = vmatprep.subr.bf16.mxu0 0
        %1077 = vmatpush1.bf16.xpose.msra.mxu0 0
        %1078 = vmatprep.subr.bf16.mxu0 0
        %1079 = vmatpush1.bf16.xpose.msra.mxu0 0
        %1080 = vmatprep.subr.bf16.mxu0 0
        %1081 = vmatpush1.bf16.xpose.msra.mxu0 0
        %1082 = vmatprep.subr.bf16.mxu0 0
        %1083 = vmatpush1.bf16.xpose.msra.mxu0 0
        %1084 = vmatprep.subr.bf16.mxu0 0
        %1085 = vmatpush1.bf16.xpose.msra.mxu0 0
        %1086 = vmatprep.subr.bf16.mxu0 0
        %1087 = vmatpush1.bf16.xpose.msra.mxu0 0
        %1088 = vmatprep.subr.bf16.mxu0 0
        %1089 = vmatpush1.bf16.xpose.msra.mxu0 0
        %1090 = vmatprep.subr.bf16.mxu0 0
        %1091 = vmatpush1.bf16.xpose.msra.mxu0 0
        %1092 = vmatprep.subr.bf16.mxu0 0
        %1093 = vmatpush1.bf16.xpose.msra.mxu0 0
        %1094 = vmatprep.subr.bf16.mxu0 0
        %1095 = vmatpush1.bf16.xpose.msra.mxu0 0
        %1096 = vmatprep.mubr.bf16.mxu0 0
        %1097 = vmatmul.mubr.bf16.gmra.mrb[0].mxu0 %v1059
        %v1098 = vpop.f32.mrb[0].mxu0
        %v1099 = vadd.f32 %v937, %v1098
        %v1100 = vpop.f32.mrb[0].mxu0
        %v1101 = vpop.f32.mrb[0].mxu0
        %v1102 = vpop.f32.mrb[0].mxu0
        %1103 = vdwg.mxu0
        %v1104 = vsel %vm987, %v1099, -inf
        %1105 = vmax.xlane.f32.xlu0 %v1104
        %v1106 = vpop.xlane.xlu0 %1105
        %v1107 = vsub.f32 %v1099, %v1106
        %v1108 = vmul.f32 %v1107, 1.442695
        %v1109 = vpow.pop %v1108
        %v1110 = vsel %vm987, %v1109, 0.0
        %1111 = vadd.xlane.f32.xlu0 %v1110
        %v1112 = vpop.xlane.xlu0 %1111
        %v1113 = vrcp.pop %v1112
        %v1114 = vmul.f32 %v1109, %v1113
        %v1115 = vpack.c.bf16 %v1114, %v1114
        %1116 = vrot.lane.b32.xlu0 %v939, 80
        %v1117 = vpop.permute.xlu0 %1116
        %v1119 = vsel %vm1003, %v1115, 0
        %v1122 = vsel %vm1007, %v1117, 0
        %1124 = vmatprep.subr.bf16.mxu0 0
        %1125 = vmatpush1.bf16.msra.mxu0 %v1122
        %1126 = vmatprep.subr.bf16.mxu0 0
        %1127 = vmatpush1.bf16.msra.mxu0 0
        %1128 = vmatprep.subr.bf16.mxu0 0
        %1129 = vmatpush1.bf16.msra.mxu0 0
        %1130 = vmatprep.subr.bf16.mxu0 0
        %1131 = vmatpush1.bf16.msra.mxu0 0
        %1132 = vmatprep.subr.bf16.mxu0 0
        %1133 = vmatpush1.bf16.msra.mxu0 0
        %1134 = vmatprep.subr.bf16.mxu0 0
        %1135 = vmatpush1.bf16.msra.mxu0 0
        %1136 = vmatprep.subr.bf16.mxu0 0
        %1137 = vmatpush1.bf16.msra.mxu0 0
        %1138 = vmatprep.subr.bf16.mxu0 0
        %1139 = vmatpush1.bf16.msra.mxu0 0
        %1140 = vmatprep.subr.bf16.mxu0 0
        %1141 = vmatpush1.bf16.msra.mxu0 0
        %1142 = vmatprep.subr.bf16.mxu0 0
        %1143 = vmatpush1.bf16.msra.mxu0 0
        %1144 = vmatprep.subr.bf16.mxu0 0
        %1145 = vmatpush1.bf16.msra.mxu0 0
        %1146 = vmatprep.subr.bf16.mxu0 0
        %1147 = vmatpush1.bf16.msra.mxu0 0
        %1148 = vmatprep.subr.bf16.mxu0 0
        %1149 = vmatpush1.bf16.msra.mxu0 0
        %1150 = vmatprep.subr.bf16.mxu0 0
        %1151 = vmatpush1.bf16.msra.mxu0 0
        %1152 = vmatprep.subr.bf16.mxu0 0
        %1153 = vmatpush1.bf16.msra.mxu0 0
        %1154 = vmatprep.subr.bf16.mxu0 0
        %1155 = vmatpush1.bf16.msra.mxu0 0
        %1156 = vmatprep.mubr.bf16.mxu0 0
        %1157 = vmatmul.mubr.bf16.gmra.mrb[0].mxu0 %v1119
        %v1158 = vpop.f32.mrb[0].mxu0
        %v1159 = vadd.f32 0.0, %v1158
        %v1160 = vpop.f32.mrb[0].mxu0
        %v1161 = vpop.f32.mrb[0].mxu0
        %v1162 = vpop.f32.mrb[0].mxu0
        %1163 = vdwg.mxu0
        %1165 = vrot.lane.b32.xlu0 %v1159, 16
        %v1166 = vpop.permute.xlu0 %1165
        %vm1168 = vcmask 254080
        %1169 = vst.msk [vmem:[#allocation2] sm:$0x1] %vm1168, %v1166
        %v1170 = vld [vmem:[#allocation2] sm:$0x1]
        %v1171 = vld [vmem:[#allocation15] sm:$0xff]
        %v1172 = vld [vmem:[#allocation15 + $0x8] sm:$0xff]
        %v1173 = vld [vmem:[#allocation15 + $0x10] sm:$0xff]
        %v1174 = vld [vmem:[#allocation15 + $0x18] sm:$0xff]
        %v1175 = vpack.c.bf16 %v1170, %v1170
        %v1176 = vpack.c.bf16 %v1172, %v1171
        %v1177 = vpack.c.bf16 %v1174, %v1173
        %v1178 = vld [vmem:[#allocation16] sm:$0x1]
        %v1180 = vsel %vm843, %v1175, 0
        %1182 = vmatprep.subr.bf16.mxu0 0
        %1183 = vmatpush1.bf16.msra.mxu0 %v1176
        %1184 = vmatprep.subr.bf16.mxu0 0
        %1185 = vmatpush1.bf16.msra.mxu0 %v1177
        %1186 = vmatprep.subr.bf16.mxu0 0
        %1187 = vmatpush1.bf16.msra.mxu0 0
        %1188 = vmatprep.subr.bf16.mxu0 0
        %1189 = vmatpush1.bf16.msra.mxu0 0
        %1190 = vmatprep.subr.bf16.mxu0 0
        %1191 = vmatpush1.bf16.msra.mxu0 0
        %1192 = vmatprep.subr.bf16.mxu0 0
        %1193 = vmatpush1.bf16.msra.mxu0 0
        %1194 = vmatprep.subr.bf16.mxu0 0
        %1195 = vmatpush1.bf16.msra.mxu0 0
        %1196 = vmatprep.subr.bf16.mxu0 0
        %1197 = vmatpush1.bf16.msra.mxu0 0
        %1198 = vmatprep.subr.bf16.mxu0 0
        %1199 = vmatpush1.bf16.msra.mxu0 0
        %1200 = vmatprep.subr.bf16.mxu0 0
        %1201 = vmatpush1.bf16.msra.mxu0 0
        %1202 = vmatprep.subr.bf16.mxu0 0
        %1203 = vmatpush1.bf16.msra.mxu0 0
        %1204 = vmatprep.subr.bf16.mxu0 0
        %1205 = vmatpush1.bf16.msra.mxu0 0
        %1206 = vmatprep.subr.bf16.mxu0 0
        %1207 = vmatpush1.bf16.msra.mxu0 0
        %1208 = vmatprep.subr.bf16.mxu0 0
        %1209 = vmatpush1.bf16.msra.mxu0 0
        %1210 = vmatprep.subr.bf16.mxu0 0
        %1211 = vmatpush1.bf16.msra.mxu0 0
        %1212 = vmatprep.subr.bf16.mxu0 0
        %1213 = vmatpush1.bf16.msra.mxu0 0
        %1214 = vmatprep.mubr.bf16.mxu0 0
        %1215 = vmatmul.mubr.bf16.gmra.mrb[0].mxu0 %v1180
        %v1216 = vpop.f32.mrb[0].mxu0
        %v1217 = vadd.f32 %v1178, %v1216
        %v1218 = vpop.f32.mrb[0].mxu0
        %v1219 = vpop.f32.mrb[0].mxu0
        %v1220 = vpop.f32.mrb[0].mxu0
        %1221 = vdwg.mxu0
        %v1222 = vadd.f32 %v828, %v1217
        %v1223 = vld [vmem:[#allocation18] sm:$0x1]
        %v1224 = vld [vmem:[#allocation18 + $0x1] sm:$0x1]
        %vm1225 = vcmask 253952
        %v1226 = vsel %vm1225, %v1222, 0.0
        %1227 = vadd.xlane.f32.xlu0 %v1226
        %v1228 = vpop.xlane.xlu0 %1227
        %v1229 = vrcp.pop 32.0
        %v1230 = vmul.f32 %v1228, %v1229
        %v1231 = vsub.f32 %v1222, %v1230
        %v1232 = vmul.f32 %v1231, %v1231
        %v1233 = vsel %vm1225, %v1232, 0.0
        %1234 = vadd.xlane.f32.xlu0 %v1233
        %v1235 = vpop.xlane.xlu0 %1234
        %v1236 = vmul.f32 %v1235, %v1229
        %v1237 = vadd.f32 %v1236, 1e-05
        %v1238 = vrsqrt.pop %v1237
        %v1239 = vmul.f32 %v1231, %v1238
        %v1240 = vmul.f32 %v1239, %v1223
        %v1241 = vadd.f32 %v1240, %v1224
        %v1242 = vld [vmem:[#allocation19] sm:$0xff]
        %v1243 = vld [vmem:[#allocation19 + $0x8] sm:$0xff]
        %v1244 = vld [vmem:[#allocation19 + $0x10] sm:$0xff]
        %v1245 = vld [vmem:[#allocation19 + $0x18] sm:$0xff]
        %v1246 = vpack.c.bf16 %v1241, %v1241
        %v1247 = vpack.c.bf16 %v1243, %v1242
        %v1248 = vpack.c.bf16 %v1245, %v1244
        %v1249 = vld [vmem:[#allocation21] sm:$0x1]
        %v1251 = vsel %vm843, %v1246, 0
        %1253 = vmatprep.subr.bf16.mxu0 0
        %1254 = vmatpush1.bf16.msra.mxu0 %v1247
        %1255 = vmatprep.subr.bf16.mxu0 0
        %1256 = vmatpush1.bf16.msra.mxu0 %v1248
        %1257 = vmatprep.subr.bf16.mxu0 0
        %1258 = vmatpush1.bf16.msra.mxu0 0
        %1259 = vmatprep.subr.bf16.mxu0 0
        %1260 = vmatpush1.bf16.msra.mxu0 0
        %1261 = vmatprep.subr.bf16.mxu0 0
        %1262 = vmatpush1.bf16.msra.mxu0 0
        %1263 = vmatprep.subr.bf16.mxu0 0
        %1264 = vmatpush1.bf16.msra.mxu0 0
        %1265 = vmatprep.subr.bf16.mxu0 0
        %1266 = vmatpush1.bf16.msra.mxu0 0
        %1267 = vmatprep.subr.bf16.mxu0 0
        %1268 = vmatpush1.bf16.msra.mxu0 0
        %1269 = vmatprep.subr.bf16.mxu0 0
        %1270 = vmatpush1.bf16.msra.mxu0 0
        %1271 = vmatprep.subr.bf16.mxu0 0
        %1272 = vmatpush1.bf16.msra.mxu0 0
        %1273 = vmatprep.subr.bf16.mxu0 0
        %1274 = vmatpush1.bf16.msra.mxu0 0
        %1275 = vmatprep.subr.bf16.mxu0 0
        %1276 = vmatpush1.bf16.msra.mxu0 0
        %1277 = vmatprep.subr.bf16.mxu0 0
        %1278 = vmatpush1.bf16.msra.mxu0 0
        %1279 = vmatprep.subr.bf16.mxu0 0
        %1280 = vmatpush1.bf16.msra.mxu0 0
        %1281 = vmatprep.subr.bf16.mxu0 0
        %1282 = vmatpush1.bf16.msra.mxu0 0
        %1283 = vmatprep.subr.bf16.mxu0 0
        %1284 = vmatpush1.bf16.msra.mxu0 0
        %1285 = vmatprep.mubr.bf16.mxu0 0
        %1286 = vmatmul.mubr.bf16.gmra.mrb[0].mxu0 %v1251
        %v1287 = vpop.f32.mrb[0].mxu0
        %v1288 = vadd.f32 %v1249, %v1287
        %v1289 = vpop.f32.mrb[0].mxu0
        %v1290 = vpop.f32.mrb[0].mxu0
        %v1291 = vpop.f32.mrb[0].mxu0
        %1292 = vdwg.mxu0
        %v1293 = vmul.f32 %v1288, %v1288
        %v1294 = vmul.f32 %v1288, %v1293
        %v1295 = vmul.f32 %v1294, 0.044715
        %v1296 = vadd.f32 %v1288, %v1295
        %v1297 = vmul.f32 %v1296, 0.7978846
        %v1298 = vtanh.pop %v1297
        %v1299 = vadd.f32 %v1298, 1.0
        %v1300 = vmul.f32 %v1299, 0.5
        %v1301 = vmul.f32 %v1288, %v1300
        %v1302 = vld [vmem:[#allocation22] sm:$0xff]
        %v1303 = vld [vmem:[#allocation22 + $0x8] sm:$0xff]
        %v1304 = vld [vmem:[#allocation22 + $0x10] sm:$0xff]
        %v1305 = vld [vmem:[#allocation22 + $0x18] sm:$0xff]
        %v1306 = vld [vmem:[#allocation22 + $0x20] sm:$0xff]
        %v1307 = vld [vmem:[#allocation22 + $0x28] sm:$0xff]
        %v1308 = vld [vmem:[#allocation22 + $0x30] sm:$0xff]
        %v1309 = vld [vmem:[#allocation22 + $0x38] sm:$0xff]
        %v1310 = vpack.c.bf16 %v1301, %v1301
        %v1311 = vpack.c.bf16 %v1303, %v1302
        %v1312 = vpack.c.bf16 %v1305, %v1304
        %v1313 = vpack.c.bf16 %v1307, %v1306
        %v1314 = vpack.c.bf16 %v1309, %v1308
        %v1315 = vld [vmem:[#allocation24] sm:$0x1]
        %vm1316 = vcmask 523264
        %v1318 = vsel %vm1316, %v1310, 0
        %1320 = vmatprep.subr.bf16.mxu0 0
        %1321 = vmatpush1.bf16.msra.mxu0 %v1311
        %1322 = vmatprep.subr.bf16.mxu0 0
        %1323 = vmatpush1.bf16.msra.mxu0 %v1312
        %1324 = vmatprep.subr.bf16.mxu0 0
        %1325 = vmatpush1.bf16.msra.mxu0 %v1313
        %1326 = vmatprep.subr.bf16.mxu0 0
        %1327 = vmatpush1.bf16.msra.mxu0 %v1314
        %1328 = vmatprep.subr.bf16.mxu0 0
        %1329 = vmatpush1.bf16.msra.mxu0 0
        %1330 = vmatprep.subr.bf16.mxu0 0
        %1331 = vmatpush1.bf16.msra.mxu0 0
        %1332 = vmatprep.subr.bf16.mxu0 0
        %1333 = vmatpush1.bf16.msra.mxu0 0
        %1334 = vmatprep.subr.bf16.mxu0 0
        %1335 = vmatpush1.bf16.msra.mxu0 0
        %1336 = vmatprep.subr.bf16.mxu0 0
        %1337 = vmatpush1.bf16.msra.mxu0 0
        %1338 = vmatprep.subr.bf16.mxu0 0
        %1339 = vmatpush1.bf16.msra.mxu0 0
        %1340 = vmatprep.subr.bf16.mxu0 0
        %1341 = vmatpush1.bf16.msra.mxu0 0
        %1342 = vmatprep.subr.bf16.mxu0 0
        %1343 = vmatpush1.bf16.msra.mxu0 0
        %1344 = vmatprep.subr.bf16.mxu0 0
        %1345 = vmatpush1.bf16.msra.mxu0 0
        %1346 = vmatprep.subr.bf16.mxu0 0
        %1347 = vmatpush1.bf16.msra.mxu0 0
        %1348 = vmatprep.subr.bf16.mxu0 0
        %1349 = vmatpush1.bf16.msra.mxu0 0
        %1350 = vmatprep.subr.bf16.mxu0 0
        %1351 = vmatpush1.bf16.msra.mxu0 0
        %1352 = vmatprep.mubr.bf16.mxu0 0
        %1353 = vmatmul.mubr.bf16.gmra.mrb[0].mxu0 %v1318
        %v1354 = vpop.f32.mrb[0].mxu0
        %v1355 = vadd.f32 %v1315, %v1354
        %v1356 = vpop.f32.mrb[0].mxu0
        %v1357 = vpop.f32.mrb[0].mxu0
        %v1358 = vpop.f32.mrb[0].mxu0
        %1359 = vdwg.mxu0
        %v1360 = vadd.f32 %v1241, %v1355
        %v1361 = vld [vmem:[#allocation25] sm:$0x1]
        %v1362 = vld [vmem:[#allocation25 + $0x1] sm:$0x1]
        %v1363 = vsel %vm1225, %v1360, 0.0
        %1364 = vadd.xlane.f32.xlu0 %v1363
        %v1365 = vpop.xlane.xlu0 %1364
        %v1366 = vmul.f32 %v1365, %v1229
        %v1367 = vsub.f32 %v1360, %v1366
        %v1368 = vmul.f32 %v1367, %v1367
        %v1369 = vsel %vm1225, %v1368, 0.0
        %1370 = vadd.xlane.f32.xlu0 %v1369
        %v1371 = vpop.xlane.xlu0 %1370
        %v1372 = vmul.f32 %v1371, %v1229
        %v1373 = vadd.f32 %v1372, 1e-05
        %v1374 = vrsqrt.pop %v1373
        %v1375 = vmul.f32 %v1367, %v1374
        %v1376 = vmul.f32 %v1375, %v1361
        %v1377 = vadd.f32 %v1376, %v1362
        %v1378 = vld [vmem:[#allocation27] sm:$0xff]
        %v1379 = vld [vmem:[#allocation27 + $0x8] sm:$0xff]
        %v1380 = vld [vmem:[#allocation27 + $0x10] sm:$0xff]
        %v1381 = vld [vmem:[#allocation27 + $0x18] sm:$0xff]
        %v1382 = vpack.c.bf16 %v1377, %v1377
        %v1383 = vpack.c.bf16 %v1379, %v1378
        %v1384 = vpack.c.bf16 %v1381, %v1380
        %v1385 = vld [vmem:[#allocation28] sm:$0x1]
        %v1387 = vsel %vm843, %v1382, 0
        %1389 = vmatprep.subr.bf16.mxu0 0
        %1390 = vmatpush1.bf16.msra.mxu0 %v1383
        %1391 = vmatprep.subr.bf16.mxu0 0
        %1392 = vmatpush1.bf16.msra.mxu0 %v1384
        %1393 = vmatprep.subr.bf16.mxu0 0
        %1394 = vmatpush1.bf16.msra.mxu0 0
        %1395 = vmatprep.subr.bf16.mxu0 0
        %1396 = vmatpush1.bf16.msra.mxu0 0
        %1397 = vmatprep.subr.bf16.mxu0 0
        %1398 = vmatpush1.bf16.msra.mxu0 0
        %1399 = vmatprep.subr.bf16.mxu0 0
        %1400 = vmatpush1.bf16.msra.mxu0 0
        %1401 = vmatprep.subr.bf16.mxu0 0
        %1402 = vmatpush1.bf16.msra.mxu0 0
        %1403 = vmatprep.subr.bf16.mxu0 0
        %1404 = vmatpush1.bf16.msra.mxu0 0
        %1405 = vmatprep.subr.bf16.mxu0 0
        %1406 = vmatpush1.bf16.msra.mxu0 0
        %1407 = vmatprep.subr.bf16.mxu0 0
        %1408 = vmatpush1.bf16.msra.mxu0 0
        %1409 = vmatprep.subr.bf16.mxu0 0
        %1410 = vmatpush1.bf16.msra.mxu0 0
        %1411 = vmatprep.subr.bf16.mxu0 0
        %1412 = vmatpush1.bf16.msra.mxu0 0
        %1413 = vmatprep.subr.bf16.mxu0 0
        %1414 = vmatpush1.bf16.msra.mxu0 0
        %1415 = vmatprep.subr.bf16.mxu0 0
        %1416 = vmatpush1.bf16.msra.mxu0 0
        %1417 = vmatprep.subr.bf16.mxu0 0
        %1418 = vmatpush1.bf16.msra.mxu0 0
        %1419 = vmatprep.subr.bf16.mxu0 0
        %1420 = vmatpush1.bf16.msra.mxu0 0
        %1421 = vmatprep.mubr.bf16.mxu0 0
        %1422 = vmatmul.mubr.bf16.gmra.mrb[0].mxu0 %v1387
        %v1423 = vpop.f32.mrb[0].mxu0
        %v1424 = vadd.f32 %v1385, %v1423
        %v1425 = vpop.f32.mrb[0].mxu0
        %v1426 = vpop.f32.mrb[0].mxu0
        %v1427 = vpop.f32.mrb[0].mxu0
        %1428 = vdwg.mxu0
        %v1429 = vmax.f32 %v1424, 0.0
        %vm1430 = vcmask 139392
        %v1431 = vsel %vm1430, %v1424, -inf
        %1432 = vmax.xlane.f32.xlu0 %v1431
        %v1433 = vpop.xlane.xlu0 %1432
        %v1434 = vsub.f32 %v1424, %v1433
        %v1435 = vmul.f32 %v1434, 1.442695
        %v1436 = vpow.pop %v1435
        %1438 = vrot.lane.b32.xlu0 %v1436, 112
        %v1439 = vpop.permute.xlu0 %1438
        %vm1441 = vcmask 8192
        %v1442 = vsel %vm1441, %v1439, 0.0
        %1443 = vadd.xlane.f32.xlu0 %v1442
        %v1444 = vpop.xlane.xlu0 %1443
        %v1445 = vrcp.pop %v1444
        %v1446 = vmul.f32 %v1436, %v1445
        %v1447 = vld [vmem:[#allocation30] sm:$0xff]
        %v1448 = vld [vmem:[#allocation30 + $0x8] sm:$0xff]
        %v1449 = vpack.c.bf16 %v1429, %v1429
        %v1450 = vpack.c.bf16 %v1448, %v1447
        %v1451 = vld [vmem:[#allocation3] sm:$0x1]
        %v1453 = vsel %vm940, %v1449, 0
        %1455 = vmatprep.subr.bf16.mxu0 0
        %1456 = vmatpush1.bf16.msra.mxu0 %v1450
        %1457 = vmatprep.subr.bf16.mxu0 0
        %1458 = vmatpush1.bf16.msra.mxu0 0
        %1459 = vmatprep.subr.bf16.mxu0 0
        %1460 = vmatpush1.bf16.msra.mxu0 0
        %1461 = vmatprep.subr.bf16.mxu0 0
        %1462 = vmatpush1.bf16.msra.mxu0 0
        %1463 = vmatprep.subr.bf16.mxu0 0
        %1464 = vmatpush1.bf16.msra.mxu0 0
        %1465 = vmatprep.subr.bf16.mxu0 0
        %1466 = vmatpush1.bf16.msra.mxu0 0
        %1467 = vmatprep.subr.bf16.mxu0 0
        %1468 = vmatpush1.bf16.msra.mxu0 0
        %1469 = vmatprep.subr.bf16.mxu0 0
        %1470 = vmatpush1.bf16.msra.mxu0 0
        %1471 = vmatprep.subr.bf16.mxu0 0
        %1472 = vmatpush1.bf16.msra.mxu0 0
        %1473 = vmatprep.subr.bf16.mxu0 0
        %1474 = vmatpush1.bf16.msra.mxu0 0
        %1475 = vmatprep.subr.bf16.mxu0 0
        %1476 = vmatpush1.bf16.msra.mxu0 0
        %1477 = vmatprep.subr.bf16.mxu0 0
        %1478 = vmatpush1.bf16.msra.mxu0 0
        %1479 = vmatprep.subr.bf16.mxu0 0
        %1480 = vmatpush1.bf16.msra.mxu0 0
        %1481 = vmatprep.subr.bf16.mxu0 0
        %1482 = vmatpush1.bf16.msra.mxu0 0
        %1483 = vmatprep.subr.bf16.mxu0 0
        %1484 = vmatpush1.bf16.msra.mxu0 0
        %1485 = vmatprep.subr.bf16.mxu0 0
        %1486 = vmatpush1.bf16.msra.mxu0 0
        %1487 = vmatprep.mubr.bf16.mxu0 0
        %1488 = vmatmul.mubr.bf16.gmra.mrb[0].mxu0 %v1453
        %v1489 = vpop.f32.mrb[0].mxu0
        %v1490 = vadd.f32 %v1451, %v1489
        %v1491 = vpop.f32.mrb[0].mxu0
        %v1492 = vpop.f32.mrb[0].mxu0
        %v1493 = vpop.f32.mrb[0].mxu0
        %1494 = vdwg.mxu0
        %1496 = vrot.lane.b32.xlu0 %v1446, 112
        %v1497 = vpop.permute.xlu0 %1496
        %1500 = vrot.lane.b32.xlu0 %v1490, 2
        %v1501 = vpop.permute.xlu0 %1500
        %vm1503 = vcmask 15360
        %v1504 = vsel %vm1503, %v1497, %v1501
        %vm1505 = vcmask 23552
        %v1506 = vsel %vm1505, %v1504, 0.0
        %1507 = vst [vmem:[%s826] sm:$0x1] %v1506
        %s1508 = sand.u32 %s443, 1
        %s1509 = scalar_lea.sflag [#allocation6], %s1508
        %s1510 = sand.u32 %s443, 1
        %s1511 = scalar_lea.vmem [#allocation31], %s1510
        // Predicated region
        $region161: #{tpu_custom_call.1} parent=91 // pred_check
          %p1512 = pneg %p453
        $region162: #{tpu_custom_call.1} parent=91 // pred_check_branch
          %1514 = sbr.rel (%p1512) target = $region164
        $region163: #{tpu_custom_call.1} parent=91 // pred_region
          %s1516 = ssub.s32 16, 16
          %1517 = vsyncadd %s1509, %s1516
          %s1518 = smul.addr %s47, 16
          %s1519 = scalar_lea.hbm %s18, %s1518
          %s1521 = sshll.u32 %s1511, 4
          %s1522 = int_to_ptr.vmem [resolvable:$true] %s1521
          %1524 = dma.vmem_to_hbm [thread:$0]  %s1522, 16, %s1519, %s1509
        $region164: #{tpu_custom_call.1} parent=91 // pred_fallthru
          _
      $region92: #{tpu_custom_call.1} parent=5 // pred_fallthru
        _
      %p1525 = scmp.le.s32.totalorder 2, %s42
      // Predicated region
      $region165: #{tpu_custom_call.1} parent=5 // pred_check
        %p1526 = pneg %p1525
      $region166: #{tpu_custom_call.1} parent=5 // pred_check_branch
        %1528 = sbr.rel (%p1526) target = $region168
      $region167: #{tpu_custom_call.1} parent=5 // pred_region
        %s1529 = ssub.s32 %s42, 2
        // Predicated region
        $region169: #{tpu_custom_call.1} parent=167 // pred_check
          %p1530 = pneg %p459
        $region170: #{tpu_custom_call.1} parent=167 // pred_check_branch
          %1532 = sbr.rel (%p1530) target = $region172
        $region171: #{tpu_custom_call.1} parent=167 // pred_region
          %s1533 = sand.u32 %s444, 1
          %s1534 = scalar_lea.sflag [#allocation6], %s1533
          %s1535 = sand.u32 %s444, 1
          %s1536 = scalar_lea.vmem [#allocation31], %s1535
          %1537 = dma.done %s1534, 16
        $region172: #{tpu_custom_call.1} parent=167 // pred_fallthru
          _
      $region168: #{tpu_custom_call.1} parent=5 // pred_fallthru
        _
    $region6: #{tpu_custom_call.1} parent=1 // loop_footer
      %s46 = sadd.s32 1, %s42
    $region7: #{tpu_custom_call.1} parent=1 // loop_footer_branch
      %41 = sbr.rel target = $region3
    $region8: #{tpu_custom_call.1} parent=1 // loop_exit
      _
    %1538 = vsyncpa [#allocation5], 1
    %s1539 = scalar_lea.sflag [#allocation5], 1
    %1540 = vsyncpa %s1539, 1
    %1541 = vsyncpa [#allocation8], 1
    %s1542 = scalar_lea.sflag [#allocation8], 1
    %1543 = vsyncpa %s1542, 1
    %1544 = vsyncpa [#allocation11], 1
    %1545 = vsyncpa [#allocation14], 1
    %1546 = vsyncpa [#allocation17], 1
    %1547 = vsyncpa [#allocation20], 1
    %1548 = vsyncpa [#allocation23], 1
    %1549 = vsyncpa [#allocation26], 1
    %1550 = vsyncpa [#allocation29], 1
    %1551 = vsyncpa [#allocation6], 1
    %s1552 = scalar_lea.sflag [#allocation6], 1
    %1553 = vsyncpa %s1552, 1

// kernel: tpu_custom_call.1
$region0: #{tpu_custom_call.1}
  #allocation0 [shape = 'u32[]', space=smem, size = 0x4, offset = 0x4, fixed_abs, tag = 'smem constant byte address 0x4 - core index']
  #allocation1 [shape = 'u32[144,128]{1,0:T(1,128)}', space=vmem, size = 0x12000, scoped, tag = 'internal scratch']
  #allocation2 [shape = 'f32[1,32]{1,0:T(1,128)}', space=vmem, size = 0x200, scoped, tag = 'scratch operand']
  #allocation3 [shape = 'f32[1,1]{1,0:T(1,128)S(1)}', space=vmem, size = 0x200, scoped, tag = 'scoped memory for tpu_custom_call.1']
  %s0 = inlined_call_operand.hbm [shape: f32[2,8,32], index: 0, kind: input, shape index: {}]
  %s1 = inlined_call_operand.hbm [shape: f32[2,1,8], index: 1, kind: input, shape index: {}]
  %s2 = inlined_call_operand.hbm [shape: f32[32,32], index: 2, kind: input, shape index: {}]
  %s3 = inlined_call_operand.hbm [shape: f32[1,32], index: 3, kind: input, shape index: {}]
  %s4 = inlined_call_operand.hbm [shape: f32[32,64], index: 4, kind: input, shape index: {}]
  %s5 = inlined_call_operand.hbm [shape: f32[1,64], index: 5, kind: input, shape index: {}]
  %s6 = inlined_call_operand.hbm [shape: f32[32,32], index: 6, kind: input, shape index: {}]
  %s7 = inlined_call_operand.hbm [shape: f32[1,32], index: 7, kind: input, shape index: {}]
  %s8 = inlined_call_operand.hbm [shape: f32[2,32], index: 8, kind: input, shape index: {}]
  %s9 = inlined_call_operand.hbm [shape: f32[32,64], index: 9, kind: input, shape index: {}]
  %s10 = inlined_call_operand.hbm [shape: f32[1,64], index: 10, kind: input, shape index: {}]
  %s11 = inlined_call_operand.hbm [shape: f32[64,32], index: 11, kind: input, shape index: {}]
  %s12 = inlined_call_operand.hbm [shape: f32[1,32], index: 12, kind: input, shape index: {}]
  %s13 = inlined_call_operand.hbm [shape: f32[2,32], index: 13, kind: input, shape index: {}]
  %s14 = inlined_call_operand.hbm [shape: f32[32,18], index: 14, kind: input, shape index: {}]
  %s15 = inlined_call_operand.hbm [shape: f32[1,18], index: 15, kind: input, shape index: {}]
  %s16 = inlined_call_operand.hbm [shape: f32[16,1], index: 16, kind: input, shape index: {}]
  %s17 = inlined_call_operand.<no memory space> [shape: f32[1,1], index: 17, kind: input, shape index: {}]
  %s18 = inlined_call_operand.hbm [shape: f32[2,1,128], index: 18, kind: output, shape index: {}]
  %s19 = sld [smem:[#allocation0]]
  $region173: #{tpu_custom_call.1} parent=0
    _
  %s21 = ssub.s32 1, %s19
  %s22 = scalar_select 0, %s21, %s19
  %v23 = vstv %s17
  %24 = vst [vmem:[#allocation3] sm:$0x1] %v23
  $region1: #{tpu_custom_call.1} parent=0
    #allocation4 [shape = 'u8[8192]{0}', space=vmem, size = 0x2000, scoped, tag = 'input window, operand 0']
    #allocation5 [shape = 's32[2]{0}', space=sflag, size = 0x8, scoped, tag = 'scoped memory for tpu_custom_call.1']
    #allocation6 [shape = 's32[2]{0}', space=sflag, size = 0x8, scoped, tag = 'scoped memory for tpu_custom_call.1']
    #allocation7 [shape = 'u8[1024]{0}', space=vmem, size = 0x400, scoped, tag = 'input window, operand 1']
    #allocation8 [shape = 's32[2]{0}', space=sflag, size = 0x8, scoped, tag = 'scoped memory for tpu_custom_call.1']
    #allocation9 [shape = 'u8[16384]{0}', space=vmem, size = 0x4000, scoped, tag = 'input window, operand 2, single buffered']
    #allocation10 [shape = 'u8[512]{0}', space=vmem, size = 0x400, scoped, tag = 'input window, operand 3, single buffered']
    #allocation11 [shape = 's32[1]{0}', space=sflag, size = 0x4, scoped, tag = 'scoped memory for tpu_custom_call.1']
    #allocation12 [shape = 'u8[16384]{0}', space=vmem, size = 0x4000, scoped, tag = 'input window, operand 4, single buffered']
    #allocation13 [shape = 'u8[512]{0}', space=vmem, size = 0x400, scoped, tag = 'input window, operand 5, single buffered']
    #allocation14 [shape = 's32[1]{0}', space=sflag, size = 0x4, scoped, tag = 'scoped memory for tpu_custom_call.1']
    #allocation15 [shape = 'u8[16384]{0}', space=vmem, size = 0x4000, scoped, tag = 'input window, operand 6, single buffered']
    #allocation16 [shape = 'u8[512]{0}', space=vmem, size = 0x400, scoped, tag = 'input window, operand 7, single buffered']
    #allocation17 [shape = 's32[1]{0}', space=sflag, size = 0x4, scoped, tag = 'scoped memory for tpu_custom_call.1']
    #allocation18 [shape = 'u8[1024]{0}', space=vmem, size = 0x400, scoped, tag = 'input window, operand 8, single buffered']
    #allocation19 [shape = 'u8[16384]{0}', space=vmem, size = 0x4000, scoped, tag = 'input window, operand 9, single buffered']
    #allocation20 [shape = 's32[1]{0}', space=sflag, size = 0x4, scoped, tag = 'scoped memory for tpu_custom_call.1']
    #allocation21 [shape = 'u8[512]{0}', space=vmem, size = 0x400, scoped, tag = 'input window, operand 10, single buffered']
    #allocation22 [shape = 'u8[32768]{0}', space=vmem, size = 0x8000, scoped, tag = 'input window, operand 11, single buffered']
    #allocation23 [shape = 's32[1]{0}', space=sflag, size = 0x4, scoped, tag = 'scoped memory for tpu_custom_call.1']
    #allocation24 [shape = 'u8[512]{0}', space=vmem, size = 0x400, scoped, tag = 'input window, operand 12, single buffered']
    #allocation25 [shape = 'u8[1024]{0}', space=vmem, size = 0x400, scoped, tag = 'input window, operand 13, single buffered']
    #allocation26 [shape = 's32[1]{0}', space=sflag, size = 0x4, scoped, tag = 'scoped memory for tpu_custom_call.1']
    #allocation27 [shape = 'u8[16384]{0}', space=vmem, size = 0x4000, scoped, tag = 'input window, operand 14, single buffered']
    #allocation28 [shape = 'u8[512]{0}', space=vmem, size = 0x400, scoped, tag = 'input window, operand 15, single buffered']
    #allocation29 [shape = 's32[1]{0}', space=sflag, size = 0x4, scoped, tag = 'scoped memory for tpu_custom_call.1']
    #allocation30 [shape = 'u8[8192]{0}', space=vmem, size = 0x2000, scoped, tag = 'input window, operand 16, single buffered']
    #allocation31 [shape = 'u8[1024]{0}', space=vmem, size = 0x400, scoped, tag = 'output window, operand 0']
    %25 = vsyncpa [#allocation5], 0
    %s26 = scalar_lea.sflag [#allocation5], 1
    %27 = vsyncpa %s26, 0
    %28 = vsyncpa [#allocation8], 0
    %s29 = scalar_lea.sflag [#allocation8], 1
    %30 = vsyncpa %s29, 0
    %31 = vsyncpa [#allocation11], 0
    %32 = vsyncpa [#allocation14], 0
    %33 = vsyncpa [#allocation17], 0
    %34 = vsyncpa [#allocation20], 0
    %35 = vsyncpa [#allocation23], 0
    %36 = vsyncpa [#allocation26], 0
    %37 = vsyncpa [#allocation29], 0
    %38 = vsyncpa [#allocation6], 0
    %s39 = scalar_lea.sflag [#allocation6], 1
    %40 = vsyncpa %s39, 0
    loop: start=0, step=1, limit=4
    $region2: #{tpu_custom_call.1} parent=1 // loop_pre_header
      _
    $region3: #{tpu_custom_call.1} parent=1 // loop_header
      %s42 = sphi 0, %s46
      %p43 = scmp.ge.s32.totalorder %s42, 4
      %s52 = sphi 0, %s54
      %s55 = sphi 0, %s52
      %s56 = sphi 0, %s55
      %s72 = sphi 0, %s56
      %s78 = sphi 0, %s80
      %s81 = sphi 0, %s78
      %s82 = sphi 0, %s81
      %s98 = sphi 0, %s82
      %s102 = sphi 0, %s102
      %s104 = sphi 0, %s102
      %s105 = sphi 0, %s104
      %s119 = sphi 0, %s105
      %s123 = sphi 0, %s123
      %s125 = sphi 0, %s123
      %s126 = sphi 0, %s125
      %s140 = sphi 0, %s126
      %s144 = sphi 0, %s144
      %s146 = sphi 0, %s144
      %s147 = sphi 0, %s146
      %s161 = sphi 0, %s147
      %s165 = sphi 0, %s165
      %s167 = sphi 0, %s165
      %s168 = sphi 0, %s167
      %s182 = sphi 0, %s168
      %s186 = sphi 0, %s186
      %s188 = sphi 0, %s186
      %s189 = sphi 0, %s188
      %s203 = sphi 0, %s189
      %s207 = sphi 0, %s207
      %s209 = sphi 0, %s207
      %s210 = sphi 0, %s209
      %s224 = sphi 0, %s210
      %s228 = sphi 0, %s228
      %s230 = sphi 0, %s228
      %s231 = sphi 0, %s230
      %s245 = sphi 0, %s231
      %s249 = sphi 0, %s249
      %s251 = sphi 0, %s249
      %s252 = sphi 0, %s251
      %s266 = sphi 0, %s252
      %s270 = sphi 0, %s270
      %s272 = sphi 0, %s270
      %s273 = sphi 0, %s272
      %s287 = sphi 0, %s273
      %s291 = sphi 0, %s291
      %s293 = sphi 0, %s291
      %s294 = sphi 0, %s293
      %s308 = sphi 0, %s294
      %s312 = sphi 0, %s312
      %s314 = sphi 0, %s312
      %s315 = sphi 0, %s314
      %s329 = sphi 0, %s315
      %s333 = sphi 0, %s333
      %s335 = sphi 0, %s333
      %s336 = sphi 0, %s335
      %s350 = sphi 0, %s336
      %s354 = sphi 0, %s354
      %s356 = sphi 0, %s354
      %s357 = sphi 0, %s356
      %s371 = sphi 0, %s357
      %s375 = sphi 0, %s375
      %s377 = sphi 0, %s375
      %s378 = sphi 0, %s377
      %s392 = sphi 0, %s378
      %s396 = sphi 0, %s396
      %s398 = sphi 0, %s396
      %s399 = sphi 0, %s398
      %s413 = sphi 0, %s399
      %s417 = sphi 0, %s417
      %s419 = sphi 0, %s417
      %s420 = sphi 0, %s419
      %s434 = sphi 0, %s420
      %s440 = sphi 0, %s442
      %s443 = sphi 0, %s440
      %s444 = sphi 0, %s443
      %s460 = sphi 0, %s444
    $region4: #{tpu_custom_call.1} parent=1 // loop_header_branch
      %45 = sbr.rel (%p43) target = $region8
    $region5: #{tpu_custom_call.1} parent=1 // loop_body
      %s47 = ssub.s32 %s42, 1
      %s48 = ssub.s32 %s42, 2
      %s49 = sadd.s32 %s42, 1
      %s50 = ssub.s32 %s42, %s49
      %p51 = scmp.eq.s32.totalorder %s50, 0
      %s53 = sadd.s32 %s52, 1
      %s54 = scalar_select %p51, %s52, %s53
      %p57 = pneg %p51
      %p58 = scmp.eq.s32.totalorder %s42, 1
      %p59 = por %p57, %p58
      %p60 = scmp.ne.s32.totalorder %s52, %s55
      %p61 = scmp.eq.s32.totalorder %s42, 0
      %p62 = por %p60, %p61
      %p63 = scmp.ne.s32.totalorder %s52, %s55
      %p64 = scmp.eq.s32.totalorder %s47, 1
      %p65 = por %p63, %p64
      %p66 = scmp.ne.s32.totalorder %s55, %s56
      %p67 = scmp.eq.s32.totalorder %s47, 0
      %p68 = por %p66, %p67
      %p69 = scmp.ne.s32.totalorder %s55, %s56
      %p70 = scmp.eq.s32.totalorder %s48, 1
      %p71 = por %p69, %p70
      %p73 = scmp.ne.s32.totalorder %s56, %s72
      %p74 = scmp.eq.s32.totalorder %s48, 0
      %p75 = por %p73, %p74
      %s76 = ssub.s32 %s42, %s49
      %p77 = scmp.eq.s32.totalorder %s76, 0
      %s79 = sadd.s32 %s78, 1
      %s80 = scalar_select %p77, %s78, %s79
      %p83 = pneg %p77
      %p84 = scmp.eq.s32.totalorder %s42, 1
      %p85 = por %p83, %p84
      %p86 = scmp.ne.s32.totalorder %s78, %s81
      %p87 = scmp.eq.s32.totalorder %s42, 0
      %p88 = por %p86, %p87
      %p89 = scmp.ne.s32.totalorder %s78, %s81
      %p90 = scmp.eq.s32.totalorder %s47, 1
      %p91 = por %p89, %p90
      %p92 = scmp.ne.s32.totalorder %s81, %s82
      %p93 = scmp.eq.s32.totalorder %s47, 0
      %p94 = por %p92, %p93
      %p95 = scmp.ne.s32.totalorder %s81, %s82
      %p96 = scmp.eq.s32.totalorder %s48, 1
      %p97 = por %p95, %p96
      %p99 = scmp.ne.s32.totalorder %s82, %s98
      %p100 = scmp.eq.s32.totalorder %s48, 0
      %p101 = por %p99, %p100
      %s103 = sadd.s32 %s102, 1
      %p106 = scmp.eq.s32.totalorder %s42, 1
      %p107 = scmp.ne.s32.totalorder %s102, %s104
      %p108 = scmp.eq.s32.totalorder %s42, 0
      %p109 = por %p107, %p108
      %p110 = scmp.ne.s32.totalorder %s102, %s104
      %p111 = scmp.eq.s32.totalorder %s47, 1
      %p112 = por %p110, %p111
      %p113 = scmp.ne.s32.totalorder %s104, %s105
      %p114 = scmp.eq.s32.totalorder %s47, 0
      %p115 = por %p113, %p114
      %p116 = scmp.ne.s32.totalorder %s104, %s105
      %p117 = scmp.eq.s32.totalorder %s48, 1
      %p118 = por %p116, %p117
      %p120 = scmp.ne.s32.totalorder %s105, %s119
      %p121 = scmp.eq.s32.totalorder %s48, 0
      %p122 = por %p120, %p121
      %s124 = sadd.s32 %s123, 1
      %p127 = scmp.eq.s32.totalorder %s42, 1
      %p128 = scmp.ne.s32.totalorder %s123, %s125
      %p129 = scmp.eq.s32.totalorder %s42, 0
      %p130 = por %p128, %p129
      %p131 = scmp.ne.s32.totalorder %s123, %s125
      %p132 = scmp.eq.s32.totalorder %s47, 1
      %p133 = por %p131, %p132
      %p134 = scmp.ne.s32.totalorder %s125, %s126
      %p135 = scmp.eq.s32.totalorder %s47, 0
      %p136 = por %p134, %p135
      %p137 = scmp.ne.s32.totalorder %s125, %s126
      %p138 = scmp.eq.s32.totalorder %s48, 1
      %p139 = por %p137, %p138
      %p141 = scmp.ne.s32.totalorder %s126, %s140
      %p142 = scmp.eq.s32.totalorder %s48, 0
      %p143 = por %p141, %p142
      %s145 = sadd.s32 %s144, 1
      %p148 = scmp.eq.s32.totalorder %s42, 1
      %p149 = scmp.ne.s32.totalorder %s144, %s146
      %p150 = scmp.eq.s32.totalorder %s42, 0
      %p151 = por %p149, %p150
      %p152 = scmp.ne.s32.totalorder %s144, %s146
      %p153 = scmp.eq.s32.totalorder %s47, 1
      %p154 = por %p152, %p153
      %p155 = scmp.ne.s32.totalorder %s146, %s147
      %p156 = scmp.eq.s32.totalorder %s47, 0
      %p157 = por %p155, %p156
      %p158 = scmp.ne.s32.totalorder %s146, %s147
      %p159 = scmp.eq.s32.totalorder %s48, 1
      %p160 = por %p158, %p159
      %p162 = scmp.ne.s32.totalorder %s147, %s161
      %p163 = scmp.eq.s32.totalorder %s48, 0
      %p164 = por %p162, %p163
      %s166 = sadd.s32 %s165, 1
      %p169 = scmp.eq.s32.totalorder %s42, 1
      %p170 = scmp.ne.s32.totalorder %s165, %s167
      %p171 = scmp.eq.s32.totalorder %s42, 0
      %p172 = por %p170, %p171
      %p173 = scmp.ne.s32.totalorder %s165, %s167
      %p174 = scmp.eq.s32.totalorder %s47, 1
      %p175 = por %p173, %p174
      %p176 = scmp.ne.s32.totalorder %s167, %s168
      %p177 = scmp.eq.s32.totalorder %s47, 0
      %p178 = por %p176, %p177
      %p179 = scmp.ne.s32.totalorder %s167, %s168
      %p180 = scmp.eq.s32.totalorder %s48, 1
      %p181 = por %p179, %p180
      %p183 = scmp.ne.s32.totalorder %s168, %s182
      %p184 = scmp.eq.s32.totalorder %s48, 0
      %p185 = por %p183, %p184
      %s187 = sadd.s32 %s186, 1
      %p190 = scmp.eq.s32.totalorder %s42, 1
      %p191 = scmp.ne.s32.totalorder %s186, %s188
      %p192 = scmp.eq.s32.totalorder %s42, 0
      %p193 = por %p191, %p192
      %p194 = scmp.ne.s32.totalorder %s186, %s188
      %p195 = scmp.eq.s32.totalorder %s47, 1
      %p196 = por %p194, %p195
      %p197 = scmp.ne.s32.totalorder %s188, %s189
      %p198 = scmp.eq.s32.totalorder %s47, 0
      %p199 = por %p197, %p198
      %p200 = scmp.ne.s32.totalorder %s188, %s189
      %p201 = scmp.eq.s32.totalorder %s48, 1
      %p202 = por %p200, %p201
      %p204 = scmp.ne.s32.totalorder %s189, %s203
      %p205 = scmp.eq.s32.totalorder %s48, 0
      %p206 = por %p204, %p205
      %s208 = sadd.s32 %s207, 1
      %p211 = scmp.eq.s32.totalorder %s42, 1
      %p212 = scmp.ne.s32.totalorder %s207, %s209
      %p213 = scmp.eq.s32.totalorder %s42, 0
      %p214 = por %p212, %p213
      %p215 = scmp.ne.s32.totalorder %s207, %s209
      %p216 = scmp.eq.s32.totalorder %s47, 1
      %p217 = por %p215, %p216
      %p218 = scmp.ne.s32.totalorder %s209, %s210
      %p219 = scmp.eq.s32.totalorder %s47, 0
      %p220 = por %p218, %p219
      %p221 = scmp.ne.s32.totalorder %s209, %s210
      %p222 = scmp.eq.s32.totalorder %s48, 1
      %p223 = por %p221, %p222
      %p225 = scmp.ne.s32.totalorder %s210, %s224
      %p226 = scmp.eq.s32.totalorder %s48, 0
      %p227 = por %p225, %p226
      %s229 = sadd.s32 %s228, 1
      %p232 = scmp.eq.s32.totalorder %s42, 1
      %p233 = scmp.ne.s32.totalorder %s228, %s230
      %p234 = scmp.eq.s32.totalorder %s42, 0
      %p235 = por %p233, %p234
      %p236 = scmp.ne.s32.totalorder %s228, %s230
      %p237 = scmp.eq.s32.totalorder %s47, 1
      %p238 = por %p236, %p237
      %p239 = scmp.ne.s32.totalorder %s230, %s231
      %p240 = scmp.eq.s32.totalorder %s47, 0
      %p241 = por %p239, %p240
      %p242 = scmp.ne.s32.totalorder %s230, %s231
      %p243 = scmp.eq.s32.totalorder %s48, 1
      %p244 = por %p242, %p243
      %p246 = scmp.ne.s32.totalorder %s231, %s245
      %p247 = scmp.eq.s32.totalorder %s48, 0
      %p248 = por %p246, %p247
      %s250 = sadd.s32 %s249, 1
      %p253 = scmp.eq.s32.totalorder %s42, 1
      %p254 = scmp.ne.s32.totalorder %s249, %s251
      %p255 = scmp.eq.s32.totalorder %s42, 0
      %p256 = por %p254, %p255
      %p257 = scmp.ne.s32.totalorder %s249, %s251
      %p258 = scmp.eq.s32.totalorder %s47, 1
      %p259 = por %p257, %p258
      %p260 = scmp.ne.s32.totalorder %s251, %s252
      %p261 = scmp.eq.s32.totalorder %s47, 0
      %p262 = por %p260, %p261
      %p263 = scmp.ne.s32.totalorder %s251, %s252
      %p264 = scmp.eq.s32.totalorder %s48, 1
      %p265 = por %p263, %p264
      %p267 = scmp.ne.s32.totalorder %s252, %s266
      %p268 = scmp.eq.s32.totalorder %s48, 0
      %p269 = por %p267, %p268
      %s271 = sadd.s32 %s270, 1
      %p274 = scmp.eq.s32.totalorder %s42, 1
      %p275 = scmp.ne.s32.totalorder %s270, %s272
      %p276 = scmp.eq.s32.totalorder %s42, 0
      %p277 = por %p275, %p276
      %p278 = scmp.ne.s32.totalorder %s270, %s272
      %p279 = scmp.eq.s32.totalorder %s47, 1
      %p280 = por %p278, %p279
      %p281 = scmp.ne.s32.totalorder %s272, %s273
      %p282 = scmp.eq.s32.totalorder %s47, 0
      %p283 = por %p281, %p282
      %p284 = scmp.ne.s32.totalorder %s272, %s273
      %p285 = scmp.eq.s32.totalorder %s48, 1
      %p286 = por %p284, %p285
      %p288 = scmp.ne.s32.totalorder %s273, %s287
      %p289 = scmp.eq.s32.totalorder %s48, 0
      %p290 = por %p288, %p289
      %s292 = sadd.s32 %s291, 1
      %p295 = scmp.eq.s32.totalorder %s42, 1
      %p296 = scmp.ne.s32.totalorder %s291, %s293
      %p297 = scmp.eq.s32.totalorder %s42, 0
      %p298 = por %p296, %p297
      %p299 = scmp.ne.s32.totalorder %s291, %s293
      %p300 = scmp.eq.s32.totalorder %s47, 1
      %p301 = por %p299, %p300
      %p302 = scmp.ne.s32.totalorder %s293, %s294
      %p303 = scmp.eq.s32.totalorder %s47, 0
      %p304 = por %p302, %p303
      %p305 = scmp.ne.s32.totalorder %s293, %s294
      %p306 = scmp.eq.s32.totalorder %s48, 1
      %p307 = por %p305, %p306
      %p309 = scmp.ne.s32.totalorder %s294, %s308
      %p310 = scmp.eq.s32.totalorder %s48, 0
      %p311 = por %p309, %p310
      %s313 = sadd.s32 %s312, 1
      %p316 = scmp.eq.s32.totalorder %s42, 1
      %p317 = scmp.ne.s32.totalorder %s312, %s314
      %p318 = scmp.eq.s32.totalorder %s42, 0
      %p319 = por %p317, %p318
      %p320 = scmp.ne.s32.totalorder %s312, %s314
      %p321 = scmp.eq.s32.totalorder %s47, 1
      %p322 = por %p320, %p321
      %p323 = scmp.ne.s32.totalorder %s314, %s315
      %p324 = scmp.eq.s32.totalorder %s47, 0
      %p325 = por %p323, %p324
      %p326 = scmp.ne.s32.totalorder %s314, %s315
      %p327 = scmp.eq.s32.totalorder %s48, 1
      %p328 = por %p326, %p327
      %p330 = scmp.ne.s32.totalorder %s315, %s329
      %p331 = scmp.eq.s32.totalorder %s48, 0
      %p332 = por %p330, %p331
      %s334 = sadd.s32 %s333, 1
      %p337 = scmp.eq.s32.totalorder %s42, 1
      %p338 = scmp.ne.s32.totalorder %s333, %s335
      %p339 = scmp.eq.s32.totalorder %s42, 0
      %p340 = por %p338, %p339
      %p341 = scmp.ne.s32.totalorder %s333, %s335
      %p342 = scmp.eq.s32.totalorder %s47, 1
      %p343 = por %p341, %p342
      %p344 = scmp.ne.s32.totalorder %s335, %s336
      %p345 = scmp.eq.s32.totalorder %s47, 0
      %p346 = por %p344, %p345
      %p347 = scmp.ne.s32.totalorder %s335, %s336
      %p348 = scmp.eq.s32.totalorder %s48, 1
      %p349 = por %p347, %p348
      %p351 = scmp.ne.s32.totalorder %s336, %s350
      %p352 = scmp.eq.s32.totalorder %s48, 0
      %p353 = por %p351, %p352
      %s355 = sadd.s32 %s354, 1
      %p358 = scmp.eq.s32.totalorder %s42, 1
      %p359 = scmp.ne.s32.totalorder %s354, %s356
      %p360 = scmp.eq.s32.totalorder %s42, 0
      %p361 = por %p359, %p360
      %p362 = scmp.ne.s32.totalorder %s354, %s356
      %p363 = scmp.eq.s32.totalorder %s47, 1
      %p364 = por %p362, %p363
      %p365 = scmp.ne.s32.totalorder %s356, %s357
      %p366 = scmp.eq.s32.totalorder %s47, 0
      %p367 = por %p365, %p366
      %p368 = scmp.ne.s32.totalorder %s356, %s357
      %p369 = scmp.eq.s32.totalorder %s48, 1
      %p370 = por %p368, %p369
      %p372 = scmp.ne.s32.totalorder %s357, %s371
      %p373 = scmp.eq.s32.totalorder %s48, 0
      %p374 = por %p372, %p373
      %s376 = sadd.s32 %s375, 1
      %p379 = scmp.eq.s32.totalorder %s42, 1
      %p380 = scmp.ne.s32.totalorder %s375, %s377
      %p381 = scmp.eq.s32.totalorder %s42, 0
      %p382 = por %p380, %p381
      %p383 = scmp.ne.s32.totalorder %s375, %s377
      %p384 = scmp.eq.s32.totalorder %s47, 1
      %p385 = por %p383, %p384
      %p386 = scmp.ne.s32.totalorder %s377, %s378
      %p387 = scmp.eq.s32.totalorder %s47, 0
      %p388 = por %p386, %p387
      %p389 = scmp.ne.s32.totalorder %s377, %s378
      %p390 = scmp.eq.s32.totalorder %s48, 1
      %p391 = por %p389, %p390
      %p393 = scmp.ne.s32.totalorder %s378, %s392
      %p394 = scmp.eq.s32.totalorder %s48, 0
      %p395 = por %p393, %p394
      %s397 = sadd.s32 %s396, 1
      %p400 = scmp.eq.s32.totalorder %s42, 1
      %p401 = scmp.ne.s32.totalorder %s396, %s398
      %p402 = scmp.eq.s32.totalorder %s42, 0
      %p403 = por %p401, %p402
      %p404 = scmp.ne.s32.totalorder %s396, %s398
      %p405 = scmp.eq.s32.totalorder %s47, 1
      %p406 = por %p404, %p405
      %p407 = scmp.ne.s32.totalorder %s398, %s399
      %p408 = scmp.eq.s32.totalorder %s47, 0
      %p409 = por %p407, %p408
      %p410 = scmp.ne.s32.totalorder %s398, %s399
      %p411 = scmp.eq.s32.totalorder %s48, 1
      %p412 = por %p410, %p411
      %p414 = scmp.ne.s32.totalorder %s399, %s413
      %p415 = scmp.eq.s32.totalorder %s48, 0
      %p416 = por %p414, %p415
      %s418 = sadd.s32 %s417, 1
      %p421 = scmp.eq.s32.totalorder %s42, 1
      %p422 = scmp.ne.s32.totalorder %s417, %s419
      %p423 = scmp.eq.s32.totalorder %s42, 0
      %p424 = por %p422, %p423
      %p425 = scmp.ne.s32.totalorder %s417, %s419
      %p426 = scmp.eq.s32.totalorder %s47, 1
      %p427 = por %p425, %p426
      %p428 = scmp.ne.s32.totalorder %s419, %s420
      %p429 = scmp.eq.s32.totalorder %s47, 0
      %p430 = por %p428, %p429
      %p431 = scmp.ne.s32.totalorder %s419, %s420
      %p432 = scmp.eq.s32.totalorder %s48, 1
      %p433 = por %p431, %p432
      %p435 = scmp.ne.s32.totalorder %s420, %s434
      %p436 = scmp.eq.s32.totalorder %s48, 0
      %p437 = por %p435, %p436
      %s438 = ssub.s32 %s42, %s49
      %p439 = scmp.eq.s32.totalorder %s438, 0
      %s441 = sadd.s32 %s440, 1
      %s442 = scalar_select %p439, %s440, %s441
      %p445 = pneg %p439
      %p446 = scmp.eq.s32.totalorder %s42, 1
      %p447 = por %p445, %p446
      %p448 = scmp.ne.s32.totalorder %s440, %s443
      %p449 = scmp.eq.s32.totalorder %s42, 0
      %p450 = por %p448, %p449
      %p451 = scmp.ne.s32.totalorder %s440, %s443
      %p452 = scmp.eq.s32.totalorder %s47, 1
      %p453 = por %p451, %p452
      %p454 = scmp.ne.s32.totalorder %s443, %s444
      %p455 = scmp.eq.s32.totalorder %s47, 0
      %p456 = por %p454, %p455
      %p457 = scmp.ne.s32.totalorder %s443, %s444
      %p458 = scmp.eq.s32.totalorder %s48, 1
      %p459 = por %p457, %p458
      %p461 = scmp.ne.s32.totalorder %s444, %s460
      %p462 = scmp.eq.s32.totalorder %s48, 0
      %p463 = por %p461, %p462
      %p464 = scmp.le.s32.totalorder 1, %s42
      %p465 = scmp.lt.s32.totalorder %s42, 3
      %p466 = pnand %p464, %p465
      %p467 = pneg %p466
      // Predicated region
      $region9: #{tpu_custom_call.1} parent=5 // pred_check
        _
      $region10: #{tpu_custom_call.1} parent=5 // pred_check_branch
        %469 = sbr.rel (%p466) target = $region12
      $region11: #{tpu_custom_call.1} parent=5 // pred_region
        %s470 = ssub.s32 %s42, 1
        // Predicated region
        $region13: #{tpu_custom_call.1} parent=11 // pred_check
          %p471 = pneg %p115
        $region14: #{tpu_custom_call.1} parent=11 // pred_check_branch
          %473 = sbr.rel (%p471) target = $region16
        $region15: #{tpu_custom_call.1} parent=11 // pred_region
          %s475 = ssub.s32 512, 512
          %476 = vsyncadd [#allocation8], %s475
          %s477 = sshll.u32 [#allocation9], 4
          %s478 = int_to_ptr.vmem [resolvable:$true] %s477
          %483 = dma.hbm_to_vmem [thread:$0]  %s2, 512, %s478, [#allocation8], 128, 128, 8
        $region16: #{tpu_custom_call.1} parent=11 // pred_fallthru
          _
        // Predicated region
        $region17: #{tpu_custom_call.1} parent=11 // pred_check
          %p484 = pneg %p136
        $region18: #{tpu_custom_call.1} parent=11 // pred_check_branch
          %486 = sbr.rel (%p484) target = $region20
        $region19: #{tpu_custom_call.1} parent=11 // pred_region
          %s488 = ssub.s32 16, 16
          %489 = vsyncadd [#allocation11], %s488
          %s491 = sshll.u32 [#allocation10], 4
          %s492 = int_to_ptr.vmem [resolvable:$true] %s491
          %494 = dma.hbm_to_vmem [thread:$0]  %s3, 16, %s492, [#allocation11]
        $region20: #{tpu_custom_call.1} parent=11 // pred_fallthru
          _
        // Predicated region
        $region21: #{tpu_custom_call.1} parent=11 // pred_check
          %p495 = pneg %p157
        $region22: #{tpu_custom_call.1} parent=11 // pred_check_branch
          %497 = sbr.rel (%p495) target = $region24
        $region23: #{tpu_custom_call.1} parent=11 // pred_region
          %s499 = ssub.s32 512, 512
          %500 = vsyncadd [#allocation11], %s499
          %s501 = sshll.u32 [#allocation12], 4
          %s502 = int_to_ptr.vmem [resolvable:$true] %s501
          %507 = dma.hbm_to_vmem [thread:$0]  %s4, 512, %s502, [#allocation11], 128, 128, 8
        $region24: #{tpu_custom_call.1} parent=11 // pred_fallthru
          _
        // Predicated region
        $region25: #{tpu_custom_call.1} parent=11 // pred_check
          %p508 = pneg %p178
        $region26: #{tpu_custom_call.1} parent=11 // pred_check_branch
          %510 = sbr.rel (%p508) target = $region28
        $region27: #{tpu_custom_call.1} parent=11 // pred_region
          %s512 = ssub.s32 16, 16
          %513 = vsyncadd [#allocation14], %s512
          %s515 = sshll.u32 [#allocation13], 4
          %s516 = int_to_ptr.vmem [resolvable:$true] %s515
          %518 = dma.hbm_to_vmem [thread:$0]  %s5, 16, %s516, [#allocation14]
        $region28: #{tpu_custom_call.1} parent=11 // pred_fallthru
          _
        // Predicated region
        $region29: #{tpu_custom_call.1} parent=11 // pred_check
          %p519 = pneg %p199
        $region30: #{tpu_custom_call.1} parent=11 // pred_check_branch
          %521 = sbr.rel (%p519) target = $region32
        $region31: #{tpu_custom_call.1} parent=11 // pred_region
          %s523 = ssub.s32 512, 512
          %524 = vsyncadd [#allocation14], %s523
          %s525 = sshll.u32 [#allocation15], 4
          %s526 = int_to_ptr.vmem [resolvable:$true] %s525
          %531 = dma.hbm_to_vmem [thread:$0]  %s6, 512, %s526, [#allocation14], 128, 128, 8
        $region32: #{tpu_custom_call.1} parent=11 // pred_fallthru
          _
        // Predicated region
        $region33: #{tpu_custom_call.1} parent=11 // pred_check
          %p532 = pneg %p220
        $region34: #{tpu_custom_call.1} parent=11 // pred_check_branch
          %534 = sbr.rel (%p532) target = $region36
        $region35: #{tpu_custom_call.1} parent=11 // pred_region
          %s536 = ssub.s32 16, 16
          %537 = vsyncadd [#allocation17], %s536
          %s539 = sshll.u32 [#allocation16], 4
          %s540 = int_to_ptr.vmem [resolvable:$true] %s539
          %542 = dma.hbm_to_vmem [thread:$0]  %s7, 16, %s540, [#allocation17]
        $region36: #{tpu_custom_call.1} parent=11 // pred_fallthru
          _
        // Predicated region
        $region37: #{tpu_custom_call.1} parent=11 // pred_check
          %p543 = pneg %p241
        $region38: #{tpu_custom_call.1} parent=11 // pred_check_branch
          %545 = sbr.rel (%p543) target = $region40
        $region39: #{tpu_custom_call.1} parent=11 // pred_region
          %s547 = ssub.s32 32, 32
          %548 = vsyncadd [#allocation17], %s547
          %s550 = sshll.u32 [#allocation18], 4
          %s551 = int_to_ptr.vmem [resolvable:$true] %s550
          %553 = dma.hbm_to_vmem [thread:$0]  %s8, 32, %s551, [#allocation17]
        $region40: #{tpu_custom_call.1} parent=11 // pred_fallthru
          _
        // Predicated region
        $region41: #{tpu_custom_call.1} parent=11 // pred_check
          %p554 = pneg %p262
        $region42: #{tpu_custom_call.1} parent=11 // pred_check_branch
          %556 = sbr.rel (%p554) target = $region44
        $region43: #{tpu_custom_call.1} parent=11 // pred_region
          %s558 = ssub.s32 512, 512
          %559 = vsyncadd [#allocation20], %s558
          %s560 = sshll.u32 [#allocation19], 4
          %s561 = int_to_ptr.vmem [resolvable:$true] %s560
          %566 = dma.hbm_to_vmem [thread:$0]  %s9, 512, %s561, [#allocation20], 128, 128, 8
        $region44: #{tpu_custom_call.1} parent=11 // pred_fallthru
          _
        // Predicated region
        $region45: #{tpu_custom_call.1} parent=11 // pred_check
          %p567 = pneg %p283
        $region46: #{tpu_custom_call.1} parent=11 // pred_check_branch
          %569 = sbr.rel (%p567) target = $region48
        $region47: #{tpu_custom_call.1} parent=11 // pred_region
          %s571 = ssub.s32 16, 16
          %572 = vsyncadd [#allocation20], %s571
          %s574 = sshll.u32 [#allocation21], 4
          %s575 = int_to_ptr.vmem [resolvable:$true] %s574
          %577 = dma.hbm_to_vmem [thread:$0]  %s10, 16, %s575, [#allocation20]
        $region48: #{tpu_custom_call.1} parent=11 // pred_fallthru
          _
        // Predicated region
        $region49: #{tpu_custom_call.1} parent=11 // pred_check
          %p578 = pneg %p304
        $region50: #{tpu_custom_call.1} parent=11 // pred_check_branch
          %580 = sbr.rel (%p578) target = $region52
        $region51: #{tpu_custom_call.1} parent=11 // pred_region
          %s582 = ssub.s32 1024, 1024
          %583 = vsyncadd [#allocation23], %s582
          %s584 = sshll.u32 [#allocation22], 4
          %s585 = int_to_ptr.vmem [resolvable:$true] %s584
          %590 = dma.hbm_to_vmem [thread:$0]  %s11, 1024, %s585, [#allocation23], 128, 128, 8
        $region52: #{tpu_custom_call.1} parent=11 // pred_fallthru
          _
        // Predicated region
        $region53: #{tpu_custom_call.1} parent=11 // pred_check
          %p591 = pneg %p325
        $region54: #{tpu_custom_call.1} parent=11 // pred_check_branch
          %593 = sbr.rel (%p591) target = $region56
        $region55: #{tpu_custom_call.1} parent=11 // pred_region
          %s595 = ssub.s32 16, 16
          %596 = vsyncadd [#allocation23], %s595
          %s598 = sshll.u32 [#allocation24], 4
          %s599 = int_to_ptr.vmem [resolvable:$true] %s598
          %601 = dma.hbm_to_vmem [thread:$0]  %s12, 16, %s599, [#allocation23]
        $region56: #{tpu_custom_call.1} parent=11 // pred_fallthru
          _
        // Predicated region
        $region57: #{tpu_custom_call.1} parent=11 // pred_check
          %p602 = pneg %p346
        $region58: #{tpu_custom_call.1} parent=11 // pred_check_branch
          %604 = sbr.rel (%p602) target = $region60
        $region59: #{tpu_custom_call.1} parent=11 // pred_region
          %s606 = ssub.s32 32, 32
          %607 = vsyncadd [#allocation26], %s606
          %s609 = sshll.u32 [#allocation25], 4
          %s610 = int_to_ptr.vmem [resolvable:$true] %s609
          %612 = dma.hbm_to_vmem [thread:$0]  %s13, 32, %s610, [#allocation26]
        $region60: #{tpu_custom_call.1} parent=11 // pred_fallthru
          _
        // Predicated region
        $region61: #{tpu_custom_call.1} parent=11 // pred_check
          %p613 = pneg %p367
        $region62: #{tpu_custom_call.1} parent=11 // pred_check_branch
          %615 = sbr.rel (%p613) target = $region64
        $region63: #{tpu_custom_call.1} parent=11 // pred_region
          %s617 = ssub.s32 512, 512
          %618 = vsyncadd [#allocation26], %s617
          %s619 = sshll.u32 [#allocation27], 4
          %s620 = int_to_ptr.vmem [resolvable:$true] %s619
          %625 = dma.hbm_to_vmem [thread:$0]  %s14, 512, %s620, [#allocation26], 128, 128, 8
        $region64: #{tpu_custom_call.1} parent=11 // pred_fallthru
          _
        // Predicated region
        $region65: #{tpu_custom_call.1} parent=11 // pred_check
          %p626 = pneg %p388
        $region66: #{tpu_custom_call.1} parent=11 // pred_check_branch
          %628 = sbr.rel (%p626) target = $region68
        $region67: #{tpu_custom_call.1} parent=11 // pred_region
          %s630 = ssub.s32 16, 16
          %631 = vsyncadd [#allocation29], %s630
          %s633 = sshll.u32 [#allocation28], 4
          %s634 = int_to_ptr.vmem [resolvable:$true] %s633
          %636 = dma.hbm_to_vmem [thread:$0]  %s15, 16, %s634, [#allocation29]
        $region68: #{tpu_custom_call.1} parent=11 // pred_fallthru
          _
        // Predicated region
        $region69: #{tpu_custom_call.1} parent=11 // pred_check
          %p637 = pneg %p409
        $region70: #{tpu_custom_call.1} parent=11 // pred_check_branch
          %639 = sbr.rel (%p637) target = $region72
        $region71: #{tpu_custom_call.1} parent=11 // pred_region
          %s641 = ssub.s32 256, 256
          %642 = vsyncadd [#allocation29], %s641
          %s643 = sshll.u32 [#allocation30], 4
          %s644 = int_to_ptr.vmem [resolvable:$true] %s643
          %649 = dma.hbm_to_vmem [thread:$0]  %s16, 256, %s644, [#allocation29], 128, 128, 8
        $region72: #{tpu_custom_call.1} parent=11 // pred_fallthru
          _
        // Predicated region
        $region73: #{tpu_custom_call.1} parent=11 // pred_check
          %p650 = pneg %p430
        $region74: #{tpu_custom_call.1} parent=11 // pred_check_branch
          %652 = sbr.rel (%p650) target = $region76
        $region75: #{tpu_custom_call.1} parent=11 // pred_region
          _
        $region76: #{tpu_custom_call.1} parent=11 // pred_fallthru
          _
      $region12: #{tpu_custom_call.1} parent=5 // pred_fallthru
        _
      %p653 = scmp.lt.s32.totalorder %s42, 2
      // Predicated region
      $region77: #{tpu_custom_call.1} parent=5 // pred_check
        %p654 = pneg %p653
      $region78: #{tpu_custom_call.1} parent=5 // pred_check_branch
        %656 = sbr.rel (%p654) target = $region80
      $region79: #{tpu_custom_call.1} parent=5 // pred_region
        // Predicated region
        $region81: #{tpu_custom_call.1} parent=79 // pred_check
          %p657 = pneg %p62
        $region82: #{tpu_custom_call.1} parent=79 // pred_check_branch
          %659 = sbr.rel (%p657) target = $region84
        $region83: #{tpu_custom_call.1} parent=79 // pred_region
          %s660 = sand.u32 %s52, 1
          %s661 = scalar_lea.sflag [#allocation5], %s660
          %s662 = sand.u32 %s52, 1
          %s663 = smul.addr %s662, 8
          %s664 = scalar_lea.vmem [#allocation4], %s663
          %s666 = ssub.s32 128, 128
          %667 = vsyncadd %s661, %s666
          %s668 = smul.addr %s42, 128
          %s669 = scalar_lea.hbm %s0, %s668
          %s671 = sshll.u32 %s664, 4
          %s672 = int_to_ptr.vmem [resolvable:$true] %s671
          %674 = dma.hbm_to_vmem [thread:$0]  %s669, 128, %s672, %s661
        $region84: #{tpu_custom_call.1} parent=79 // pred_fallthru
          _
        // Predicated region
        $region85: #{tpu_custom_call.1} parent=79 // pred_check
          %p675 = pneg %p88
        $region86: #{tpu_custom_call.1} parent=79 // pred_check_branch
          %677 = sbr.rel (%p675) target = $region88
        $region87: #{tpu_custom_call.1} parent=79 // pred_region
          %s678 = sand.u32 %s42, 1
          %s679 = scalar_lea.sflag [#allocation8], %s678
          %s680 = sand.u32 %s78, 1
          %s681 = scalar_lea.vmem [#allocation7], %s680
          %s683 = ssub.s32 16, 16
          %684 = vsyncadd %s679, %s683
          %s685 = smul.addr %s42, 16
          %s686 = scalar_lea.hbm %s1, %s685
          %s688 = sshll.u32 %s681, 4
          %s689 = int_to_ptr.vmem [resolvable:$true] %s688
          %691 = dma.hbm_to_vmem [thread:$0]  %s686, 16, %s689, %s679
        $region88: #{tpu_custom_call.1} parent=79 // pred_fallthru
          _
      $region80: #{tpu_custom_call.1} parent=5 // pred_fallthru
        _
      %p692 = scmp.le.s32.totalorder 1, %s42
      %p693 = scmp.lt.s32.totalorder %s42, 3
      %p694 = pnand %p692, %p693
      %p695 = pneg %p694
      // Predicated region
      $region89: #{tpu_custom_call.1} parent=5 // pred_check
        _
      $region90: #{tpu_custom_call.1} parent=5 // pred_check_branch
        %697 = sbr.rel (%p694) target = $region92
      $region91: #{tpu_custom_call.1} parent=5 // pred_region
        %s698 = ssub.s32 %s42, 1
        %s699 = sand.u32 %s55, 1
        %s700 = scalar_lea.sflag [#allocation5], %s699
        %s701 = sand.u32 %s55, 1
        %s702 = smul.addr %s701, 8
        %s703 = scalar_lea.vmem [#allocation4], %s702
        // Predicated region
        $region93: #{tpu_custom_call.1} parent=91 // pred_check
          %p704 = pneg %p68
        $region94: #{tpu_custom_call.1} parent=91 // pred_check_branch
          %706 = sbr.rel (%p704) target = $region96
        $region95: #{tpu_custom_call.1} parent=91 // pred_region
          %707 = dma.done %s700, 128
        $region96: #{tpu_custom_call.1} parent=91 // pred_fallthru
          _
        %s708 = sand.u32 %s47, 1
        %s709 = scalar_lea.sflag [#allocation8], %s708
        %s710 = sand.u32 %s81, 1
        %s711 = scalar_lea.vmem [#allocation7], %s710
        // Predicated region
        $region97: #{tpu_custom_call.1} parent=91 // pred_check
          %p712 = pneg %p94
        $region98: #{tpu_custom_call.1} parent=91 // pred_check_branch
          %714 = sbr.rel (%p712) target = $region100
        $region99: #{tpu_custom_call.1} parent=91 // pred_region
          %715 = dma.done %s709, 16
        $region100: #{tpu_custom_call.1} parent=91 // pred_fallthru
          _
        // Predicated region
        $region101: #{tpu_custom_call.1} parent=91 // pred_check
          %p716 = pneg %p115
        $region102: #{tpu_custom_call.1} parent=91 // pred_check_branch
          %718 = sbr.rel (%p716) target = $region104
        $region103: #{tpu_custom_call.1} parent=91 // pred_region
          %719 = dma.done [#allocation8], 512
        $region104: #{tpu_custom_call.1} parent=91 // pred_fallthru
          _
        // Predicated region
        $region105: #{tpu_custom_call.1} parent=91 // pred_check
          %p720 = pneg %p136
        $region106: #{tpu_custom_call.1} parent=91 // pred_check_branch
          %722 = sbr.rel (%p720) target = $region108
        $region107: #{tpu_custom_call.1} parent=91 // pred_region
          %723 = dma.done [#allocation11], 16
        $region108: #{tpu_custom_call.1} parent=91 // pred_fallthru
          _
        // Predicated region
        $region109: #{tpu_custom_call.1} parent=91 // pred_check
          %p724 = pneg %p157
        $region110: #{tpu_custom_call.1} parent=91 // pred_check_branch
          %726 = sbr.rel (%p724) target = $region112
        $region111: #{tpu_custom_call.1} parent=91 // pred_region
          %727 = dma.done [#allocation11], 512
        $region112: #{tpu_custom_call.1} parent=91 // pred_fallthru
          _
        // Predicated region
        $region113: #{tpu_custom_call.1} parent=91 // pred_check
          %p728 = pneg %p178
        $region114: #{tpu_custom_call.1} parent=91 // pred_check_branch
          %730 = sbr.rel (%p728) target = $region116
        $region115: #{tpu_custom_call.1} parent=91 // pred_region
          %731 = dma.done [#allocation14], 16
        $region116: #{tpu_custom_call.1} parent=91 // pred_fallthru
          _
        // Predicated region
        $region117: #{tpu_custom_call.1} parent=91 // pred_check
          %p732 = pneg %p199
        $region118: #{tpu_custom_call.1} parent=91 // pred_check_branch
          %734 = sbr.rel (%p732) target = $region120
        $region119: #{tpu_custom_call.1} parent=91 // pred_region
          %735 = dma.done [#allocation14], 512
        $region120: #{tpu_custom_call.1} parent=91 // pred_fallthru
          _
        // Predicated region
        $region121: #{tpu_custom_call.1} parent=91 // pred_check
          %p736 = pneg %p220
        $region122: #{tpu_custom_call.1} parent=91 // pred_check_branch
          %738 = sbr.rel (%p736) target = $region124
        $region123: #{tpu_custom_call.1} parent=91 // pred_region
          %739 = dma.done [#allocation17], 16
        $region124: #{tpu_custom_call.1} parent=91 // pred_fallthru
          _
        // Predicated region
        $region125: #{tpu_custom_call.1} parent=91 // pred_check
          %p740 = pneg %p241
        $region126: #{tpu_custom_call.1} parent=91 // pred_check_branch
          %742 = sbr.rel (%p740) target = $region128
        $region127: #{tpu_custom_call.1} parent=91 // pred_region
          %743 = dma.done [#allocation17], 32
        $region128: #{tpu_custom_call.1} parent=91 // pred_fallthru
          _
        // Predicated region
        $region129: #{tpu_custom_call.1} parent=91 // pred_check
          %p744 = pneg %p262
        $region130: #{tpu_custom_call.1} parent=91 // pred_check_branch
          %746 = sbr.rel (%p744) target = $region132
        $region131: #{tpu_custom_call.1} parent=91 // pred_region
          %747 = dma.done [#allocation20], 512
        $region132: #{tpu_custom_call.1} parent=91 // pred_fallthru
          _
        // Predicated region
        $region133: #{tpu_custom_call.1} parent=91 // pred_check
          %p748 = pneg %p283
        $region134: #{tpu_custom_call.1} parent=91 // pred_check_branch
          %750 = sbr.rel (%p748) target = $region136
        $region135: #{tpu_custom_call.1} parent=91 // pred_region
          %751 = dma.done [#allocation20], 16
        $region136: #{tpu_custom_call.1} parent=91 // pred_fallthru
          _
        // Predicated region
        $region137: #{tpu_custom_call.1} parent=91 // pred_check
          %p752 = pneg %p304
        $region138: #{tpu_custom_call.1} parent=91 // pred_check_branch
          %754 = sbr.rel (%p752) target = $region140
        $region139: #{tpu_custom_call.1} parent=91 // pred_region
          %755 = dma.done [#allocation23], 1024
        $region140: #{tpu_custom_call.1} parent=91 // pred_fallthru
          _
        // Predicated region
        $region141: #{tpu_custom_call.1} parent=91 // pred_check
          %p756 = pneg %p325
        $region142: #{tpu_custom_call.1} parent=91 // pred_check_branch
          %758 = sbr.rel (%p756) target = $region144
        $region143: #{tpu_custom_call.1} parent=91 // pred_region
          %759 = dma.done [#allocation23], 16
        $region144: #{tpu_custom_call.1} parent=91 // pred_fallthru
          _
        // Predicated region
        $region145: #{tpu_custom_call.1} parent=91 // pred_check
          %p760 = pneg %p346
        $region146: #{tpu_custom_call.1} parent=91 // pred_check_branch
          %762 = sbr.rel (%p760) target = $region148
        $region147: #{tpu_custom_call.1} parent=91 // pred_region
          %763 = dma.done [#allocation26], 32
        $region148: #{tpu_custom_call.1} parent=91 // pred_fallthru
          _
        // Predicated region
        $region149: #{tpu_custom_call.1} parent=91 // pred_check
          %p764 = pneg %p367
        $region150: #{tpu_custom_call.1} parent=91 // pred_check_branch
          %766 = sbr.rel (%p764) target = $region152
        $region151: #{tpu_custom_call.1} parent=91 // pred_region
          %767 = dma.done [#allocation26], 512
        $region152: #{tpu_custom_call.1} parent=91 // pred_fallthru
          _
        // Predicated region
        $region153: #{tpu_custom_call.1} parent=91 // pred_check
          %p768 = pneg %p388
        $region154: #{tpu_custom_call.1} parent=91 // pred_check_branch
          %770 = sbr.rel (%p768) target = $region156
        $region155: #{tpu_custom_call.1} parent=91 // pred_region
          %771 = dma.done [#allocation29], 16
        $region156: #{tpu_custom_call.1} parent=91 // pred_fallthru
          _
        // Predicated region
        $region157: #{tpu_custom_call.1} parent=91 // pred_check
          %p772 = pneg %p409
        $region158: #{tpu_custom_call.1} parent=91 // pred_check_branch
          %774 = sbr.rel (%p772) target = $region160
        $region159: #{tpu_custom_call.1} parent=91 // pred_region
          %775 = dma.done [#allocation29], 256
        $region160: #{tpu_custom_call.1} parent=91 // pred_fallthru
          _
        %s776 = sand.u32 %s55, 1
        %s777 = scalar_lea.sflag [#allocation5], %s776
        %s778 = sand.u32 %s55, 1
        %s779 = smul.addr %s778, 8
        %s780 = scalar_lea.vmem [#allocation4], %s779
        %p781 = pneg %p68
        %p782 = pneg %p65
        %s783 = sand.u32 %s47, 1
        %s784 = scalar_lea.sflag [#allocation8], %s783
        %s785 = sand.u32 %s81, 1
        %s786 = scalar_lea.vmem [#allocation7], %s785
        %p787 = pneg %p94
        %p788 = pneg %p91
        %p789 = pneg %p115
        %p790 = pneg %p112
        %p791 = pneg %p136
        %p792 = pneg %p133
        %p793 = pneg %p157
        %p794 = pneg %p154
        %p795 = pneg %p178
        %p796 = pneg %p175
        %p797 = pneg %p199
        %p798 = pneg %p196
        %p799 = pneg %p220
        %p800 = pneg %p217
        %p801 = pneg %p241
        %p802 = pneg %p238
        %p803 = pneg %p262
        %p804 = pneg %p259
        %p805 = pneg %p283
        %p806 = pneg %p280
        %p807 = pneg %p304
        %p808 = pneg %p301
        %p809 = pneg %p325
        %p810 = pneg %p322
        %p811 = pneg %p346
        %p812 = pneg %p343
        %p813 = pneg %p367
        %p814 = pneg %p364
        %p815 = pneg %p388
        %p816 = pneg %p385
        %p817 = pneg %p409
        %p818 = pneg %p406
        %p819 = pneg %p430
        %p820 = pneg %p427
        %p821 = pneg %p456
        %p822 = pneg %p453
        %s823 = sand.u32 %s443, 1
        %s824 = scalar_lea.sflag [#allocation6], %s823
        %s825 = sand.u32 %s443, 1
        %s826 = scalar_lea.vmem [#allocation31], %s825
        %v828 = vld [vmem:[%s703] sm:$0xff]
        %v829 = vld [vmem:[#allocation12] sm:$0xff]
        %v830 = vld [vmem:[#allocation12 + $0x8] sm:$0xff]
        %v831 = vld [vmem:[#allocation12 + $0x10] sm:$0xff]
        %v832 = vld [vmem:[#allocation12 + $0x18] sm:$0xff]
        %v833 = vpack.c.bf16 %v828, %v828
        %v834 = vpack.c.bf16 %v830, %v829
        %v835 = vpack.c.bf16 %v832, %v831
        %v836 = vld [vmem:[#allocation13] sm:$0x1]
        %v838 = vlaneseq
        %v839 = vshrl.u32 %v838, 7
        %v840 = vsub.s32 0, %v839
        %v841 = vrot.slane %v836, %v840
        %vm843 = vcmask 261120
        %v845 = vsel %vm843, %v833, 0
        %847 = vmatprep.subr.bf16.mxu0 0
        %848 = vmatpush1.bf16.msra.mxu0 %v834
        %849 = vmatprep.subr.bf16.mxu0 0
        %850 = vmatpush1.bf16.msra.mxu0 %v835
        %851 = vmatprep.subr.bf16.mxu0 0
        %852 = vmatpush1.bf16.msra.mxu0 0
        %853 = vmatprep.subr.bf16.mxu0 0
        %854 = vmatpush1.bf16.msra.mxu0 0
        %855 = vmatprep.subr.bf16.mxu0 0
        %856 = vmatpush1.bf16.msra.mxu0 0
        %857 = vmatprep.subr.bf16.mxu0 0
        %858 = vmatpush1.bf16.msra.mxu0 0
        %859 = vmatprep.subr.bf16.mxu0 0
        %860 = vmatpush1.bf16.msra.mxu0 0
        %861 = vmatprep.subr.bf16.mxu0 0
        %862 = vmatpush1.bf16.msra.mxu0 0
        %863 = vmatprep.subr.bf16.mxu0 0
        %864 = vmatpush1.bf16.msra.mxu0 0
        %865 = vmatprep.subr.bf16.mxu0 0
        %866 = vmatpush1.bf16.msra.mxu0 0
        %867 = vmatprep.subr.bf16.mxu0 0
        %868 = vmatpush1.bf16.msra.mxu0 0
        %869 = vmatprep.subr.bf16.mxu0 0
        %870 = vmatpush1.bf16.msra.mxu0 0
        %871 = vmatprep.subr.bf16.mxu0 0
        %872 = vmatpush1.bf16.msra.mxu0 0
        %873 = vmatprep.subr.bf16.mxu0 0
        %874 = vmatpush1.bf16.msra.mxu0 0
        %875 = vmatprep.subr.bf16.mxu0 0
        %876 = vmatpush1.bf16.msra.mxu0 0
        %877 = vmatprep.subr.bf16.mxu0 0
        %878 = vmatpush1.bf16.msra.mxu0 0
        %879 = vmatprep.mubr.bf16.mxu0 0
        %880 = vmatmul.mubr.bf16.gmra.mrb[0].mxu0 %v845
        %v881 = vpop.f32.mrb[0].mxu0
        %v882 = vadd.f32 %v841, %v881
        %v883 = vpop.f32.mrb[0].mxu0
        %v884 = vpop.f32.mrb[0].mxu0
        %v885 = vpop.f32.mrb[0].mxu0
        %886 = vdwg.mxu0
        %v887 = vld [vmem:[#allocation9] sm:$0xff]
        %v888 = vld [vmem:[#allocation9 + $0x8] sm:$0xff]
        %v889 = vld [vmem:[#allocation9 + $0x10] sm:$0xff]
        %v890 = vld [vmem:[#allocation9 + $0x18] sm:$0xff]
        %v891 = vpack.c.bf16 %v888, %v887
        %v892 = vpack.c.bf16 %v890, %v889
        %v893 = vld [vmem:[#allocation10] sm:$0x1]
        %894 = vmatprep.subr.bf16.mxu0 0
        %895 = vmatpush1.bf16.msra.mxu0 %v891
        %896 = vmatprep.subr.bf16.mxu0 0
        %897 = vmatpush1.bf16.msra.mxu0 %v892
        %898 = vmatprep.subr.bf16.mxu0 0
        %899 = vmatpush1.bf16.msra.mxu0 0
        %900 = vmatprep.subr.bf16.mxu0 0
        %901 = vmatpush1.bf16.msra.mxu0 0
        %902 = vmatprep.subr.bf16.mxu0 0
        %903 = vmatpush1.bf16.msra.mxu0 0
        %904 = vmatprep.subr.bf16.mxu0 0
        %905 = vmatpush1.bf16.msra.mxu0 0
        %906 = vmatprep.subr.bf16.mxu0 0
        %907 = vmatpush1.bf16.msra.mxu0 0
        %908 = vmatprep.subr.bf16.mxu0 0
        %909 = vmatpush1.bf16.msra.mxu0 0
        %910 = vmatprep.subr.bf16.mxu0 0
        %911 = vmatpush1.bf16.msra.mxu0 0
        %912 = vmatprep.subr.bf16.mxu0 0
        %913 = vmatpush1.bf16.msra.mxu0 0
        %914 = vmatprep.subr.bf16.mxu0 0
        %915 = vmatpush1.bf16.msra.mxu0 0
        %916 = vmatprep.subr.bf16.mxu0 0
        %917 = vmatpush1.bf16.msra.mxu0 0
        %918 = vmatprep.subr.bf16.mxu0 0
        %919 = vmatpush1.bf16.msra.mxu0 0
        %920 = vmatprep.subr.bf16.mxu0 0
        %921 = vmatpush1.bf16.msra.mxu0 0
        %922 = vmatprep.subr.bf16.mxu0 0
        %923 = vmatpush1.bf16.msra.mxu0 0
        %924 = vmatprep.subr.bf16.mxu0 0
        %925 = vmatpush1.bf16.msra.mxu0 0
        %926 = vmatprep.mubr.bf16.mxu0 0
        %927 = vmatmul.mubr.bf16.gmra.mrb[0].mxu0 %v845
        %v928 = vpop.f32.mrb[0].mxu0
        %v929 = vadd.f32 %v893, %v928
        %v930 = vpop.f32.mrb[0].mxu0
        %v931 = vpop.f32.mrb[0].mxu0
        %v932 = vpop.f32.mrb[0].mxu0
        %933 = vdwg.mxu0
        %v934 = vmul.f32 %v929, 0.25
        %v935 = vld [vmem:[%s711] sm:$0x1]
        %v936 = vsub.f32 %v935, 1.0
        %v937 = vmul.f32 %v936, 1e+09
        %v938 = vpack.c.bf16 %v934, %v934
        %v939 = vpack.c.bf16 %v882, %v882
        %vm940 = vcmask 130048
        %v942 = vsel %vm940, %v938, 0
        %v945 = vsel %vm940, %v939, 0
        %947 = vmatprep.subr.bf16.mxu0 0
        %948 = vmatpush1.bf16.xpose.msra.mxu0 %v945
        %949 = vmatprep.subr.bf16.mxu0 0
        %950 = vmatpush1.bf16.xpose.msra.mxu0 0
        %951 = vmatprep.subr.bf16.mxu0 0
        %952 = vmatpush1.bf16.xpose.msra.mxu0 0
        %953 = vmatprep.subr.bf16.mxu0 0
        %954 = vmatpush1.bf16.xpose.msra.mxu0 0
        %955 = vmatprep.subr.bf16.mxu0 0
        %956 = vmatpush1.bf16.xpose.msra.mxu0 0
        %957 = vmatprep.subr.bf16.mxu0 0
        %958 = vmatpush1.bf16.xpose.msra.mxu0 0
        %959 = vmatprep.subr.bf16.mxu0 0
        %960 = vmatpush1.bf16.xpose.msra.mxu0 0
        %961 = vmatprep.subr.bf16.mxu0 0
        %962 = vmatpush1.bf16.xpose.msra.mxu0 0
        %963 = vmatprep.subr.bf16.mxu0 0
        %964 = vmatpush1.bf16.xpose.msra.mxu0 0
        %965 = vmatprep.subr.bf16.mxu0 0
        %966 = vmatpush1.bf16.xpose.msra.mxu0 0
        %967 = vmatprep.subr.bf16.mxu0 0
        %968 = vmatpush1.bf16.xpose.msra.mxu0 0
        %969 = vmatprep.subr.bf16.mxu0 0
        %970 = vmatpush1.bf16.xpose.msra.mxu0 0
        %971 = vmatprep.subr.bf16.mxu0 0
        %972 = vmatpush1.bf16.xpose.msra.mxu0 0
        %973 = vmatprep.subr.bf16.mxu0 0
        %974 = vmatpush1.bf16.xpose.msra.mxu0 0
        %975 = vmatprep.subr.bf16.mxu0 0
        %976 = vmatpush1.bf16.xpose.msra.mxu0 0
        %977 = vmatprep.subr.bf16.mxu0 0
        %978 = vmatpush1.bf16.xpose.msra.mxu0 0
        %979 = vmatprep.mubr.bf16.mxu0 0
        %980 = vmatmul.mubr.bf16.gmra.mrb[0].mxu0 %v942
        %v981 = vpop.f32.mrb[0].mxu0
        %v982 = vadd.f32 %v937, %v981
        %v983 = vpop.f32.mrb[0].mxu0
        %v984 = vpop.f32.mrb[0].mxu0
        %v985 = vpop.f32.mrb[0].mxu0
        %986 = vdwg.mxu0
        %vm987 = vcmask 57344
        %v988 = vsel %vm987, %v982, -inf
        %989 = vmax.xlane.f32.xlu0 %v988
        %v990 = vpop.xlane.xlu0 %989
        %v991 = vsub.f32 %v982, %v990
        %v992 = vmul.f32 %v991, 1.442695
        %v993 = vpow.pop %v992
        %v994 = vsel %vm987, %v993, 0.0
        %995 = vadd.xlane.f32.xlu0 %v994
        %v996 = vpop.xlane.xlu0 %995
        %v997 = vrcp.pop %v996
        %v998 = vmul.f32 %v993, %v997
        %v999 = vpack.c.bf16 %v998, %v998
        %1001 = vrot.lane.b32.xlu0 %v939, 96
        %v1002 = vpop.permute.xlu0 %1001
        %vm1003 = vcmask 64512
        %v1005 = vsel %vm1003, %v999, 0
        %vm1007 = vcmask 1043456
        %v1009 = vsel %vm1007, %v1002, 0
        %1011 = vmatprep.subr.bf16.mxu0 0
        %1012 = vmatpush1.bf16.msra.mxu0 %v1009
        %1013 = vmatprep.subr.bf16.mxu0 0
        %1014 = vmatpush1.bf16.msra.mxu0 0
        %1015 = vmatprep.subr.bf16.mxu0 0
        %1016 = vmatpush1.bf16.msra.mxu0 0
        %1017 = vmatprep.subr.bf16.mxu0 0
        %1018 = vmatpush1.bf16.msra.mxu0 0
        %1019 = vmatprep.subr.bf16.mxu0 0
        %1020 = vmatpush1.bf16.msra.mxu0 0
        %1021 = vmatprep.subr.bf16.mxu0 0
        %1022 = vmatpush1.bf16.msra.mxu0 0
        %1023 = vmatprep.subr.bf16.mxu0 0
        %1024 = vmatpush1.bf16.msra.mxu0 0
        %1025 = vmatprep.subr.bf16.mxu0 0
        %1026 = vmatpush1.bf16.msra.mxu0 0
        %1027 = vmatprep.subr.bf16.mxu0 0
        %1028 = vmatpush1.bf16.msra.mxu0 0
        %1029 = vmatprep.subr.bf16.mxu0 0
        %1030 = vmatpush1.bf16.msra.mxu0 0
        %1031 = vmatprep.subr.bf16.mxu0 0
        %1032 = vmatpush1.bf16.msra.mxu0 0
        %1033 = vmatprep.subr.bf16.mxu0 0
        %1034 = vmatpush1.bf16.msra.mxu0 0
        %1035 = vmatprep.subr.bf16.mxu0 0
        %1036 = vmatpush1.bf16.msra.mxu0 0
        %1037 = vmatprep.subr.bf16.mxu0 0
        %1038 = vmatpush1.bf16.msra.mxu0 0
        %1039 = vmatprep.subr.bf16.mxu0 0
        %1040 = vmatpush1.bf16.msra.mxu0 0
        %1041 = vmatprep.subr.bf16.mxu0 0
        %1042 = vmatpush1.bf16.msra.mxu0 0
        %1043 = vmatprep.mubr.bf16.mxu0 0
        %1044 = vmatmul.mubr.bf16.gmra.mrb[0].mxu0 %v1005
        %v1045 = vpop.f32.mrb[0].mxu0
        %v1046 = vadd.f32 0.0, %v1045
        %v1047 = vpop.f32.mrb[0].mxu0
        %v1048 = vpop.f32.mrb[0].mxu0
        %v1049 = vpop.f32.mrb[0].mxu0
        %1050 = vdwg.mxu0
        %vm1051 = vcmask 122880
        %1052 = vst.msk [vmem:[#allocation2] sm:$0x1] %vm1051, %v1046
        %1054 = vrot.lane.b32.xlu0 %v938, 112
        %v1055 = vpop.permute.xlu0 %1054
        %1056 = vrot.lane.b32.xlu0 %v939, 112
        %v1057 = vpop.permute.xlu0 %1056
        %v1059 = vsel %vm940, %v1055, 0
        %v1062 = vsel %vm940, %v1057, 0
        %1064 = vmatprep.subr.bf16.mxu0 0
        %1065 = vmatpush1.bf16.xpose.msra.mxu0 %v1062
        %1066 = vmatprep.subr.bf16.mxu0 0
        %1067 = vmatpush1.bf16.xpose.msra.mxu0 0
        %1068 = vmatprep.subr.bf16.mxu0 0
        %1069 = vmatpush1.bf16.xpose.msra.mxu0 0
        %1070 = vmatprep.subr.bf16.mxu0 0
        %1071 = vmatpush1.bf16.xpose.msra.mxu0 0
        %1072 = vmatprep.subr.bf16.mxu0 0
        %1073 = vmatpush1.bf16.xpose.msra.mxu0 0
        %1074 = vmatprep.subr.bf16.mxu0 0
        %1075 = vmatpush1.bf16.xpose.msra.mxu0 0
        %1076 = vmatprep.subr.bf16.mxu0 0
        %1077 = vmatpush1.bf16.xpose.msra.mxu0 0
        %1078 = vmatprep.subr.bf16.mxu0 0
        %1079 = vmatpush1.bf16.xpose.msra.mxu0 0
        %1080 = vmatprep.subr.bf16.mxu0 0
        %1081 = vmatpush1.bf16.xpose.msra.mxu0 0
        %1082 = vmatprep.subr.bf16.mxu0 0
        %1083 = vmatpush1.bf16.xpose.msra.mxu0 0
        %1084 = vmatprep.subr.bf16.mxu0 0
        %1085 = vmatpush1.bf16.xpose.msra.mxu0 0
        %1086 = vmatprep.subr.bf16.mxu0 0
        %1087 = vmatpush1.bf16.xpose.msra.mxu0 0
        %1088 = vmatprep.subr.bf16.mxu0 0
        %1089 = vmatpush1.bf16.xpose.msra.mxu0 0
        %1090 = vmatprep.subr.bf16.mxu0 0
        %1091 = vmatpush1.bf16.xpose.msra.mxu0 0
        %1092 = vmatprep.subr.bf16.mxu0 0
        %1093 = vmatpush1.bf16.xpose.msra.mxu0 0
        %1094 = vmatprep.subr.bf16.mxu0 0
        %1095 = vmatpush1.bf16.xpose.msra.mxu0 0
        %1096 = vmatprep.mubr.bf16.mxu0 0
        %1097 = vmatmul.mubr.bf16.gmra.mrb[0].mxu0 %v1059
        %v1098 = vpop.f32.mrb[0].mxu0
        %v1099 = vadd.f32 %v937, %v1098
        %v1100 = vpop.f32.mrb[0].mxu0
        %v1101 = vpop.f32.mrb[0].mxu0
        %v1102 = vpop.f32.mrb[0].mxu0
        %1103 = vdwg.mxu0
        %v1104 = vsel %vm987, %v1099, -inf
        %1105 = vmax.xlane.f32.xlu0 %v1104
        %v1106 = vpop.xlane.xlu0 %1105
        %v1107 = vsub.f32 %v1099, %v1106
        %v1108 = vmul.f32 %v1107, 1.442695
        %v1109 = vpow.pop %v1108
        %v1110 = vsel %vm987, %v1109, 0.0
        %1111 = vadd.xlane.f32.xlu0 %v1110
        %v1112 = vpop.xlane.xlu0 %1111
        %v1113 = vrcp.pop %v1112
        %v1114 = vmul.f32 %v1109, %v1113
        %v1115 = vpack.c.bf16 %v1114, %v1114
        %1116 = vrot.lane.b32.xlu0 %v939, 80
        %v1117 = vpop.permute.xlu0 %1116
        %v1119 = vsel %vm1003, %v1115, 0
        %v1122 = vsel %vm1007, %v1117, 0
        %1124 = vmatprep.subr.bf16.mxu0 0
        %1125 = vmatpush1.bf16.msra.mxu0 %v1122
        %1126 = vmatprep.subr.bf16.mxu0 0
        %1127 = vmatpush1.bf16.msra.mxu0 0
        %1128 = vmatprep.subr.bf16.mxu0 0
        %1129 = vmatpush1.bf16.msra.mxu0 0
        %1130 = vmatprep.subr.bf16.mxu0 0
        %1131 = vmatpush1.bf16.msra.mxu0 0
        %1132 = vmatprep.subr.bf16.mxu0 0
        %1133 = vmatpush1.bf16.msra.mxu0 0
        %1134 = vmatprep.subr.bf16.mxu0 0
        %1135 = vmatpush1.bf16.msra.mxu0 0
        %1136 = vmatprep.subr.bf16.mxu0 0
        %1137 = vmatpush1.bf16.msra.mxu0 0
        %1138 = vmatprep.subr.bf16.mxu0 0
        %1139 = vmatpush1.bf16.msra.mxu0 0
        %1140 = vmatprep.subr.bf16.mxu0 0
        %1141 = vmatpush1.bf16.msra.mxu0 0
        %1142 = vmatprep.subr.bf16.mxu0 0
        %1143 = vmatpush1.bf16.msra.mxu0 0
        %1144 = vmatprep.subr.bf16.mxu0 0
        %1145 = vmatpush1.bf16.msra.mxu0 0
        %1146 = vmatprep.subr.bf16.mxu0 0
        %1147 = vmatpush1.bf16.msra.mxu0 0
        %1148 = vmatprep.subr.bf16.mxu0 0
        %1149 = vmatpush1.bf16.msra.mxu0 0
        %1150 = vmatprep.subr.bf16.mxu0 0
        %1151 = vmatpush1.bf16.msra.mxu0 0
        %1152 = vmatprep.subr.bf16.mxu0 0
        %1153 = vmatpush1.bf16.msra.mxu0 0
        %1154 = vmatprep.subr.bf16.mxu0 0
        %1155 = vmatpush1.bf16.msra.mxu0 0
        %1156 = vmatprep.mubr.bf16.mxu0 0
        %1157 = vmatmul.mubr.bf16.gmra.mrb[0].mxu0 %v1119
        %v1158 = vpop.f32.mrb[0].mxu0
        %v1159 = vadd.f32 0.0, %v1158
        %v1160 = vpop.f32.mrb[0].mxu0
        %v1161 = vpop.f32.mrb[0].mxu0
        %v1162 = vpop.f32.mrb[0].mxu0
        %1163 = vdwg.mxu0
        %1165 = vrot.lane.b32.xlu0 %v1159, 16
        %v1166 = vpop.permute.xlu0 %1165
        %vm1168 = vcmask 254080
        %1169 = vst.msk [vmem:[#allocation2] sm:$0x1] %vm1168, %v1166
        %v1170 = vld [vmem:[#allocation2] sm:$0x1]
        %v1171 = vld [vmem:[#allocation15] sm:$0xff]
        %v1172 = vld [vmem:[#allocation15 + $0x8] sm:$0xff]
        %v1173 = vld [vmem:[#allocation15 + $0x10] sm:$0xff]
        %v1174 = vld [vmem:[#allocation15 + $0x18] sm:$0xff]
        %v1175 = vpack.c.bf16 %v1170, %v1170
        %v1176 = vpack.c.bf16 %v1172, %v1171
        %v1177 = vpack.c.bf16 %v1174, %v1173
        %v1178 = vld [vmem:[#allocation16] sm:$0x1]
        %v1180 = vsel %vm843, %v1175, 0
        %1182 = vmatprep.subr.bf16.mxu0 0
        %1183 = vmatpush1.bf16.msra.mxu0 %v1176
        %1184 = vmatprep.subr.bf16.mxu0 0
        %1185 = vmatpush1.bf16.msra.mxu0 %v1177
        %1186 = vmatprep.subr.bf16.mxu0 0
        %1187 = vmatpush1.bf16.msra.mxu0 0
        %1188 = vmatprep.subr.bf16.mxu0 0
        %1189 = vmatpush1.bf16.msra.mxu0 0
        %1190 = vmatprep.subr.bf16.mxu0 0
        %1191 = vmatpush1.bf16.msra.mxu0 0
        %1192 = vmatprep.subr.bf16.mxu0 0
        %1193 = vmatpush1.bf16.msra.mxu0 0
        %1194 = vmatprep.subr.bf16.mxu0 0
        %1195 = vmatpush1.bf16.msra.mxu0 0
        %1196 = vmatprep.subr.bf16.mxu0 0
        %1197 = vmatpush1.bf16.msra.mxu0 0
        %1198 = vmatprep.subr.bf16.mxu0 0
        %1199 = vmatpush1.bf16.msra.mxu0 0
        %1200 = vmatprep.subr.bf16.mxu0 0
        %1201 = vmatpush1.bf16.msra.mxu0 0
        %1202 = vmatprep.subr.bf16.mxu0 0
        %1203 = vmatpush1.bf16.msra.mxu0 0
        %1204 = vmatprep.subr.bf16.mxu0 0
        %1205 = vmatpush1.bf16.msra.mxu0 0
        %1206 = vmatprep.subr.bf16.mxu0 0
        %1207 = vmatpush1.bf16.msra.mxu0 0
        %1208 = vmatprep.subr.bf16.mxu0 0
        %1209 = vmatpush1.bf16.msra.mxu0 0
        %1210 = vmatprep.subr.bf16.mxu0 0
        %1211 = vmatpush1.bf16.msra.mxu0 0
        %1212 = vmatprep.subr.bf16.mxu0 0
        %1213 = vmatpush1.bf16.msra.mxu0 0
        %1214 = vmatprep.mubr.bf16.mxu0 0
        %1215 = vmatmul.mubr.bf16.gmra.mrb[0].mxu0 %v1180
        %v1216 = vpop.f32.mrb[0].mxu0
        %v1217 = vadd.f32 %v1178, %v1216
        %v1218 = vpop.f32.mrb[0].mxu0
        %v1219 = vpop.f32.mrb[0].mxu0
        %v1220 = vpop.f32.mrb[0].mxu0
        %1221 = vdwg.mxu0
        %v1222 = vadd.f32 %v828, %v1217
        %v1223 = vld [vmem:[#allocation18] sm:$0x1]
        %v1224 = vld [vmem:[#allocation18 + $0x1] sm:$0x1]
        %vm1225 = vcmask 253952
        %v1226 = vsel %vm1225, %v1222, 0.0
        %1227 = vadd.xlane.f32.xlu0 %v1226
        %v1228 = vpop.xlane.xlu0 %1227
        %v1229 = vrcp.pop 32.0
        %v1230 = vmul.f32 %v1228, %v1229
        %v1231 = vsub.f32 %v1222, %v1230
        %v1232 = vmul.f32 %v1231, %v1231
        %v1233 = vsel %vm1225, %v1232, 0.0
        %1234 = vadd.xlane.f32.xlu0 %v1233
        %v1235 = vpop.xlane.xlu0 %1234
        %v1236 = vmul.f32 %v1235, %v1229
        %v1237 = vadd.f32 %v1236, 1e-05
        %v1238 = vrsqrt.pop %v1237
        %v1239 = vmul.f32 %v1231, %v1238
        %v1240 = vmul.f32 %v1239, %v1223
        %v1241 = vadd.f32 %v1240, %v1224
        %v1242 = vld [vmem:[#allocation19] sm:$0xff]
        %v1243 = vld [vmem:[#allocation19 + $0x8] sm:$0xff]
        %v1244 = vld [vmem:[#allocation19 + $0x10] sm:$0xff]
        %v1245 = vld [vmem:[#allocation19 + $0x18] sm:$0xff]
        %v1246 = vpack.c.bf16 %v1241, %v1241
        %v1247 = vpack.c.bf16 %v1243, %v1242
        %v1248 = vpack.c.bf16 %v1245, %v1244
        %v1249 = vld [vmem:[#allocation21] sm:$0x1]
        %v1251 = vsel %vm843, %v1246, 0
        %1253 = vmatprep.subr.bf16.mxu0 0
        %1254 = vmatpush1.bf16.msra.mxu0 %v1247
        %1255 = vmatprep.subr.bf16.mxu0 0
        %1256 = vmatpush1.bf16.msra.mxu0 %v1248
        %1257 = vmatprep.subr.bf16.mxu0 0
        %1258 = vmatpush1.bf16.msra.mxu0 0
        %1259 = vmatprep.subr.bf16.mxu0 0
        %1260 = vmatpush1.bf16.msra.mxu0 0
        %1261 = vmatprep.subr.bf16.mxu0 0
        %1262 = vmatpush1.bf16.msra.mxu0 0
        %1263 = vmatprep.subr.bf16.mxu0 0
        %1264 = vmatpush1.bf16.msra.mxu0 0
        %1265 = vmatprep.subr.bf16.mxu0 0
        %1266 = vmatpush1.bf16.msra.mxu0 0
        %1267 = vmatprep.subr.bf16.mxu0 0
        %1268 = vmatpush1.bf16.msra.mxu0 0
        %1269 = vmatprep.subr.bf16.mxu0 0
        %1270 = vmatpush1.bf16.msra.mxu0 0
        %1271 = vmatprep.subr.bf16.mxu0 0
        %1272 = vmatpush1.bf16.msra.mxu0 0
        %1273 = vmatprep.subr.bf16.mxu0 0
        %1274 = vmatpush1.bf16.msra.mxu0 0
        %1275 = vmatprep.subr.bf16.mxu0 0
        %1276 = vmatpush1.bf16.msra.mxu0 0
        %1277 = vmatprep.subr.bf16.mxu0 0
        %1278 = vmatpush1.bf16.msra.mxu0 0
        %1279 = vmatprep.subr.bf16.mxu0 0
        %1280 = vmatpush1.bf16.msra.mxu0 0
        %1281 = vmatprep.subr.bf16.mxu0 0
        %1282 = vmatpush1.bf16.msra.mxu0 0
        %1283 = vmatprep.subr.bf16.mxu0 0
        %1284 = vmatpush1.bf16.msra.mxu0 0
        %1285 = vmatprep.mubr.bf16.mxu0 0
        %1286 = vmatmul.mubr.bf16.gmra.mrb[0].mxu0 %v1251
        %v1287 = vpop.f32.mrb[0].mxu0
        %v1288 = vadd.f32 %v1249, %v1287
        %v1289 = vpop.f32.mrb[0].mxu0
        %v1290 = vpop.f32.mrb[0].mxu0
        %v1291 = vpop.f32.mrb[0].mxu0
        %1292 = vdwg.mxu0
        %v1293 = vmul.f32 %v1288, %v1288
        %v1294 = vmul.f32 %v1288, %v1293
        %v1295 = vmul.f32 %v1294, 0.044715
        %v1296 = vadd.f32 %v1288, %v1295
        %v1297 = vmul.f32 %v1296, 0.7978846
        %v1298 = vtanh.pop %v1297
        %v1299 = vadd.f32 %v1298, 1.0
        %v1300 = vmul.f32 %v1299, 0.5
        %v1301 = vmul.f32 %v1288, %v1300
        %v1302 = vld [vmem:[#allocation22] sm:$0xff]
        %v1303 = vld [vmem:[#allocation22 + $0x8] sm:$0xff]
        %v1304 = vld [vmem:[#allocation22 + $0x10] sm:$0xff]
        %v1305 = vld [vmem:[#allocation22 + $0x18] sm:$0xff]
        %v1306 = vld [vmem:[#allocation22 + $0x20] sm:$0xff]
        %v1307 = vld [vmem:[#allocation22 + $0x28] sm:$0xff]
        %v1308 = vld [vmem:[#allocation22 + $0x30] sm:$0xff]
        %v1309 = vld [vmem:[#allocation22 + $0x38] sm:$0xff]
        %v1310 = vpack.c.bf16 %v1301, %v1301
        %v1311 = vpack.c.bf16 %v1303, %v1302
        %v1312 = vpack.c.bf16 %v1305, %v1304
        %v1313 = vpack.c.bf16 %v1307, %v1306
        %v1314 = vpack.c.bf16 %v1309, %v1308
        %v1315 = vld [vmem:[#allocation24] sm:$0x1]
        %vm1316 = vcmask 523264
        %v1318 = vsel %vm1316, %v1310, 0
        %1320 = vmatprep.subr.bf16.mxu0 0
        %1321 = vmatpush1.bf16.msra.mxu0 %v1311
        %1322 = vmatprep.subr.bf16.mxu0 0
        %1323 = vmatpush1.bf16.msra.mxu0 %v1312
        %1324 = vmatprep.subr.bf16.mxu0 0
        %1325 = vmatpush1.bf16.msra.mxu0 %v1313
        %1326 = vmatprep.subr.bf16.mxu0 0
        %1327 = vmatpush1.bf16.msra.mxu0 %v1314
        %1328 = vmatprep.subr.bf16.mxu0 0
        %1329 = vmatpush1.bf16.msra.mxu0 0
        %1330 = vmatprep.subr.bf16.mxu0 0
        %1331 = vmatpush1.bf16.msra.mxu0 0
        %1332 = vmatprep.subr.bf16.mxu0 0
        %1333 = vmatpush1.bf16.msra.mxu0 0
        %1334 = vmatprep.subr.bf16.mxu0 0
        %1335 = vmatpush1.bf16.msra.mxu0 0
        %1336 = vmatprep.subr.bf16.mxu0 0
        %1337 = vmatpush1.bf16.msra.mxu0 0
        %1338 = vmatprep.subr.bf16.mxu0 0
        %1339 = vmatpush1.bf16.msra.mxu0 0
        %1340 = vmatprep.subr.bf16.mxu0 0
        %1341 = vmatpush1.bf16.msra.mxu0 0
        %1342 = vmatprep.subr.bf16.mxu0 0
        %1343 = vmatpush1.bf16.msra.mxu0 0
        %1344 = vmatprep.subr.bf16.mxu0 0
        %1345 = vmatpush1.bf16.msra.mxu0 0
        %1346 = vmatprep.subr.bf16.mxu0 0
        %1347 = vmatpush1.bf16.msra.mxu0 0
        %1348 = vmatprep.subr.bf16.mxu0 0
        %1349 = vmatpush1.bf16.msra.mxu0 0
        %1350 = vmatprep.subr.bf16.mxu0 0
        %1351 = vmatpush1.bf16.msra.mxu0 0
        %1352 = vmatprep.mubr.bf16.mxu0 0
        %1353 = vmatmul.mubr.bf16.gmra.mrb[0].mxu0 %v1318
        %v1354 = vpop.f32.mrb[0].mxu0
        %v1355 = vadd.f32 %v1315, %v1354
        %v1356 = vpop.f32.mrb[0].mxu0
        %v1357 = vpop.f32.mrb[0].mxu0
        %v1358 = vpop.f32.mrb[0].mxu0
        %1359 = vdwg.mxu0
        %v1360 = vadd.f32 %v1241, %v1355
        %v1361 = vld [vmem:[#allocation25] sm:$0x1]
        %v1362 = vld [vmem:[#allocation25 + $0x1] sm:$0x1]
        %v1363 = vsel %vm1225, %v1360, 0.0
        %1364 = vadd.xlane.f32.xlu0 %v1363
        %v1365 = vpop.xlane.xlu0 %1364
        %v1366 = vmul.f32 %v1365, %v1229
        %v1367 = vsub.f32 %v1360, %v1366
        %v1368 = vmul.f32 %v1367, %v1367
        %v1369 = vsel %vm1225, %v1368, 0.0
        %1370 = vadd.xlane.f32.xlu0 %v1369
        %v1371 = vpop.xlane.xlu0 %1370
        %v1372 = vmul.f32 %v1371, %v1229
        %v1373 = vadd.f32 %v1372, 1e-05
        %v1374 = vrsqrt.pop %v1373
        %v1375 = vmul.f32 %v1367, %v1374
        %v1376 = vmul.f32 %v1375, %v1361
        %v1377 = vadd.f32 %v1376, %v1362
        %v1378 = vld [vmem:[#allocation27] sm:$0xff]
        %v1379 = vld [vmem:[#allocation27 + $0x8] sm:$0xff]
        %v1380 = vld [vmem:[#allocation27 + $0x10] sm:$0xff]
        %v1381 = vld [vmem:[#allocation27 + $0x18] sm:$0xff]
        %v1382 = vpack.c.bf16 %v1377, %v1377
        %v1383 = vpack.c.bf16 %v1379, %v1378
        %v1384 = vpack.c.bf16 %v1381, %v1380
        %v1385 = vld [vmem:[#allocation28] sm:$0x1]
        %v1387 = vsel %vm843, %v1382, 0
        %1389 = vmatprep.subr.bf16.mxu0 0
        %1390 = vmatpush1.bf16.msra.mxu0 %v1383
        %1391 = vmatprep.subr.bf16.mxu0 0
        %1392 = vmatpush1.bf16.msra.mxu0 %v1384
        %1393 = vmatprep.subr.bf16.mxu0 0
        %1394 = vmatpush1.bf16.msra.mxu0 0
        %1395 = vmatprep.subr.bf16.mxu0 0
        %1396 = vmatpush1.bf16.msra.mxu0 0
        %1397 = vmatprep.subr.bf16.mxu0 0
        %1398 = vmatpush1.bf16.msra.mxu0 0
        %1399 = vmatprep.subr.bf16.mxu0 0
        %1400 = vmatpush1.bf16.msra.mxu0 0
        %1401 = vmatprep.subr.bf16.mxu0 0
        %1402 = vmatpush1.bf16.msra.mxu0 0
        %1403 = vmatprep.subr.bf16.mxu0 0
        %1404 = vmatpush1.bf16.msra.mxu0 0
        %1405 = vmatprep.subr.bf16.mxu0 0
        %1406 = vmatpush1.bf16.msra.mxu0 0
        %1407 = vmatprep.subr.bf16.mxu0 0
        %1408 = vmatpush1.bf16.msra.mxu0 0
        %1409 = vmatprep.subr.bf16.mxu0 0
        %1410 = vmatpush1.bf16.msra.mxu0 0
        %1411 = vmatprep.subr.bf16.mxu0 0
        %1412 = vmatpush1.bf16.msra.mxu0 0
        %1413 = vmatprep.subr.bf16.mxu0 0
        %1414 = vmatpush1.bf16.msra.mxu0 0
        %1415 = vmatprep.subr.bf16.mxu0 0
        %1416 = vmatpush1.bf16.msra.mxu0 0
        %1417 = vmatprep.subr.bf16.mxu0 0
        %1418 = vmatpush1.bf16.msra.mxu0 0
        %1419 = vmatprep.subr.bf16.mxu0 0
        %1420 = vmatpush1.bf16.msra.mxu0 0
        %1421 = vmatprep.mubr.bf16.mxu0 0
        %1422 = vmatmul.mubr.bf16.gmra.mrb[0].mxu0 %v1387
        %v1423 = vpop.f32.mrb[0].mxu0
        %v1424 = vadd.f32 %v1385, %v1423
        %v1425 = vpop.f32.mrb[0].mxu0
        %v1426 = vpop.f32.mrb[0].mxu0
        %v1427 = vpop.f32.mrb[0].mxu0
        %1428 = vdwg.mxu0
        %v1429 = vmax.f32 %v1424, 0.0
        %vm1430 = vcmask 139392
        %v1431 = vsel %vm1430, %v1424, -inf
        %1432 = vmax.xlane.f32.xlu0 %v1431
        %v1433 = vpop.xlane.xlu0 %1432
        %v1434 = vsub.f32 %v1424, %v1433
        %v1435 = vmul.f32 %v1434, 1.442695
        %v1436 = vpow.pop %v1435
        %1438 = vrot.lane.b32.xlu0 %v1436, 112
        %v1439 = vpop.permute.xlu0 %1438
        %vm1441 = vcmask 8192
        %v1442 = vsel %vm1441, %v1439, 0.0
        %1443 = vadd.xlane.f32.xlu0 %v1442
        %v1444 = vpop.xlane.xlu0 %1443
        %v1445 = vrcp.pop %v1444
        %v1446 = vmul.f32 %v1436, %v1445
        %v1447 = vld [vmem:[#allocation30] sm:$0xff]
        %v1448 = vld [vmem:[#allocation30 + $0x8] sm:$0xff]
        %v1449 = vpack.c.bf16 %v1429, %v1429
        %v1450 = vpack.c.bf16 %v1448, %v1447
        %v1451 = vld [vmem:[#allocation3] sm:$0x1]
        %v1453 = vsel %vm940, %v1449, 0
        %1455 = vmatprep.subr.bf16.mxu0 0
        %1456 = vmatpush1.bf16.msra.mxu0 %v1450
        %1457 = vmatprep.subr.bf16.mxu0 0
        %1458 = vmatpush1.bf16.msra.mxu0 0
        %1459 = vmatprep.subr.bf16.mxu0 0
        %1460 = vmatpush1.bf16.msra.mxu0 0
        %1461 = vmatprep.subr.bf16.mxu0 0
        %1462 = vmatpush1.bf16.msra.mxu0 0
        %1463 = vmatprep.subr.bf16.mxu0 0
        %1464 = vmatpush1.bf16.msra.mxu0 0
        %1465 = vmatprep.subr.bf16.mxu0 0
        %1466 = vmatpush1.bf16.msra.mxu0 0
        %1467 = vmatprep.subr.bf16.mxu0 0
        %1468 = vmatpush1.bf16.msra.mxu0 0
        %1469 = vmatprep.subr.bf16.mxu0 0
        %1470 = vmatpush1.bf16.msra.mxu0 0
        %1471 = vmatprep.subr.bf16.mxu0 0
        %1472 = vmatpush1.bf16.msra.mxu0 0
        %1473 = vmatprep.subr.bf16.mxu0 0
        %1474 = vmatpush1.bf16.msra.mxu0 0
        %1475 = vmatprep.subr.bf16.mxu0 0
        %1476 = vmatpush1.bf16.msra.mxu0 0
        %1477 = vmatprep.subr.bf16.mxu0 0
        %1478 = vmatpush1.bf16.msra.mxu0 0
        %1479 = vmatprep.subr.bf16.mxu0 0
        %1480 = vmatpush1.bf16.msra.mxu0 0
        %1481 = vmatprep.subr.bf16.mxu0 0
        %1482 = vmatpush1.bf16.msra.mxu0 0
        %1483 = vmatprep.subr.bf16.mxu0 0
        %1484 = vmatpush1.bf16.msra.mxu0 0
        %1485 = vmatprep.subr.bf16.mxu0 0
        %1486 = vmatpush1.bf16.msra.mxu0 0
        %1487 = vmatprep.mubr.bf16.mxu0 0
        %1488 = vmatmul.mubr.bf16.gmra.mrb[0].mxu0 %v1453
        %v1489 = vpop.f32.mrb[0].mxu0
        %v1490 = vadd.f32 %v1451, %v1489
        %v1491 = vpop.f32.mrb[0].mxu0
        %v1492 = vpop.f32.mrb[0].mxu0
        %v1493 = vpop.f32.mrb[0].mxu0
        %1494 = vdwg.mxu0
        %1496 = vrot.lane.b32.xlu0 %v1446, 112
        %v1497 = vpop.permute.xlu0 %1496
        %1500 = vrot.lane.b32.xlu0 %v1490, 2
        %v1501 = vpop.permute.xlu0 %1500
        %vm1503 = vcmask 15360
        %v1504 = vsel %vm1503, %v1497, %v1501
        %vm1505 = vcmask 23552
        %v1506 = vsel %vm1505, %v1504, 0.0
        %1507 = vst [vmem:[%s826] sm:$0x1] %v1506
        %s1508 = sand.u32 %s443, 1
        %s1509 = scalar_lea.sflag [#allocation6], %s1508
        %s1510 = sand.u32 %s443, 1
        %s1511 = scalar_lea.vmem [#allocation31], %s1510
        // Predicated region
        $region161: #{tpu_custom_call.1} parent=91 // pred_check
          %p1512 = pneg %p453
        $region162: #{tpu_custom_call.1} parent=91 // pred_check_branch
          %1514 = sbr.rel (%p1512) target = $region164
        $region163: #{tpu_custom_call.1} parent=91 // pred_region
          %s1516 = ssub.s32 16, 16
          %1517 = vsyncadd %s1509, %s1516
          %s1518 = smul.addr %s47, 16
          %s1519 = scalar_lea.hbm %s18, %s1518
          %s1521 = sshll.u32 %s1511, 4
          %s1522 = int_to_ptr.vmem [resolvable:$true] %s1521
          %1524 = dma.vmem_to_hbm [thread:$0]  %s1522, 16, %s1519, %s1509
        $region164: #{tpu_custom_call.1} parent=91 // pred_fallthru
          _
      $region92: #{tpu_custom_call.1} parent=5 // pred_fallthru
        _
      %p1525 = scmp.le.s32.totalorder 2, %s42
      // Predicated region
      $region165: #{tpu_custom_call.1} parent=5 // pred_check
        %p1526 = pneg %p1525
      $region166: #{tpu_custom_call.1} parent=5 // pred_check_branch
        %1528 = sbr.rel (%p1526) target = $region168
      $region167: #{tpu_custom_call.1} parent=5 // pred_region
        %s1529 = ssub.s32 %s42, 2
        // Predicated region
        $region169: #{tpu_custom_call.1} parent=167 // pred_check
          %p1530 = pneg %p459
        $region170: #{tpu_custom_call.1} parent=167 // pred_check_branch
          %1532 = sbr.rel (%p1530) target = $region172
        $region171: #{tpu_custom_call.1} parent=167 // pred_region
          %s1533 = sand.u32 %s444, 1
          %s1534 = scalar_lea.sflag [#allocation6], %s1533
          %s1535 = sand.u32 %s444, 1
          %s1536 = scalar_lea.vmem [#allocation31], %s1535
          %1537 = dma.done %s1534, 16
        $region172: #{tpu_custom_call.1} parent=167 // pred_fallthru
          _
      $region168: #{tpu_custom_call.1} parent=5 // pred_fallthru
        _
    $region6: #{tpu_custom_call.1} parent=1 // loop_footer
      %s46 = sadd.s32 1, %s42
    $region7: #{tpu_custom_call.1} parent=1 // loop_footer_branch
      %41 = sbr.rel target = $region3
    $region8: #{tpu_custom_call.1} parent=1 // loop_exit
      _
    %1538 = vsyncpa [#allocation5], 1
    %s1539 = scalar_lea.sflag [#allocation5], 1
    %1540 = vsyncpa %s1539, 1
    %1541 = vsyncpa [#allocation8], 1
    %s1542 = scalar_lea.sflag [#allocation8], 1
    %1543 = vsyncpa %s1542, 1
    %1544 = vsyncpa [#allocation11], 1
    %1545 = vsyncpa [#allocation14], 1
    %1546 = vsyncpa [#allocation17], 1
    %1547 = vsyncpa [#allocation20], 1
    %1548 = vsyncpa [#allocation23], 1
    %1549 = vsyncpa [#allocation26], 1
    %1550 = vsyncpa [#allocation29], 1
    %1551 = vsyncpa [#allocation6], 1
    %s1552 = scalar_lea.sflag [#allocation6], 1
    %1553 = vsyncpa %s1552, 1

// kernel: tpu_custom_call.1
$region0: #{tpu_custom_call.1}
  #allocation0 [shape = 'u32[]', space=smem, size = 0x4, offset = 0x4, fixed_abs, tag = 'smem constant byte address 0x4 - core index']
  #allocation1 [shape = 'u32[144,128]{1,0:T(1,128)}', space=vmem, size = 0x12000, scoped, tag = 'internal scratch']
  #allocation2 [shape = 'f32[1,32]{1,0:T(1,128)}', space=vmem, size = 0x200, scoped, tag = 'scratch operand']
  #allocation3 [shape = 'f32[1,1]{1,0:T(1,128)S(1)}', space=vmem, size = 0x200, scoped, tag = 'scoped memory for tpu_custom_call.1']
  %s0 = inlined_call_operand.hbm [shape: f32[2,8,32], index: 0, kind: input, shape index: {}]
  %s1 = inlined_call_operand.vmem [shape: f32[2,1,8], index: 1, kind: input, shape index: {}]
  %s2 = inlined_call_operand.vmem [shape: f32[32,32], index: 2, kind: input, shape index: {}]
  %s3 = inlined_call_operand.vmem [shape: f32[1,32], index: 3, kind: input, shape index: {}]
  %s4 = inlined_call_operand.vmem [shape: f32[32,64], index: 4, kind: input, shape index: {}]
  %s5 = inlined_call_operand.vmem [shape: f32[1,64], index: 5, kind: input, shape index: {}]
  %s6 = inlined_call_operand.vmem [shape: f32[32,32], index: 6, kind: input, shape index: {}]
  %s7 = inlined_call_operand.vmem [shape: f32[1,32], index: 7, kind: input, shape index: {}]
  %s8 = inlined_call_operand.vmem [shape: f32[2,32], index: 8, kind: input, shape index: {}]
  %s9 = inlined_call_operand.vmem [shape: f32[32,64], index: 9, kind: input, shape index: {}]
  %s10 = inlined_call_operand.vmem [shape: f32[1,64], index: 10, kind: input, shape index: {}]
  %s11 = inlined_call_operand.vmem [shape: f32[64,32], index: 11, kind: input, shape index: {}]
  %s12 = inlined_call_operand.vmem [shape: f32[1,32], index: 12, kind: input, shape index: {}]
  %s13 = inlined_call_operand.vmem [shape: f32[2,32], index: 13, kind: input, shape index: {}]
  %s14 = inlined_call_operand.vmem [shape: f32[32,18], index: 14, kind: input, shape index: {}]
  %s15 = inlined_call_operand.vmem [shape: f32[1,18], index: 15, kind: input, shape index: {}]
  %s16 = inlined_call_operand.vmem [shape: f32[16,1], index: 16, kind: input, shape index: {}]
  %s17 = inlined_call_operand.<no memory space> [shape: f32[1,1], index: 17, kind: input, shape index: {}]
  %s18 = inlined_call_operand.hbm [shape: f32[2,1,128], index: 18, kind: output, shape index: {}]
  %s19 = sld [smem:[#allocation0]]
  $region109: #{tpu_custom_call.1} parent=0
    _
  %s21 = ssub.s32 1, %s19
  %s22 = scalar_select 0, %s21, %s19
  %v23 = vstv %s17
  %24 = vst [vmem:[#allocation3] sm:$0x1] %v23
  $region1: #{tpu_custom_call.1} parent=0
    #allocation4 [shape = 'u8[8192]{0}', space=vmem, size = 0x2000, scoped, tag = 'input window, operand 0']
    #allocation5 [shape = 's32[2]{0}', space=sflag, size = 0x8, scoped, tag = 'scoped memory for tpu_custom_call.1']
    #allocation6 [shape = 's32[2]{0}', space=sflag, size = 0x8, scoped, tag = 'scoped memory for tpu_custom_call.1']
    #allocation7 [shape = 'u8[1024]{0}', space=vmem, size = 0x400, scoped, tag = 'output window, operand 0']
    %25 = vsyncpa [#allocation5], 0
    %s26 = scalar_lea.sflag [#allocation5], 1
    %27 = vsyncpa %s26, 0
    %28 = vsyncpa [#allocation6], 0
    %s29 = scalar_lea.sflag [#allocation6], 1
    %30 = vsyncpa %s29, 0
    loop: start=0, step=1, limit=4
    $region2: #{tpu_custom_call.1} parent=1 // loop_pre_header
      _
    $region3: #{tpu_custom_call.1} parent=1 // loop_header
      %s32 = sphi 0, %s36
      %p33 = scmp.ge.s32.totalorder %s32, 4
      %s42 = sphi 0, %s44
      %s45 = sphi 0, %s42
      %s46 = sphi 0, %s45
      %s62 = sphi 0, %s46
      %s68 = sphi 0, %s70
      %s71 = sphi 0, %s68
      %s72 = sphi 0, %s71
      %s88 = sphi 0, %s72
      %s92 = sphi 0, %s92
      %s94 = sphi 0, %s92
      %s95 = sphi 0, %s94
      %s109 = sphi 0, %s95
      %s113 = sphi 0, %s113
      %s115 = sphi 0, %s113
      %s116 = sphi 0, %s115
      %s130 = sphi 0, %s116
      %s134 = sphi 0, %s134
      %s136 = sphi 0, %s134
      %s137 = sphi 0, %s136
      %s151 = sphi 0, %s137
      %s155 = sphi 0, %s155
      %s157 = sphi 0, %s155
      %s158 = sphi 0, %s157
      %s172 = sphi 0, %s158
      %s176 = sphi 0, %s176
      %s178 = sphi 0, %s176
      %s179 = sphi 0, %s178
      %s193 = sphi 0, %s179
      %s197 = sphi 0, %s197
      %s199 = sphi 0, %s197
      %s200 = sphi 0, %s199
      %s214 = sphi 0, %s200
      %s218 = sphi 0, %s218
      %s220 = sphi 0, %s218
      %s221 = sphi 0, %s220
      %s235 = sphi 0, %s221
      %s239 = sphi 0, %s239
      %s241 = sphi 0, %s239
      %s242 = sphi 0, %s241
      %s256 = sphi 0, %s242
      %s260 = sphi 0, %s260
      %s262 = sphi 0, %s260
      %s263 = sphi 0, %s262
      %s277 = sphi 0, %s263
      %s281 = sphi 0, %s281
      %s283 = sphi 0, %s281
      %s284 = sphi 0, %s283
      %s298 = sphi 0, %s284
      %s302 = sphi 0, %s302
      %s304 = sphi 0, %s302
      %s305 = sphi 0, %s304
      %s319 = sphi 0, %s305
      %s323 = sphi 0, %s323
      %s325 = sphi 0, %s323
      %s326 = sphi 0, %s325
      %s340 = sphi 0, %s326
      %s344 = sphi 0, %s344
      %s346 = sphi 0, %s344
      %s347 = sphi 0, %s346
      %s361 = sphi 0, %s347
      %s365 = sphi 0, %s365
      %s367 = sphi 0, %s365
      %s368 = sphi 0, %s367
      %s382 = sphi 0, %s368
      %s386 = sphi 0, %s386
      %s388 = sphi 0, %s386
      %s389 = sphi 0, %s388
      %s403 = sphi 0, %s389
      %s407 = sphi 0, %s407
      %s409 = sphi 0, %s407
      %s410 = sphi 0, %s409
      %s424 = sphi 0, %s410
      %s430 = sphi 0, %s432
      %s433 = sphi 0, %s430
      %s434 = sphi 0, %s433
      %s450 = sphi 0, %s434
    $region4: #{tpu_custom_call.1} parent=1 // loop_header_branch
      %35 = sbr.rel (%p33) target = $region8
    $region5: #{tpu_custom_call.1} parent=1 // loop_body
      %s37 = ssub.s32 %s32, 1
      %s38 = ssub.s32 %s32, 2
      %s39 = sadd.s32 %s32, 1
      %s40 = ssub.s32 %s32, %s39
      %p41 = scmp.eq.s32.totalorder %s40, 0
      %s43 = sadd.s32 %s42, 1
      %s44 = scalar_select %p41, %s42, %s43
      %p47 = pneg %p41
      %p48 = scmp.eq.s32.totalorder %s32, 1
      %p49 = por %p47, %p48
      %p50 = scmp.ne.s32.totalorder %s42, %s45
      %p51 = scmp.eq.s32.totalorder %s32, 0
      %p52 = por %p50, %p51
      %p53 = scmp.ne.s32.totalorder %s42, %s45
      %p54 = scmp.eq.s32.totalorder %s37, 1
      %p55 = por %p53, %p54
      %p56 = scmp.ne.s32.totalorder %s45, %s46
      %p57 = scmp.eq.s32.totalorder %s37, 0
      %p58 = por %p56, %p57
      %p59 = scmp.ne.s32.totalorder %s45, %s46
      %p60 = scmp.eq.s32.totalorder %s38, 1
      %p61 = por %p59, %p60
      %p63 = scmp.ne.s32.totalorder %s46, %s62
      %p64 = scmp.eq.s32.totalorder %s38, 0
      %p65 = por %p63, %p64
      %s66 = ssub.s32 %s32, %s39
      %p67 = scmp.eq.s32.totalorder %s66, 0
      %s69 = sadd.s32 %s68, 1
      %s70 = scalar_select %p67, %s68, %s69
      %p73 = pneg %p67
      %p74 = scmp.eq.s32.totalorder %s32, 1
      %p75 = por %p73, %p74
      %p76 = scmp.ne.s32.totalorder %s68, %s71
      %p77 = scmp.eq.s32.totalorder %s32, 0
      %p78 = por %p76, %p77
      %p79 = scmp.ne.s32.totalorder %s68, %s71
      %p80 = scmp.eq.s32.totalorder %s37, 1
      %p81 = por %p79, %p80
      %p82 = scmp.ne.s32.totalorder %s71, %s72
      %p83 = scmp.eq.s32.totalorder %s37, 0
      %p84 = por %p82, %p83
      %p85 = scmp.ne.s32.totalorder %s71, %s72
      %p86 = scmp.eq.s32.totalorder %s38, 1
      %p87 = por %p85, %p86
      %p89 = scmp.ne.s32.totalorder %s72, %s88
      %p90 = scmp.eq.s32.totalorder %s38, 0
      %p91 = por %p89, %p90
      %s93 = sadd.s32 %s92, 1
      %p96 = scmp.eq.s32.totalorder %s32, 1
      %p97 = scmp.ne.s32.totalorder %s92, %s94
      %p98 = scmp.eq.s32.totalorder %s32, 0
      %p99 = por %p97, %p98
      %p100 = scmp.ne.s32.totalorder %s92, %s94
      %p101 = scmp.eq.s32.totalorder %s37, 1
      %p102 = por %p100, %p101
      %p103 = scmp.ne.s32.totalorder %s94, %s95
      %p104 = scmp.eq.s32.totalorder %s37, 0
      %p105 = por %p103, %p104
      %p106 = scmp.ne.s32.totalorder %s94, %s95
      %p107 = scmp.eq.s32.totalorder %s38, 1
      %p108 = por %p106, %p107
      %p110 = scmp.ne.s32.totalorder %s95, %s109
      %p111 = scmp.eq.s32.totalorder %s38, 0
      %p112 = por %p110, %p111
      %s114 = sadd.s32 %s113, 1
      %p117 = scmp.eq.s32.totalorder %s32, 1
      %p118 = scmp.ne.s32.totalorder %s113, %s115
      %p119 = scmp.eq.s32.totalorder %s32, 0
      %p120 = por %p118, %p119
      %p121 = scmp.ne.s32.totalorder %s113, %s115
      %p122 = scmp.eq.s32.totalorder %s37, 1
      %p123 = por %p121, %p122
      %p124 = scmp.ne.s32.totalorder %s115, %s116
      %p125 = scmp.eq.s32.totalorder %s37, 0
      %p126 = por %p124, %p125
      %p127 = scmp.ne.s32.totalorder %s115, %s116
      %p128 = scmp.eq.s32.totalorder %s38, 1
      %p129 = por %p127, %p128
      %p131 = scmp.ne.s32.totalorder %s116, %s130
      %p132 = scmp.eq.s32.totalorder %s38, 0
      %p133 = por %p131, %p132
      %s135 = sadd.s32 %s134, 1
      %p138 = scmp.eq.s32.totalorder %s32, 1
      %p139 = scmp.ne.s32.totalorder %s134, %s136
      %p140 = scmp.eq.s32.totalorder %s32, 0
      %p141 = por %p139, %p140
      %p142 = scmp.ne.s32.totalorder %s134, %s136
      %p143 = scmp.eq.s32.totalorder %s37, 1
      %p144 = por %p142, %p143
      %p145 = scmp.ne.s32.totalorder %s136, %s137
      %p146 = scmp.eq.s32.totalorder %s37, 0
      %p147 = por %p145, %p146
      %p148 = scmp.ne.s32.totalorder %s136, %s137
      %p149 = scmp.eq.s32.totalorder %s38, 1
      %p150 = por %p148, %p149
      %p152 = scmp.ne.s32.totalorder %s137, %s151
      %p153 = scmp.eq.s32.totalorder %s38, 0
      %p154 = por %p152, %p153
      %s156 = sadd.s32 %s155, 1
      %p159 = scmp.eq.s32.totalorder %s32, 1
      %p160 = scmp.ne.s32.totalorder %s155, %s157
      %p161 = scmp.eq.s32.totalorder %s32, 0
      %p162 = por %p160, %p161
      %p163 = scmp.ne.s32.totalorder %s155, %s157
      %p164 = scmp.eq.s32.totalorder %s37, 1
      %p165 = por %p163, %p164
      %p166 = scmp.ne.s32.totalorder %s157, %s158
      %p167 = scmp.eq.s32.totalorder %s37, 0
      %p168 = por %p166, %p167
      %p169 = scmp.ne.s32.totalorder %s157, %s158
      %p170 = scmp.eq.s32.totalorder %s38, 1
      %p171 = por %p169, %p170
      %p173 = scmp.ne.s32.totalorder %s158, %s172
      %p174 = scmp.eq.s32.totalorder %s38, 0
      %p175 = por %p173, %p174
      %s177 = sadd.s32 %s176, 1
      %p180 = scmp.eq.s32.totalorder %s32, 1
      %p181 = scmp.ne.s32.totalorder %s176, %s178
      %p182 = scmp.eq.s32.totalorder %s32, 0
      %p183 = por %p181, %p182
      %p184 = scmp.ne.s32.totalorder %s176, %s178
      %p185 = scmp.eq.s32.totalorder %s37, 1
      %p186 = por %p184, %p185
      %p187 = scmp.ne.s32.totalorder %s178, %s179
      %p188 = scmp.eq.s32.totalorder %s37, 0
      %p189 = por %p187, %p188
      %p190 = scmp.ne.s32.totalorder %s178, %s179
      %p191 = scmp.eq.s32.totalorder %s38, 1
      %p192 = por %p190, %p191
      %p194 = scmp.ne.s32.totalorder %s179, %s193
      %p195 = scmp.eq.s32.totalorder %s38, 0
      %p196 = por %p194, %p195
      %s198 = sadd.s32 %s197, 1
      %p201 = scmp.eq.s32.totalorder %s32, 1
      %p202 = scmp.ne.s32.totalorder %s197, %s199
      %p203 = scmp.eq.s32.totalorder %s32, 0
      %p204 = por %p202, %p203
      %p205 = scmp.ne.s32.totalorder %s197, %s199
      %p206 = scmp.eq.s32.totalorder %s37, 1
      %p207 = por %p205, %p206
      %p208 = scmp.ne.s32.totalorder %s199, %s200
      %p209 = scmp.eq.s32.totalorder %s37, 0
      %p210 = por %p208, %p209
      %p211 = scmp.ne.s32.totalorder %s199, %s200
      %p212 = scmp.eq.s32.totalorder %s38, 1
      %p213 = por %p211, %p212
      %p215 = scmp.ne.s32.totalorder %s200, %s214
      %p216 = scmp.eq.s32.totalorder %s38, 0
      %p217 = por %p215, %p216
      %s219 = sadd.s32 %s218, 1
      %p222 = scmp.eq.s32.totalorder %s32, 1
      %p223 = scmp.ne.s32.totalorder %s218, %s220
      %p224 = scmp.eq.s32.totalorder %s32, 0
      %p225 = por %p223, %p224
      %p226 = scmp.ne.s32.totalorder %s218, %s220
      %p227 = scmp.eq.s32.totalorder %s37, 1
      %p228 = por %p226, %p227
      %p229 = scmp.ne.s32.totalorder %s220, %s221
      %p230 = scmp.eq.s32.totalorder %s37, 0
      %p231 = por %p229, %p230
      %p232 = scmp.ne.s32.totalorder %s220, %s221
      %p233 = scmp.eq.s32.totalorder %s38, 1
      %p234 = por %p232, %p233
      %p236 = scmp.ne.s32.totalorder %s221, %s235
      %p237 = scmp.eq.s32.totalorder %s38, 0
      %p238 = por %p236, %p237
      %s240 = sadd.s32 %s239, 1
      %p243 = scmp.eq.s32.totalorder %s32, 1
      %p244 = scmp.ne.s32.totalorder %s239, %s241
      %p245 = scmp.eq.s32.totalorder %s32, 0
      %p246 = por %p244, %p245
      %p247 = scmp.ne.s32.totalorder %s239, %s241
      %p248 = scmp.eq.s32.totalorder %s37, 1
      %p249 = por %p247, %p248
      %p250 = scmp.ne.s32.totalorder %s241, %s242
      %p251 = scmp.eq.s32.totalorder %s37, 0
      %p252 = por %p250, %p251
      %p253 = scmp.ne.s32.totalorder %s241, %s242
      %p254 = scmp.eq.s32.totalorder %s38, 1
      %p255 = por %p253, %p254
      %p257 = scmp.ne.s32.totalorder %s242, %s256
      %p258 = scmp.eq.s32.totalorder %s38, 0
      %p259 = por %p257, %p258
      %s261 = sadd.s32 %s260, 1
      %p264 = scmp.eq.s32.totalorder %s32, 1
      %p265 = scmp.ne.s32.totalorder %s260, %s262
      %p266 = scmp.eq.s32.totalorder %s32, 0
      %p267 = por %p265, %p266
      %p268 = scmp.ne.s32.totalorder %s260, %s262
      %p269 = scmp.eq.s32.totalorder %s37, 1
      %p270 = por %p268, %p269
      %p271 = scmp.ne.s32.totalorder %s262, %s263
      %p272 = scmp.eq.s32.totalorder %s37, 0
      %p273 = por %p271, %p272
      %p274 = scmp.ne.s32.totalorder %s262, %s263
      %p275 = scmp.eq.s32.totalorder %s38, 1
      %p276 = por %p274, %p275
      %p278 = scmp.ne.s32.totalorder %s263, %s277
      %p279 = scmp.eq.s32.totalorder %s38, 0
      %p280 = por %p278, %p279
      %s282 = sadd.s32 %s281, 1
      %p285 = scmp.eq.s32.totalorder %s32, 1
      %p286 = scmp.ne.s32.totalorder %s281, %s283
      %p287 = scmp.eq.s32.totalorder %s32, 0
      %p288 = por %p286, %p287
      %p289 = scmp.ne.s32.totalorder %s281, %s283
      %p290 = scmp.eq.s32.totalorder %s37, 1
      %p291 = por %p289, %p290
      %p292 = scmp.ne.s32.totalorder %s283, %s284
      %p293 = scmp.eq.s32.totalorder %s37, 0
      %p294 = por %p292, %p293
      %p295 = scmp.ne.s32.totalorder %s283, %s284
      %p296 = scmp.eq.s32.totalorder %s38, 1
      %p297 = por %p295, %p296
      %p299 = scmp.ne.s32.totalorder %s284, %s298
      %p300 = scmp.eq.s32.totalorder %s38, 0
      %p301 = por %p299, %p300
      %s303 = sadd.s32 %s302, 1
      %p306 = scmp.eq.s32.totalorder %s32, 1
      %p307 = scmp.ne.s32.totalorder %s302, %s304
      %p308 = scmp.eq.s32.totalorder %s32, 0
      %p309 = por %p307, %p308
      %p310 = scmp.ne.s32.totalorder %s302, %s304
      %p311 = scmp.eq.s32.totalorder %s37, 1
      %p312 = por %p310, %p311
      %p313 = scmp.ne.s32.totalorder %s304, %s305
      %p314 = scmp.eq.s32.totalorder %s37, 0
      %p315 = por %p313, %p314
      %p316 = scmp.ne.s32.totalorder %s304, %s305
      %p317 = scmp.eq.s32.totalorder %s38, 1
      %p318 = por %p316, %p317
      %p320 = scmp.ne.s32.totalorder %s305, %s319
      %p321 = scmp.eq.s32.totalorder %s38, 0
      %p322 = por %p320, %p321
      %s324 = sadd.s32 %s323, 1
      %p327 = scmp.eq.s32.totalorder %s32, 1
      %p328 = scmp.ne.s32.totalorder %s323, %s325
      %p329 = scmp.eq.s32.totalorder %s32, 0
      %p330 = por %p328, %p329
      %p331 = scmp.ne.s32.totalorder %s323, %s325
      %p332 = scmp.eq.s32.totalorder %s37, 1
      %p333 = por %p331, %p332
      %p334 = scmp.ne.s32.totalorder %s325, %s326
      %p335 = scmp.eq.s32.totalorder %s37, 0
      %p336 = por %p334, %p335
      %p337 = scmp.ne.s32.totalorder %s325, %s326
      %p338 = scmp.eq.s32.totalorder %s38, 1
      %p339 = por %p337, %p338
      %p341 = scmp.ne.s32.totalorder %s326, %s340
      %p342 = scmp.eq.s32.totalorder %s38, 0
      %p343 = por %p341, %p342
      %s345 = sadd.s32 %s344, 1
      %p348 = scmp.eq.s32.totalorder %s32, 1
      %p349 = scmp.ne.s32.totalorder %s344, %s346
      %p350 = scmp.eq.s32.totalorder %s32, 0
      %p351 = por %p349, %p350
      %p352 = scmp.ne.s32.totalorder %s344, %s346
      %p353 = scmp.eq.s32.totalorder %s37, 1
      %p354 = por %p352, %p353
      %p355 = scmp.ne.s32.totalorder %s346, %s347
      %p356 = scmp.eq.s32.totalorder %s37, 0
      %p357 = por %p355, %p356
      %p358 = scmp.ne.s32.totalorder %s346, %s347
      %p359 = scmp.eq.s32.totalorder %s38, 1
      %p360 = por %p358, %p359
      %p362 = scmp.ne.s32.totalorder %s347, %s361
      %p363 = scmp.eq.s32.totalorder %s38, 0
      %p364 = por %p362, %p363
      %s366 = sadd.s32 %s365, 1
      %p369 = scmp.eq.s32.totalorder %s32, 1
      %p370 = scmp.ne.s32.totalorder %s365, %s367
      %p371 = scmp.eq.s32.totalorder %s32, 0
      %p372 = por %p370, %p371
      %p373 = scmp.ne.s32.totalorder %s365, %s367
      %p374 = scmp.eq.s32.totalorder %s37, 1
      %p375 = por %p373, %p374
      %p376 = scmp.ne.s32.totalorder %s367, %s368
      %p377 = scmp.eq.s32.totalorder %s37, 0
      %p378 = por %p376, %p377
      %p379 = scmp.ne.s32.totalorder %s367, %s368
      %p380 = scmp.eq.s32.totalorder %s38, 1
      %p381 = por %p379, %p380
      %p383 = scmp.ne.s32.totalorder %s368, %s382
      %p384 = scmp.eq.s32.totalorder %s38, 0
      %p385 = por %p383, %p384
      %s387 = sadd.s32 %s386, 1
      %p390 = scmp.eq.s32.totalorder %s32, 1
      %p391 = scmp.ne.s32.totalorder %s386, %s388
      %p392 = scmp.eq.s32.totalorder %s32, 0
      %p393 = por %p391, %p392
      %p394 = scmp.ne.s32.totalorder %s386, %s388
      %p395 = scmp.eq.s32.totalorder %s37, 1
      %p396 = por %p394, %p395
      %p397 = scmp.ne.s32.totalorder %s388, %s389
      %p398 = scmp.eq.s32.totalorder %s37, 0
      %p399 = por %p397, %p398
      %p400 = scmp.ne.s32.totalorder %s388, %s389
      %p401 = scmp.eq.s32.totalorder %s38, 1
      %p402 = por %p400, %p401
      %p404 = scmp.ne.s32.totalorder %s389, %s403
      %p405 = scmp.eq.s32.totalorder %s38, 0
      %p406 = por %p404, %p405
      %s408 = sadd.s32 %s407, 1
      %p411 = scmp.eq.s32.totalorder %s32, 1
      %p412 = scmp.ne.s32.totalorder %s407, %s409
      %p413 = scmp.eq.s32.totalorder %s32, 0
      %p414 = por %p412, %p413
      %p415 = scmp.ne.s32.totalorder %s407, %s409
      %p416 = scmp.eq.s32.totalorder %s37, 1
      %p417 = por %p415, %p416
      %p418 = scmp.ne.s32.totalorder %s409, %s410
      %p419 = scmp.eq.s32.totalorder %s37, 0
      %p420 = por %p418, %p419
      %p421 = scmp.ne.s32.totalorder %s409, %s410
      %p422 = scmp.eq.s32.totalorder %s38, 1
      %p423 = por %p421, %p422
      %p425 = scmp.ne.s32.totalorder %s410, %s424
      %p426 = scmp.eq.s32.totalorder %s38, 0
      %p427 = por %p425, %p426
      %s428 = ssub.s32 %s32, %s39
      %p429 = scmp.eq.s32.totalorder %s428, 0
      %s431 = sadd.s32 %s430, 1
      %s432 = scalar_select %p429, %s430, %s431
      %p435 = pneg %p429
      %p436 = scmp.eq.s32.totalorder %s32, 1
      %p437 = por %p435, %p436
      %p438 = scmp.ne.s32.totalorder %s430, %s433
      %p439 = scmp.eq.s32.totalorder %s32, 0
      %p440 = por %p438, %p439
      %p441 = scmp.ne.s32.totalorder %s430, %s433
      %p442 = scmp.eq.s32.totalorder %s37, 1
      %p443 = por %p441, %p442
      %p444 = scmp.ne.s32.totalorder %s433, %s434
      %p445 = scmp.eq.s32.totalorder %s37, 0
      %p446 = por %p444, %p445
      %p447 = scmp.ne.s32.totalorder %s433, %s434
      %p448 = scmp.eq.s32.totalorder %s38, 1
      %p449 = por %p447, %p448
      %p451 = scmp.ne.s32.totalorder %s434, %s450
      %p452 = scmp.eq.s32.totalorder %s38, 0
      %p453 = por %p451, %p452
      %p454 = scmp.le.s32.totalorder 1, %s32
      %p455 = scmp.lt.s32.totalorder %s32, 3
      %p456 = pnand %p454, %p455
      %p457 = pneg %p456
      // Predicated region
      $region9: #{tpu_custom_call.1} parent=5 // pred_check
        _
      $region10: #{tpu_custom_call.1} parent=5 // pred_check_branch
        %459 = sbr.rel (%p456) target = $region12
      $region11: #{tpu_custom_call.1} parent=5 // pred_region
        %s460 = ssub.s32 %s32, 1
        // Predicated region
        $region13: #{tpu_custom_call.1} parent=11 // pred_check
          %p461 = pneg %p105
        $region14: #{tpu_custom_call.1} parent=11 // pred_check_branch
          %463 = sbr.rel (%p461) target = $region16
        $region15: #{tpu_custom_call.1} parent=11 // pred_region
          _
        $region16: #{tpu_custom_call.1} parent=11 // pred_fallthru
          _
        // Predicated region
        $region17: #{tpu_custom_call.1} parent=11 // pred_check
          %p464 = pneg %p126
        $region18: #{tpu_custom_call.1} parent=11 // pred_check_branch
          %466 = sbr.rel (%p464) target = $region20
        $region19: #{tpu_custom_call.1} parent=11 // pred_region
          _
        $region20: #{tpu_custom_call.1} parent=11 // pred_fallthru
          _
        // Predicated region
        $region21: #{tpu_custom_call.1} parent=11 // pred_check
          %p467 = pneg %p147
        $region22: #{tpu_custom_call.1} parent=11 // pred_check_branch
          %469 = sbr.rel (%p467) target = $region24
        $region23: #{tpu_custom_call.1} parent=11 // pred_region
          _
        $region24: #{tpu_custom_call.1} parent=11 // pred_fallthru
          _
        // Predicated region
        $region25: #{tpu_custom_call.1} parent=11 // pred_check
          %p470 = pneg %p168
        $region26: #{tpu_custom_call.1} parent=11 // pred_check_branch
          %472 = sbr.rel (%p470) target = $region28
        $region27: #{tpu_custom_call.1} parent=11 // pred_region
          _
        $region28: #{tpu_custom_call.1} parent=11 // pred_fallthru
          _
        // Predicated region
        $region29: #{tpu_custom_call.1} parent=11 // pred_check
          %p473 = pneg %p189
        $region30: #{tpu_custom_call.1} parent=11 // pred_check_branch
          %475 = sbr.rel (%p473) target = $region32
        $region31: #{tpu_custom_call.1} parent=11 // pred_region
          _
        $region32: #{tpu_custom_call.1} parent=11 // pred_fallthru
          _
        // Predicated region
        $region33: #{tpu_custom_call.1} parent=11 // pred_check
          %p476 = pneg %p210
        $region34: #{tpu_custom_call.1} parent=11 // pred_check_branch
          %478 = sbr.rel (%p476) target = $region36
        $region35: #{tpu_custom_call.1} parent=11 // pred_region
          _
        $region36: #{tpu_custom_call.1} parent=11 // pred_fallthru
          _
        // Predicated region
        $region37: #{tpu_custom_call.1} parent=11 // pred_check
          %p479 = pneg %p231
        $region38: #{tpu_custom_call.1} parent=11 // pred_check_branch
          %481 = sbr.rel (%p479) target = $region40
        $region39: #{tpu_custom_call.1} parent=11 // pred_region
          _
        $region40: #{tpu_custom_call.1} parent=11 // pred_fallthru
          _
        // Predicated region
        $region41: #{tpu_custom_call.1} parent=11 // pred_check
          %p482 = pneg %p252
        $region42: #{tpu_custom_call.1} parent=11 // pred_check_branch
          %484 = sbr.rel (%p482) target = $region44
        $region43: #{tpu_custom_call.1} parent=11 // pred_region
          _
        $region44: #{tpu_custom_call.1} parent=11 // pred_fallthru
          _
        // Predicated region
        $region45: #{tpu_custom_call.1} parent=11 // pred_check
          %p485 = pneg %p273
        $region46: #{tpu_custom_call.1} parent=11 // pred_check_branch
          %487 = sbr.rel (%p485) target = $region48
        $region47: #{tpu_custom_call.1} parent=11 // pred_region
          _
        $region48: #{tpu_custom_call.1} parent=11 // pred_fallthru
          _
        // Predicated region
        $region49: #{tpu_custom_call.1} parent=11 // pred_check
          %p488 = pneg %p294
        $region50: #{tpu_custom_call.1} parent=11 // pred_check_branch
          %490 = sbr.rel (%p488) target = $region52
        $region51: #{tpu_custom_call.1} parent=11 // pred_region
          _
        $region52: #{tpu_custom_call.1} parent=11 // pred_fallthru
          _
        // Predicated region
        $region53: #{tpu_custom_call.1} parent=11 // pred_check
          %p491 = pneg %p315
        $region54: #{tpu_custom_call.1} parent=11 // pred_check_branch
          %493 = sbr.rel (%p491) target = $region56
        $region55: #{tpu_custom_call.1} parent=11 // pred_region
          _
        $region56: #{tpu_custom_call.1} parent=11 // pred_fallthru
          _
        // Predicated region
        $region57: #{tpu_custom_call.1} parent=11 // pred_check
          %p494 = pneg %p336
        $region58: #{tpu_custom_call.1} parent=11 // pred_check_branch
          %496 = sbr.rel (%p494) target = $region60
        $region59: #{tpu_custom_call.1} parent=11 // pred_region
          _
        $region60: #{tpu_custom_call.1} parent=11 // pred_fallthru
          _
        // Predicated region
        $region61: #{tpu_custom_call.1} parent=11 // pred_check
          %p497 = pneg %p357
        $region62: #{tpu_custom_call.1} parent=11 // pred_check_branch
          %499 = sbr.rel (%p497) target = $region64
        $region63: #{tpu_custom_call.1} parent=11 // pred_region
          _
        $region64: #{tpu_custom_call.1} parent=11 // pred_fallthru
          _
        // Predicated region
        $region65: #{tpu_custom_call.1} parent=11 // pred_check
          %p500 = pneg %p378
        $region66: #{tpu_custom_call.1} parent=11 // pred_check_branch
          %502 = sbr.rel (%p500) target = $region68
        $region67: #{tpu_custom_call.1} parent=11 // pred_region
          _
        $region68: #{tpu_custom_call.1} parent=11 // pred_fallthru
          _
        // Predicated region
        $region69: #{tpu_custom_call.1} parent=11 // pred_check
          %p503 = pneg %p399
        $region70: #{tpu_custom_call.1} parent=11 // pred_check_branch
          %505 = sbr.rel (%p503) target = $region72
        $region71: #{tpu_custom_call.1} parent=11 // pred_region
          _
        $region72: #{tpu_custom_call.1} parent=11 // pred_fallthru
          _
        // Predicated region
        $region73: #{tpu_custom_call.1} parent=11 // pred_check
          %p506 = pneg %p420
        $region74: #{tpu_custom_call.1} parent=11 // pred_check_branch
          %508 = sbr.rel (%p506) target = $region76
        $region75: #{tpu_custom_call.1} parent=11 // pred_region
          _
        $region76: #{tpu_custom_call.1} parent=11 // pred_fallthru
          _
      $region12: #{tpu_custom_call.1} parent=5 // pred_fallthru
        _
      %p509 = scmp.lt.s32.totalorder %s32, 2
      // Predicated region
      $region77: #{tpu_custom_call.1} parent=5 // pred_check
        %p510 = pneg %p509
      $region78: #{tpu_custom_call.1} parent=5 // pred_check_branch
        %512 = sbr.rel (%p510) target = $region80
      $region79: #{tpu_custom_call.1} parent=5 // pred_region
        // Predicated region
        $region81: #{tpu_custom_call.1} parent=79 // pred_check
          %p513 = pneg %p52
        $region82: #{tpu_custom_call.1} parent=79 // pred_check_branch
          %515 = sbr.rel (%p513) target = $region84
        $region83: #{tpu_custom_call.1} parent=79 // pred_region
          %s516 = sand.u32 %s42, 1
          %s517 = scalar_lea.sflag [#allocation5], %s516
          %s518 = sand.u32 %s42, 1
          %s519 = smul.addr %s518, 8
          %s520 = scalar_lea.vmem [#allocation4], %s519
          %s522 = ssub.s32 128, 128
          %523 = vsyncadd %s517, %s522
          %s524 = smul.addr %s32, 128
          %s525 = scalar_lea.hbm %s0, %s524
          %s527 = sshll.u32 %s520, 4
          %s528 = int_to_ptr.vmem [resolvable:$true] %s527
          %530 = dma.hbm_to_vmem [thread:$0]  %s525, 128, %s528, %s517
        $region84: #{tpu_custom_call.1} parent=79 // pred_fallthru
          _
        // Predicated region
        $region85: #{tpu_custom_call.1} parent=79 // pred_check
          %p531 = pneg %p78
        $region86: #{tpu_custom_call.1} parent=79 // pred_check_branch
          %533 = sbr.rel (%p531) target = $region88
        $region87: #{tpu_custom_call.1} parent=79 // pred_region
          %p534 = scmp.lt.s32.totalorder %s32, 1
          %s535 = scalar_select %p534, %s32, 1
          %s536 = scalar_lea.vmem %s1, %s535
        $region88: #{tpu_custom_call.1} parent=79 // pred_fallthru
          _
      $region80: #{tpu_custom_call.1} parent=5 // pred_fallthru
        _
      %p537 = scmp.le.s32.totalorder 1, %s32
      %p538 = scmp.lt.s32.totalorder %s32, 3
      %p539 = pnand %p537, %p538
      %p540 = pneg %p539
      // Predicated region
      $region89: #{tpu_custom_call.1} parent=5 // pred_check
        _
      $region90: #{tpu_custom_call.1} parent=5 // pred_check_branch
        %542 = sbr.rel (%p539) target = $region92
      $region91: #{tpu_custom_call.1} parent=5 // pred_region
        %s543 = ssub.s32 %s32, 1
        %s544 = sand.u32 %s45, 1
        %s545 = scalar_lea.sflag [#allocation5], %s544
        %s546 = sand.u32 %s45, 1
        %s547 = smul.addr %s546, 8
        %s548 = scalar_lea.vmem [#allocation4], %s547
        // Predicated region
        $region93: #{tpu_custom_call.1} parent=91 // pred_check
          %p549 = pneg %p58
        $region94: #{tpu_custom_call.1} parent=91 // pred_check_branch
          %551 = sbr.rel (%p549) target = $region96
        $region95: #{tpu_custom_call.1} parent=91 // pred_region
          %552 = dma.done %s545, 128
        $region96: #{tpu_custom_call.1} parent=91 // pred_fallthru
          _
        %s553 = sand.u32 %s45, 1
        %s554 = scalar_lea.sflag [#allocation5], %s553
        %s555 = sand.u32 %s45, 1
        %s556 = smul.addr %s555, 8
        %s557 = scalar_lea.vmem [#allocation4], %s556
        %p558 = pneg %p58
        %p559 = pneg %p55
        %p560 = scmp.lt.s32.totalorder %s37, 1
        %s561 = scalar_select %p560, %s37, 1
        %s562 = scalar_lea.vmem %s1, %s561
        %p563 = pneg %p84
        %p564 = pneg %p81
        %p565 = pneg %p105
        %p566 = pneg %p102
        %p567 = pneg %p126
        %p568 = pneg %p123
        %p569 = pneg %p147
        %p570 = pneg %p144
        %p571 = pneg %p168
        %p572 = pneg %p165
        %p573 = pneg %p189
        %p574 = pneg %p186
        %p575 = pneg %p210
        %p576 = pneg %p207
        %p577 = pneg %p231
        %p578 = pneg %p228
        %p579 = pneg %p252
        %p580 = pneg %p249
        %p581 = pneg %p273
        %p582 = pneg %p270
        %p583 = pneg %p294
        %p584 = pneg %p291
        %p585 = pneg %p315
        %p586 = pneg %p312
        %p587 = pneg %p336
        %p588 = pneg %p333
        %p589 = pneg %p357
        %p590 = pneg %p354
        %p591 = pneg %p378
        %p592 = pneg %p375
        %p593 = pneg %p399
        %p594 = pneg %p396
        %p595 = pneg %p420
        %p596 = pneg %p417
        %p597 = pneg %p446
        %p598 = pneg %p443
        %s599 = sand.u32 %s433, 1
        %s600 = scalar_lea.sflag [#allocation6], %s599
        %s601 = sand.u32 %s433, 1
        %s602 = scalar_lea.vmem [#allocation7], %s601
        %p603 = scmp.lt.s32.totalorder %s37, 1
        %s604 = scalar_select %p603, %s37, 1
        %s605 = scalar_lea.vmem %s1, %s604
        %v607 = vld [vmem:[%s548] sm:$0xff]
        %v608 = vld [vmem:[%s4] sm:$0xff]
        %v609 = vld [vmem:[%s4 + $0x8] sm:$0xff]
        %v610 = vld [vmem:[%s4 + $0x10] sm:$0xff]
        %v611 = vld [vmem:[%s4 + $0x18] sm:$0xff]
        %v612 = vpack.c.bf16 %v607, %v607
        %v613 = vpack.c.bf16 %v609, %v608
        %v614 = vpack.c.bf16 %v611, %v610
        %v615 = vld [vmem:[%s5] sm:$0x1]
        %v617 = vlaneseq
        %v618 = vshrl.u32 %v617, 7
        %v619 = vsub.s32 0, %v618
        %v620 = vrot.slane %v615, %v619
        %vm622 = vcmask 261120
        %v624 = vsel %vm622, %v612, 0
        %626 = vmatprep.subr.bf16.mxu0 0
        %627 = vmatpush1.bf16.msra.mxu0 %v613
        %628 = vmatprep.subr.bf16.mxu0 0
        %629 = vmatpush1.bf16.msra.mxu0 %v614
        %630 = vmatprep.subr.bf16.mxu0 0
        %631 = vmatpush1.bf16.msra.mxu0 0
        %632 = vmatprep.subr.bf16.mxu0 0
        %633 = vmatpush1.bf16.msra.mxu0 0
        %634 = vmatprep.subr.bf16.mxu0 0
        %635 = vmatpush1.bf16.msra.mxu0 0
        %636 = vmatprep.subr.bf16.mxu0 0
        %637 = vmatpush1.bf16.msra.mxu0 0
        %638 = vmatprep.subr.bf16.mxu0 0
        %639 = vmatpush1.bf16.msra.mxu0 0
        %640 = vmatprep.subr.bf16.mxu0 0
        %641 = vmatpush1.bf16.msra.mxu0 0
        %642 = vmatprep.subr.bf16.mxu0 0
        %643 = vmatpush1.bf16.msra.mxu0 0
        %644 = vmatprep.subr.bf16.mxu0 0
        %645 = vmatpush1.bf16.msra.mxu0 0
        %646 = vmatprep.subr.bf16.mxu0 0
        %647 = vmatpush1.bf16.msra.mxu0 0
        %648 = vmatprep.subr.bf16.mxu0 0
        %649 = vmatpush1.bf16.msra.mxu0 0
        %650 = vmatprep.subr.bf16.mxu0 0
        %651 = vmatpush1.bf16.msra.mxu0 0
        %652 = vmatprep.subr.bf16.mxu0 0
        %653 = vmatpush1.bf16.msra.mxu0 0
        %654 = vmatprep.subr.bf16.mxu0 0
        %655 = vmatpush1.bf16.msra.mxu0 0
        %656 = vmatprep.subr.bf16.mxu0 0
        %657 = vmatpush1.bf16.msra.mxu0 0
        %658 = vmatprep.mubr.bf16.mxu0 0
        %659 = vmatmul.mubr.bf16.gmra.mrb[0].mxu0 %v624
        %v660 = vpop.f32.mrb[0].mxu0
        %v661 = vadd.f32 %v620, %v660
        %v662 = vpop.f32.mrb[0].mxu0
        %v663 = vpop.f32.mrb[0].mxu0
        %v664 = vpop.f32.mrb[0].mxu0
        %665 = vdwg.mxu0
        %v666 = vld [vmem:[%s2] sm:$0xff]
        %v667 = vld [vmem:[%s2 + $0x8] sm:$0xff]
        %v668 = vld [vmem:[%s2 + $0x10] sm:$0xff]
        %v669 = vld [vmem:[%s2 + $0x18] sm:$0xff]
        %v670 = vpack.c.bf16 %v667, %v666
        %v671 = vpack.c.bf16 %v669, %v668
        %v672 = vld [vmem:[%s3] sm:$0x1]
        %673 = vmatprep.subr.bf16.mxu0 0
        %674 = vmatpush1.bf16.msra.mxu0 %v670
        %675 = vmatprep.subr.bf16.mxu0 0
        %676 = vmatpush1.bf16.msra.mxu0 %v671
        %677 = vmatprep.subr.bf16.mxu0 0
        %678 = vmatpush1.bf16.msra.mxu0 0
        %679 = vmatprep.subr.bf16.mxu0 0
        %680 = vmatpush1.bf16.msra.mxu0 0
        %681 = vmatprep.subr.bf16.mxu0 0
        %682 = vmatpush1.bf16.msra.mxu0 0
        %683 = vmatprep.subr.bf16.mxu0 0
        %684 = vmatpush1.bf16.msra.mxu0 0
        %685 = vmatprep.subr.bf16.mxu0 0
        %686 = vmatpush1.bf16.msra.mxu0 0
        %687 = vmatprep.subr.bf16.mxu0 0
        %688 = vmatpush1.bf16.msra.mxu0 0
        %689 = vmatprep.subr.bf16.mxu0 0
        %690 = vmatpush1.bf16.msra.mxu0 0
        %691 = vmatprep.subr.bf16.mxu0 0
        %692 = vmatpush1.bf16.msra.mxu0 0
        %693 = vmatprep.subr.bf16.mxu0 0
        %694 = vmatpush1.bf16.msra.mxu0 0
        %695 = vmatprep.subr.bf16.mxu0 0
        %696 = vmatpush1.bf16.msra.mxu0 0
        %697 = vmatprep.subr.bf16.mxu0 0
        %698 = vmatpush1.bf16.msra.mxu0 0
        %699 = vmatprep.subr.bf16.mxu0 0
        %700 = vmatpush1.bf16.msra.mxu0 0
        %701 = vmatprep.subr.bf16.mxu0 0
        %702 = vmatpush1.bf16.msra.mxu0 0
        %703 = vmatprep.subr.bf16.mxu0 0
        %704 = vmatpush1.bf16.msra.mxu0 0
        %705 = vmatprep.mubr.bf16.mxu0 0
        %706 = vmatmul.mubr.bf16.gmra.mrb[0].mxu0 %v624
        %v707 = vpop.f32.mrb[0].mxu0
        %v708 = vadd.f32 %v672, %v707
        %v709 = vpop.f32.mrb[0].mxu0
        %v710 = vpop.f32.mrb[0].mxu0
        %v711 = vpop.f32.mrb[0].mxu0
        %712 = vdwg.mxu0
        %v713 = vmul.f32 %v708, 0.25
        %v714 = vld [vmem:[%s605] sm:$0x1]
        %v715 = vsub.f32 %v714, 1.0
        %v716 = vmul.f32 %v715, 1e+09
        %v717 = vpack.c.bf16 %v713, %v713
        %v718 = vpack.c.bf16 %v661, %v661
        %vm719 = vcmask 130048
        %v721 = vsel %vm719, %v717, 0
        %v724 = vsel %vm719, %v718, 0
        %726 = vmatprep.subr.bf16.mxu0 0
        %727 = vmatpush1.bf16.xpose.msra.mxu0 %v724
        %728 = vmatprep.subr.bf16.mxu0 0
        %729 = vmatpush1.bf16.xpose.msra.mxu0 0
        %730 = vmatprep.subr.bf16.mxu0 0
        %731 = vmatpush1.bf16.xpose.msra.mxu0 0
        %732 = vmatprep.subr.bf16.mxu0 0
        %733 = vmatpush1.bf16.xpose.msra.mxu0 0
        %734 = vmatprep.subr.bf16.mxu0 0
        %735 = vmatpush1.bf16.xpose.msra.mxu0 0
        %736 = vmatprep.subr.bf16.mxu0 0
        %737 = vmatpush1.bf16.xpose.msra.mxu0 0
        %738 = vmatprep.subr.bf16.mxu0 0
        %739 = vmatpush1.bf16.xpose.msra.mxu0 0
        %740 = vmatprep.subr.bf16.mxu0 0
        %741 = vmatpush1.bf16.xpose.msra.mxu0 0
        %742 = vmatprep.subr.bf16.mxu0 0
        %743 = vmatpush1.bf16.xpose.msra.mxu0 0
        %744 = vmatprep.subr.bf16.mxu0 0
        %745 = vmatpush1.bf16.xpose.msra.mxu0 0
        %746 = vmatprep.subr.bf16.mxu0 0
        %747 = vmatpush1.bf16.xpose.msra.mxu0 0
        %748 = vmatprep.subr.bf16.mxu0 0
        %749 = vmatpush1.bf16.xpose.msra.mxu0 0
        %750 = vmatprep.subr.bf16.mxu0 0
        %751 = vmatpush1.bf16.xpose.msra.mxu0 0
        %752 = vmatprep.subr.bf16.mxu0 0
        %753 = vmatpush1.bf16.xpose.msra.mxu0 0
        %754 = vmatprep.subr.bf16.mxu0 0
        %755 = vmatpush1.bf16.xpose.msra.mxu0 0
        %756 = vmatprep.subr.bf16.mxu0 0
        %757 = vmatpush1.bf16.xpose.msra.mxu0 0
        %758 = vmatprep.mubr.bf16.mxu0 0
        %759 = vmatmul.mubr.bf16.gmra.mrb[0].mxu0 %v721
        %v760 = vpop.f32.mrb[0].mxu0
        %v761 = vadd.f32 %v716, %v760
        %v762 = vpop.f32.mrb[0].mxu0
        %v763 = vpop.f32.mrb[0].mxu0
        %v764 = vpop.f32.mrb[0].mxu0
        %765 = vdwg.mxu0
        %vm766 = vcmask 57344
        %v767 = vsel %vm766, %v761, -inf
        %768 = vmax.xlane.f32.xlu0 %v767
        %v769 = vpop.xlane.xlu0 %768
        %v770 = vsub.f32 %v761, %v769
        %v771 = vmul.f32 %v770, 1.442695
        %v772 = vpow.pop %v771
        %v773 = vsel %vm766, %v772, 0.0
        %774 = vadd.xlane.f32.xlu0 %v773
        %v775 = vpop.xlane.xlu0 %774
        %v776 = vrcp.pop %v775
        %v777 = vmul.f32 %v772, %v776
        %v778 = vpack.c.bf16 %v777, %v777
        %780 = vrot.lane.b32.xlu0 %v718, 96
        %v781 = vpop.permute.xlu0 %780
        %vm782 = vcmask 64512
        %v784 = vsel %vm782, %v778, 0
        %vm786 = vcmask 1043456
        %v788 = vsel %vm786, %v781, 0
        %790 = vmatprep.subr.bf16.mxu0 0
        %791 = vmatpush1.bf16.msra.mxu0 %v788
        %792 = vmatprep.subr.bf16.mxu0 0
        %793 = vmatpush1.bf16.msra.mxu0 0
        %794 = vmatprep.subr.bf16.mxu0 0
        %795 = vmatpush1.bf16.msra.mxu0 0
        %796 = vmatprep.subr.bf16.mxu0 0
        %797 = vmatpush1.bf16.msra.mxu0 0
        %798 = vmatprep.subr.bf16.mxu0 0
        %799 = vmatpush1.bf16.msra.mxu0 0
        %800 = vmatprep.subr.bf16.mxu0 0
        %801 = vmatpush1.bf16.msra.mxu0 0
        %802 = vmatprep.subr.bf16.mxu0 0
        %803 = vmatpush1.bf16.msra.mxu0 0
        %804 = vmatprep.subr.bf16.mxu0 0
        %805 = vmatpush1.bf16.msra.mxu0 0
        %806 = vmatprep.subr.bf16.mxu0 0
        %807 = vmatpush1.bf16.msra.mxu0 0
        %808 = vmatprep.subr.bf16.mxu0 0
        %809 = vmatpush1.bf16.msra.mxu0 0
        %810 = vmatprep.subr.bf16.mxu0 0
        %811 = vmatpush1.bf16.msra.mxu0 0
        %812 = vmatprep.subr.bf16.mxu0 0
        %813 = vmatpush1.bf16.msra.mxu0 0
        %814 = vmatprep.subr.bf16.mxu0 0
        %815 = vmatpush1.bf16.msra.mxu0 0
        %816 = vmatprep.subr.bf16.mxu0 0
        %817 = vmatpush1.bf16.msra.mxu0 0
        %818 = vmatprep.subr.bf16.mxu0 0
        %819 = vmatpush1.bf16.msra.mxu0 0
        %820 = vmatprep.subr.bf16.mxu0 0
        %821 = vmatpush1.bf16.msra.mxu0 0
        %822 = vmatprep.mubr.bf16.mxu0 0
        %823 = vmatmul.mubr.bf16.gmra.mrb[0].mxu0 %v784
        %v824 = vpop.f32.mrb[0].mxu0
        %v825 = vadd.f32 0.0, %v824
        %v826 = vpop.f32.mrb[0].mxu0
        %v827 = vpop.f32.mrb[0].mxu0
        %v828 = vpop.f32.mrb[0].mxu0
        %829 = vdwg.mxu0
        %vm830 = vcmask 122880
        %831 = vst.msk [vmem:[#allocation2] sm:$0x1] %vm830, %v825
        %833 = vrot.lane.b32.xlu0 %v717, 112
        %v834 = vpop.permute.xlu0 %833
        %835 = vrot.lane.b32.xlu0 %v718, 112
        %v836 = vpop.permute.xlu0 %835
        %v838 = vsel %vm719, %v834, 0
        %v841 = vsel %vm719, %v836, 0
        %843 = vmatprep.subr.bf16.mxu0 0
        %844 = vmatpush1.bf16.xpose.msra.mxu0 %v841
        %845 = vmatprep.subr.bf16.mxu0 0
        %846 = vmatpush1.bf16.xpose.msra.mxu0 0
        %847 = vmatprep.subr.bf16.mxu0 0
        %848 = vmatpush1.bf16.xpose.msra.mxu0 0
        %849 = vmatprep.subr.bf16.mxu0 0
        %850 = vmatpush1.bf16.xpose.msra.mxu0 0
        %851 = vmatprep.subr.bf16.mxu0 0
        %852 = vmatpush1.bf16.xpose.msra.mxu0 0
        %853 = vmatprep.subr.bf16.mxu0 0
        %854 = vmatpush1.bf16.xpose.msra.mxu0 0
        %855 = vmatprep.subr.bf16.mxu0 0
        %856 = vmatpush1.bf16.xpose.msra.mxu0 0
        %857 = vmatprep.subr.bf16.mxu0 0
        %858 = vmatpush1.bf16.xpose.msra.mxu0 0
        %859 = vmatprep.subr.bf16.mxu0 0
        %860 = vmatpush1.bf16.xpose.msra.mxu0 0
        %861 = vmatprep.subr.bf16.mxu0 0
        %862 = vmatpush1.bf16.xpose.msra.mxu0 0
        %863 = vmatprep.subr.bf16.mxu0 0
        %864 = vmatpush1.bf16.xpose.msra.mxu0 0
        %865 = vmatprep.subr.bf16.mxu0 0
        %866 = vmatpush1.bf16.xpose.msra.mxu0 0
        %867 = vmatprep.subr.bf16.mxu0 0
        %868 = vmatpush1.bf16.xpose.msra.mxu0 0
        %869 = vmatprep.subr.bf16.mxu0 0
        %870 = vmatpush1.bf16.xpose.msra.mxu0 0
        %871 = vmatprep.subr.bf16.mxu0 0
        %872 = vmatpush1.bf16.xpose.msra.mxu0 0
        %873 = vmatprep.subr.bf16.mxu0 0
        %874 = vmatpush1.bf16.xpose.msra.mxu0 0
        %875 = vmatprep.mubr.bf16.mxu0 0
        %876 = vmatmul.mubr.bf16.gmra.mrb[0].mxu0 %v838
        %v877 = vpop.f32.mrb[0].mxu0
        %v878 = vadd.f32 %v716, %v877
        %v879 = vpop.f32.mrb[0].mxu0
        %v880 = vpop.f32.mrb[0].mxu0
        %v881 = vpop.f32.mrb[0].mxu0
        %882 = vdwg.mxu0
        %v883 = vsel %vm766, %v878, -inf
        %884 = vmax.xlane.f32.xlu0 %v883
        %v885 = vpop.xlane.xlu0 %884
        %v886 = vsub.f32 %v878, %v885
        %v887 = vmul.f32 %v886, 1.442695
        %v888 = vpow.pop %v887
        %v889 = vsel %vm766, %v888, 0.0
        %890 = vadd.xlane.f32.xlu0 %v889
        %v891 = vpop.xlane.xlu0 %890
        %v892 = vrcp.pop %v891
        %v893 = vmul.f32 %v888, %v892
        %v894 = vpack.c.bf16 %v893, %v893
        %895 = vrot.lane.b32.xlu0 %v718, 80
        %v896 = vpop.permute.xlu0 %895
        %v898 = vsel %vm782, %v894, 0
        %v901 = vsel %vm786, %v896, 0
        %903 = vmatprep.subr.bf16.mxu0 0
        %904 = vmatpush1.bf16.msra.mxu0 %v901
        %905 = vmatprep.subr.bf16.mxu0 0
        %906 = vmatpush1.bf16.msra.mxu0 0
        %907 = vmatprep.subr.bf16.mxu0 0
        %908 = vmatpush1.bf16.msra.mxu0 0
        %909 = vmatprep.subr.bf16.mxu0 0
        %910 = vmatpush1.bf16.msra.mxu0 0
        %911 = vmatprep.subr.bf16.mxu0 0
        %912 = vmatpush1.bf16.msra.mxu0 0
        %913 = vmatprep.subr.bf16.mxu0 0
        %914 = vmatpush1.bf16.msra.mxu0 0
        %915 = vmatprep.subr.bf16.mxu0 0
        %916 = vmatpush1.bf16.msra.mxu0 0
        %917 = vmatprep.subr.bf16.mxu0 0
        %918 = vmatpush1.bf16.msra.mxu0 0
        %919 = vmatprep.subr.bf16.mxu0 0
        %920 = vmatpush1.bf16.msra.mxu0 0
        %921 = vmatprep.subr.bf16.mxu0 0
        %922 = vmatpush1.bf16.msra.mxu0 0
        %923 = vmatprep.subr.bf16.mxu0 0
        %924 = vmatpush1.bf16.msra.mxu0 0
        %925 = vmatprep.subr.bf16.mxu0 0
        %926 = vmatpush1.bf16.msra.mxu0 0
        %927 = vmatprep.subr.bf16.mxu0 0
        %928 = vmatpush1.bf16.msra.mxu0 0
        %929 = vmatprep.subr.bf16.mxu0 0
        %930 = vmatpush1.bf16.msra.mxu0 0
        %931 = vmatprep.subr.bf16.mxu0 0
        %932 = vmatpush1.bf16.msra.mxu0 0
        %933 = vmatprep.subr.bf16.mxu0 0
        %934 = vmatpush1.bf16.msra.mxu0 0
        %935 = vmatprep.mubr.bf16.mxu0 0
        %936 = vmatmul.mubr.bf16.gmra.mrb[0].mxu0 %v898
        %v937 = vpop.f32.mrb[0].mxu0
        %v938 = vadd.f32 0.0, %v937
        %v939 = vpop.f32.mrb[0].mxu0
        %v940 = vpop.f32.mrb[0].mxu0
        %v941 = vpop.f32.mrb[0].mxu0
        %942 = vdwg.mxu0
        %944 = vrot.lane.b32.xlu0 %v938, 16
        %v945 = vpop.permute.xlu0 %944
        %vm947 = vcmask 254080
        %948 = vst.msk [vmem:[#allocation2] sm:$0x1] %vm947, %v945
        %v949 = vld [vmem:[#allocation2] sm:$0x1]
        %v950 = vld [vmem:[%s6] sm:$0xff]
        %v951 = vld [vmem:[%s6 + $0x8] sm:$0xff]
        %v952 = vld [vmem:[%s6 + $0x10] sm:$0xff]
        %v953 = vld [vmem:[%s6 + $0x18] sm:$0xff]
        %v954 = vpack.c.bf16 %v949, %v949
        %v955 = vpack.c.bf16 %v951, %v950
        %v956 = vpack.c.bf16 %v953, %v952
        %v957 = vld [vmem:[%s7] sm:$0x1]
        %v959 = vsel %vm622, %v954, 0
        %961 = vmatprep.subr.bf16.mxu0 0
        %962 = vmatpush1.bf16.msra.mxu0 %v955
        %963 = vmatprep.subr.bf16.mxu0 0
        %964 = vmatpush1.bf16.msra.mxu0 %v956
        %965 = vmatprep.subr.bf16.mxu0 0
        %966 = vmatpush1.bf16.msra.mxu0 0
        %967 = vmatprep.subr.bf16.mxu0 0
        %968 = vmatpush1.bf16.msra.mxu0 0
        %969 = vmatprep.subr.bf16.mxu0 0
        %970 = vmatpush1.bf16.msra.mxu0 0
        %971 = vmatprep.subr.bf16.mxu0 0
        %972 = vmatpush1.bf16.msra.mxu0 0
        %973 = vmatprep.subr.bf16.mxu0 0
        %974 = vmatpush1.bf16.msra.mxu0 0
        %975 = vmatprep.subr.bf16.mxu0 0
        %976 = vmatpush1.bf16.msra.mxu0 0
        %977 = vmatprep.subr.bf16.mxu0 0
        %978 = vmatpush1.bf16.msra.mxu0 0
        %979 = vmatprep.subr.bf16.mxu0 0
        %980 = vmatpush1.bf16.msra.mxu0 0
        %981 = vmatprep.subr.bf16.mxu0 0
        %982 = vmatpush1.bf16.msra.mxu0 0
        %983 = vmatprep.subr.bf16.mxu0 0
        %984 = vmatpush1.bf16.msra.mxu0 0
        %985 = vmatprep.subr.bf16.mxu0 0
        %986 = vmatpush1.bf16.msra.mxu0 0
        %987 = vmatprep.subr.bf16.mxu0 0
        %988 = vmatpush1.bf16.msra.mxu0 0
        %989 = vmatprep.subr.bf16.mxu0 0
        %990 = vmatpush1.bf16.msra.mxu0 0
        %991 = vmatprep.subr.bf16.mxu0 0
        %992 = vmatpush1.bf16.msra.mxu0 0
        %993 = vmatprep.mubr.bf16.mxu0 0
        %994 = vmatmul.mubr.bf16.gmra.mrb[0].mxu0 %v959
        %v995 = vpop.f32.mrb[0].mxu0
        %v996 = vadd.f32 %v957, %v995
        %v997 = vpop.f32.mrb[0].mxu0
        %v998 = vpop.f32.mrb[0].mxu0
        %v999 = vpop.f32.mrb[0].mxu0
        %1000 = vdwg.mxu0
        %v1001 = vadd.f32 %v607, %v996
        %v1002 = vld [vmem:[%s8] sm:$0x1]
        %v1003 = vld [vmem:[%s8 + $0x1] sm:$0x1]
        %vm1004 = vcmask 253952
        %v1005 = vsel %vm1004, %v1001, 0.0
        %1006 = vadd.xlane.f32.xlu0 %v1005
        %v1007 = vpop.xlane.xlu0 %1006
        %v1008 = vrcp.pop 32.0
        %v1009 = vmul.f32 %v1007, %v1008
        %v1010 = vsub.f32 %v1001, %v1009
        %v1011 = vmul.f32 %v1010, %v1010
        %v1012 = vsel %vm1004, %v1011, 0.0
        %1013 = vadd.xlane.f32.xlu0 %v1012
        %v1014 = vpop.xlane.xlu0 %1013
        %v1015 = vmul.f32 %v1014, %v1008
        %v1016 = vadd.f32 %v1015, 1e-05
        %v1017 = vrsqrt.pop %v1016
        %v1018 = vmul.f32 %v1010, %v1017
        %v1019 = vmul.f32 %v1018, %v1002
        %v1020 = vadd.f32 %v1019, %v1003
        %v1021 = vld [vmem:[%s9] sm:$0xff]
        %v1022 = vld [vmem:[%s9 + $0x8] sm:$0xff]
        %v1023 = vld [vmem:[%s9 + $0x10] sm:$0xff]
        %v1024 = vld [vmem:[%s9 + $0x18] sm:$0xff]
        %v1025 = vpack.c.bf16 %v1020, %v1020
        %v1026 = vpack.c.bf16 %v1022, %v1021
        %v1027 = vpack.c.bf16 %v1024, %v1023
        %v1028 = vld [vmem:[%s10] sm:$0x1]
        %v1030 = vsel %vm622, %v1025, 0
        %1032 = vmatprep.subr.bf16.mxu0 0
        %1033 = vmatpush1.bf16.msra.mxu0 %v1026
        %1034 = vmatprep.subr.bf16.mxu0 0
        %1035 = vmatpush1.bf16.msra.mxu0 %v1027
        %1036 = vmatprep.subr.bf16.mxu0 0
        %1037 = vmatpush1.bf16.msra.mxu0 0
        %1038 = vmatprep.subr.bf16.mxu0 0
        %1039 = vmatpush1.bf16.msra.mxu0 0
        %1040 = vmatprep.subr.bf16.mxu0 0
        %1041 = vmatpush1.bf16.msra.mxu0 0
        %1042 = vmatprep.subr.bf16.mxu0 0
        %1043 = vmatpush1.bf16.msra.mxu0 0
        %1044 = vmatprep.subr.bf16.mxu0 0
        %1045 = vmatpush1.bf16.msra.mxu0 0
        %1046 = vmatprep.subr.bf16.mxu0 0
        %1047 = vmatpush1.bf16.msra.mxu0 0
        %1048 = vmatprep.subr.bf16.mxu0 0
        %1049 = vmatpush1.bf16.msra.mxu0 0
        %1050 = vmatprep.subr.bf16.mxu0 0
        %1051 = vmatpush1.bf16.msra.mxu0 0
        %1052 = vmatprep.subr.bf16.mxu0 0
        %1053 = vmatpush1.bf16.msra.mxu0 0
        %1054 = vmatprep.subr.bf16.mxu0 0
        %1055 = vmatpush1.bf16.msra.mxu0 0
        %1056 = vmatprep.subr.bf16.mxu0 0
        %1057 = vmatpush1.bf16.msra.mxu0 0
        %1058 = vmatprep.subr.bf16.mxu0 0
        %1059 = vmatpush1.bf16.msra.mxu0 0
        %1060 = vmatprep.subr.bf16.mxu0 0
        %1061 = vmatpush1.bf16.msra.mxu0 0
        %1062 = vmatprep.subr.bf16.mxu0 0
        %1063 = vmatpush1.bf16.msra.mxu0 0
        %1064 = vmatprep.mubr.bf16.mxu0 0
        %1065 = vmatmul.mubr.bf16.gmra.mrb[0].mxu0 %v1030
        %v1066 = vpop.f32.mrb[0].mxu0
        %v1067 = vadd.f32 %v1028, %v1066
        %v1068 = vpop.f32.mrb[0].mxu0
        %v1069 = vpop.f32.mrb[0].mxu0
        %v1070 = vpop.f32.mrb[0].mxu0
        %1071 = vdwg.mxu0
        %v1072 = vmul.f32 %v1067, %v1067
        %v1073 = vmul.f32 %v1067, %v1072
        %v1074 = vmul.f32 %v1073, 0.044715
        %v1075 = vadd.f32 %v1067, %v1074
        %v1076 = vmul.f32 %v1075, 0.7978846
        %v1077 = vtanh.pop %v1076
        %v1078 = vadd.f32 %v1077, 1.0
        %v1079 = vmul.f32 %v1078, 0.5
        %v1080 = vmul.f32 %v1067, %v1079
        %v1081 = vld [vmem:[%s11] sm:$0xff]
        %v1082 = vld [vmem:[%s11 + $0x8] sm:$0xff]
        %v1083 = vld [vmem:[%s11 + $0x10] sm:$0xff]
        %v1084 = vld [vmem:[%s11 + $0x18] sm:$0xff]
        %v1085 = vld [vmem:[%s11 + $0x20] sm:$0xff]
        %v1086 = vld [vmem:[%s11 + $0x28] sm:$0xff]
        %v1087 = vld [vmem:[%s11 + $0x30] sm:$0xff]
        %v1088 = vld [vmem:[%s11 + $0x38] sm:$0xff]
        %v1089 = vpack.c.bf16 %v1080, %v1080
        %v1090 = vpack.c.bf16 %v1082, %v1081
        %v1091 = vpack.c.bf16 %v1084, %v1083
        %v1092 = vpack.c.bf16 %v1086, %v1085
        %v1093 = vpack.c.bf16 %v1088, %v1087
        %v1094 = vld [vmem:[%s12] sm:$0x1]
        %vm1095 = vcmask 523264
        %v1097 = vsel %vm1095, %v1089, 0
        %1099 = vmatprep.subr.bf16.mxu0 0
        %1100 = vmatpush1.bf16.msra.mxu0 %v1090
        %1101 = vmatprep.subr.bf16.mxu0 0
        %1102 = vmatpush1.bf16.msra.mxu0 %v1091
        %1103 = vmatprep.subr.bf16.mxu0 0
        %1104 = vmatpush1.bf16.msra.mxu0 %v1092
        %1105 = vmatprep.subr.bf16.mxu0 0
        %1106 = vmatpush1.bf16.msra.mxu0 %v1093
        %1107 = vmatprep.subr.bf16.mxu0 0
        %1108 = vmatpush1.bf16.msra.mxu0 0
        %1109 = vmatprep.subr.bf16.mxu0 0
        %1110 = vmatpush1.bf16.msra.mxu0 0
        %1111 = vmatprep.subr.bf16.mxu0 0
        %1112 = vmatpush1.bf16.msra.mxu0 0
        %1113 = vmatprep.subr.bf16.mxu0 0
        %1114 = vmatpush1.bf16.msra.mxu0 0
        %1115 = vmatprep.subr.bf16.mxu0 0
        %1116 = vmatpush1.bf16.msra.mxu0 0
        %1117 = vmatprep.subr.bf16.mxu0 0
        %1118 = vmatpush1.bf16.msra.mxu0 0
        %1119 = vmatprep.subr.bf16.mxu0 0
        %1120 = vmatpush1.bf16.msra.mxu0 0
        %1121 = vmatprep.subr.bf16.mxu0 0
        %1122 = vmatpush1.bf16.msra.mxu0 0
        %1123 = vmatprep.subr.bf16.mxu0 0
        %1124 = vmatpush1.bf16.msra.mxu0 0
        %1125 = vmatprep.subr.bf16.mxu0 0
        %1126 = vmatpush1.bf16.msra.mxu0 0
        %1127 = vmatprep.subr.bf16.mxu0 0
        %1128 = vmatpush1.bf16.msra.mxu0 0
        %1129 = vmatprep.subr.bf16.mxu0 0
        %1130 = vmatpush1.bf16.msra.mxu0 0
        %1131 = vmatprep.mubr.bf16.mxu0 0
        %1132 = vmatmul.mubr.bf16.gmra.mrb[0].mxu0 %v1097
        %v1133 = vpop.f32.mrb[0].mxu0
        %v1134 = vadd.f32 %v1094, %v1133
        %v1135 = vpop.f32.mrb[0].mxu0
        %v1136 = vpop.f32.mrb[0].mxu0
        %v1137 = vpop.f32.mrb[0].mxu0
        %1138 = vdwg.mxu0
        %v1139 = vadd.f32 %v1020, %v1134
        %v1140 = vld [vmem:[%s13] sm:$0x1]
        %v1141 = vld [vmem:[%s13 + $0x1] sm:$0x1]
        %v1142 = vsel %vm1004, %v1139, 0.0
        %1143 = vadd.xlane.f32.xlu0 %v1142
        %v1144 = vpop.xlane.xlu0 %1143
        %v1145 = vmul.f32 %v1144, %v1008
        %v1146 = vsub.f32 %v1139, %v1145
        %v1147 = vmul.f32 %v1146, %v1146
        %v1148 = vsel %vm1004, %v1147, 0.0
        %1149 = vadd.xlane.f32.xlu0 %v1148
        %v1150 = vpop.xlane.xlu0 %1149
        %v1151 = vmul.f32 %v1150, %v1008
        %v1152 = vadd.f32 %v1151, 1e-05
        %v1153 = vrsqrt.pop %v1152
        %v1154 = vmul.f32 %v1146, %v1153
        %v1155 = vmul.f32 %v1154, %v1140
        %v1156 = vadd.f32 %v1155, %v1141
        %v1157 = vld [vmem:[%s14] sm:$0xff]
        %v1158 = vld [vmem:[%s14 + $0x8] sm:$0xff]
        %v1159 = vld [vmem:[%s14 + $0x10] sm:$0xff]
        %v1160 = vld [vmem:[%s14 + $0x18] sm:$0xff]
        %v1161 = vpack.c.bf16 %v1156, %v1156
        %v1162 = vpack.c.bf16 %v1158, %v1157
        %v1163 = vpack.c.bf16 %v1160, %v1159
        %v1164 = vld [vmem:[%s15] sm:$0x1]
        %v1166 = vsel %vm622, %v1161, 0
        %1168 = vmatprep.subr.bf16.mxu0 0
        %1169 = vmatpush1.bf16.msra.mxu0 %v1162
        %1170 = vmatprep.subr.bf16.mxu0 0
        %1171 = vmatpush1.bf16.msra.mxu0 %v1163
        %1172 = vmatprep.subr.bf16.mxu0 0
        %1173 = vmatpush1.bf16.msra.mxu0 0
        %1174 = vmatprep.subr.bf16.mxu0 0
        %1175 = vmatpush1.bf16.msra.mxu0 0
        %1176 = vmatprep.subr.bf16.mxu0 0
        %1177 = vmatpush1.bf16.msra.mxu0 0
        %1178 = vmatprep.subr.bf16.mxu0 0
        %1179 = vmatpush1.bf16.msra.mxu0 0
        %1180 = vmatprep.subr.bf16.mxu0 0
        %1181 = vmatpush1.bf16.msra.mxu0 0
        %1182 = vmatprep.subr.bf16.mxu0 0
        %1183 = vmatpush1.bf16.msra.mxu0 0
        %1184 = vmatprep.subr.bf16.mxu0 0
        %1185 = vmatpush1.bf16.msra.mxu0 0
        %1186 = vmatprep.subr.bf16.mxu0 0
        %1187 = vmatpush1.bf16.msra.mxu0 0
        %1188 = vmatprep.subr.bf16.mxu0 0
        %1189 = vmatpush1.bf16.msra.mxu0 0
        %1190 = vmatprep.subr.bf16.mxu0 0
        %1191 = vmatpush1.bf16.msra.mxu0 0
        %1192 = vmatprep.subr.bf16.mxu0 0
        %1193 = vmatpush1.bf16.msra.mxu0 0
        %1194 = vmatprep.subr.bf16.mxu0 0
        %1195 = vmatpush1.bf16.msra.mxu0 0
        %1196 = vmatprep.subr.bf16.mxu0 0
        %1197 = vmatpush1.bf16.msra.mxu0 0
        %1198 = vmatprep.subr.bf16.mxu0 0
        %1199 = vmatpush1.bf16.msra.mxu0 0
        %1200 = vmatprep.mubr.bf16.mxu0 0
        %1201 = vmatmul.mubr.bf16.gmra.mrb[0].mxu0 %v1166
        %v1202 = vpop.f32.mrb[0].mxu0
        %v1203 = vadd.f32 %v1164, %v1202
        %v1204 = vpop.f32.mrb[0].mxu0
        %v1205 = vpop.f32.mrb[0].mxu0
        %v1206 = vpop.f32.mrb[0].mxu0
        %1207 = vdwg.mxu0
        %v1208 = vmax.f32 %v1203, 0.0
        %vm1209 = vcmask 139392
        %v1210 = vsel %vm1209, %v1203, -inf
        %1211 = vmax.xlane.f32.xlu0 %v1210
        %v1212 = vpop.xlane.xlu0 %1211
        %v1213 = vsub.f32 %v1203, %v1212
        %v1214 = vmul.f32 %v1213, 1.442695
        %v1215 = vpow.pop %v1214
        %1217 = vrot.lane.b32.xlu0 %v1215, 112
        %v1218 = vpop.permute.xlu0 %1217
        %vm1220 = vcmask 8192
        %v1221 = vsel %vm1220, %v1218, 0.0
        %1222 = vadd.xlane.f32.xlu0 %v1221
        %v1223 = vpop.xlane.xlu0 %1222
        %v1224 = vrcp.pop %v1223
        %v1225 = vmul.f32 %v1215, %v1224
        %v1226 = vld [vmem:[%s16] sm:$0xff]
        %v1227 = vld [vmem:[%s16 + $0x8] sm:$0xff]
        %v1228 = vpack.c.bf16 %v1208, %v1208
        %v1229 = vpack.c.bf16 %v1227, %v1226
        %v1230 = vld [vmem:[#allocation3] sm:$0x1]
        %v1232 = vsel %vm719, %v1228, 0
        %1234 = vmatprep.subr.bf16.mxu0 0
        %1235 = vmatpush1.bf16.msra.mxu0 %v1229
        %1236 = vmatprep.subr.bf16.mxu0 0
        %1237 = vmatpush1.bf16.msra.mxu0 0
        %1238 = vmatprep.subr.bf16.mxu0 0
        %1239 = vmatpush1.bf16.msra.mxu0 0
        %1240 = vmatprep.subr.bf16.mxu0 0
        %1241 = vmatpush1.bf16.msra.mxu0 0
        %1242 = vmatprep.subr.bf16.mxu0 0
        %1243 = vmatpush1.bf16.msra.mxu0 0
        %1244 = vmatprep.subr.bf16.mxu0 0
        %1245 = vmatpush1.bf16.msra.mxu0 0
        %1246 = vmatprep.subr.bf16.mxu0 0
        %1247 = vmatpush1.bf16.msra.mxu0 0
        %1248 = vmatprep.subr.bf16.mxu0 0
        %1249 = vmatpush1.bf16.msra.mxu0 0
        %1250 = vmatprep.subr.bf16.mxu0 0
        %1251 = vmatpush1.bf16.msra.mxu0 0
        %1252 = vmatprep.subr.bf16.mxu0 0
        %1253 = vmatpush1.bf16.msra.mxu0 0
        %1254 = vmatprep.subr.bf16.mxu0 0
        %1255 = vmatpush1.bf16.msra.mxu0 0
        %1256 = vmatprep.subr.bf16.mxu0 0
        %1257 = vmatpush1.bf16.msra.mxu0 0
        %1258 = vmatprep.subr.bf16.mxu0 0
        %1259 = vmatpush1.bf16.msra.mxu0 0
        %1260 = vmatprep.subr.bf16.mxu0 0
        %1261 = vmatpush1.bf16.msra.mxu0 0
        %1262 = vmatprep.subr.bf16.mxu0 0
        %1263 = vmatpush1.bf16.msra.mxu0 0
        %1264 = vmatprep.subr.bf16.mxu0 0
        %1265 = vmatpush1.bf16.msra.mxu0 0
        %1266 = vmatprep.mubr.bf16.mxu0 0
        %1267 = vmatmul.mubr.bf16.gmra.mrb[0].mxu0 %v1232
        %v1268 = vpop.f32.mrb[0].mxu0
        %v1269 = vadd.f32 %v1230, %v1268
        %v1270 = vpop.f32.mrb[0].mxu0
        %v1271 = vpop.f32.mrb[0].mxu0
        %v1272 = vpop.f32.mrb[0].mxu0
        %1273 = vdwg.mxu0
        %1275 = vrot.lane.b32.xlu0 %v1225, 112
        %v1276 = vpop.permute.xlu0 %1275
        %1279 = vrot.lane.b32.xlu0 %v1269, 2
        %v1280 = vpop.permute.xlu0 %1279
        %vm1282 = vcmask 15360
        %v1283 = vsel %vm1282, %v1276, %v1280
        %vm1284 = vcmask 23552
        %v1285 = vsel %vm1284, %v1283, 0.0
        %1286 = vst [vmem:[%s602] sm:$0x1] %v1285
        %s1287 = sand.u32 %s433, 1
        %s1288 = scalar_lea.sflag [#allocation6], %s1287
        %s1289 = sand.u32 %s433, 1
        %s1290 = scalar_lea.vmem [#allocation7], %s1289
        // Predicated region
        $region97: #{tpu_custom_call.1} parent=91 // pred_check
          %p1291 = pneg %p443
        $region98: #{tpu_custom_call.1} parent=91 // pred_check_branch
          %1293 = sbr.rel (%p1291) target = $region100
        $region99: #{tpu_custom_call.1} parent=91 // pred_region
          %s1295 = ssub.s32 16, 16
          %1296 = vsyncadd %s1288, %s1295
          %s1297 = smul.addr %s37, 16
          %s1298 = scalar_lea.hbm %s18, %s1297
          %s1300 = sshll.u32 %s1290, 4
          %s1301 = int_to_ptr.vmem [resolvable:$true] %s1300
          %1303 = dma.vmem_to_hbm [thread:$0]  %s1301, 16, %s1298, %s1288
        $region100: #{tpu_custom_call.1} parent=91 // pred_fallthru
          _
      $region92: #{tpu_custom_call.1} parent=5 // pred_fallthru
        _
      %p1304 = scmp.le.s32.totalorder 2, %s32
      // Predicated region
      $region101: #{tpu_custom_call.1} parent=5 // pred_check
        %p1305 = pneg %p1304
      $region102: #{tpu_custom_call.1} parent=5 // pred_check_branch
        %1307 = sbr.rel (%p1305) target = $region104
      $region103: #{tpu_custom_call.1} parent=5 // pred_region
        %s1308 = ssub.s32 %s32, 2
        // Predicated region
        $region105: #{tpu_custom_call.1} parent=103 // pred_check
          %p1309 = pneg %p449
        $region106: #{tpu_custom_call.1} parent=103 // pred_check_branch
          %1311 = sbr.rel (%p1309) target = $region108
        $region107: #{tpu_custom_call.1} parent=103 // pred_region
          %s1312 = sand.u32 %s434, 1
          %s1313 = scalar_lea.sflag [#allocation6], %s1312
          %s1314 = sand.u32 %s434, 1
          %s1315 = scalar_lea.vmem [#allocation7], %s1314
          %1316 = dma.done %s1313, 16
        $region108: #{tpu_custom_call.1} parent=103 // pred_fallthru
          _
      $region104: #{tpu_custom_call.1} parent=5 // pred_fallthru
        _
    $region6: #{tpu_custom_call.1} parent=1 // loop_footer
      %s36 = sadd.s32 1, %s32
    $region7: #{tpu_custom_call.1} parent=1 // loop_footer_branch
      %31 = sbr.rel target = $region3
    $region8: #{tpu_custom_call.1} parent=1 // loop_exit
      _
    %1317 = vsyncpa [#allocation5], 1
    %s1318 = scalar_lea.sflag [#allocation5], 1
    %1319 = vsyncpa %s1318, 1
    %1320 = vsyncpa [#allocation6], 1
    %s1321 = scalar_lea.sflag [#allocation6], 1
    %1322 = vsyncpa %s1321, 1

</llo_original>
